<compile_context>
chip_gen: v7x
topology: tpu7x:2x2x1
jax: 0.10.0
libtpu: 0.0.40
codegen_flags: <defaults>
</compile_context>

<pallas_src>
from functools import partial

import numpy as np
import jax
import jax.numpy as jnp
from jax.experimental import pallas as pl
from jax.experimental.pallas import tpu as pltpu


# ----------------------------------------------------------------------------
# Fused ConvGRU cell kernel (one batch chunk per grid step)
# ----------------------------------------------------------------------------
def _convgru_kernel(x_ref, h_ref, mask_ref, wx_ref, wzh_ref, woh_ref,
                    bz_ref, bo_ref, o_ref, xp_ref, hp_ref,
                    *, W, Cxp, Ch, K, L):
    P = K // 2

    x = x_ref[0]            # (Cxp, L) f32, channel-padded on host
    h = h_ref[0]            # (Ch,  L) f32

    def fill_patches(a, patch_ref, C):
        """Write the K*K shifted/masked taps of `a` into a bf16 patch scratch.

        A spatial shift by (dh, dw) on the flattened lane axis is a lane roll
        by dh*W + dw; positions that would have read SAME zero padding (image
        borders and image-to-image wrap when batch is lane-folded) are zeroed
        by the per-tap border mask.  Each tap is cast to bf16 immediately and
        stored at a sublane-tile-aligned offset (C is a multiple of 16).
        """
        for kh in range(K):
            for kw in range(K):
                t = kh * K + kw
                dh, dw = kh - P, kw - P
                if dh == 0 and dw == 0:
                    s = a                                        # centre tap
                else:
                    d = dh * W + dw
                    s = pltpu.roll(a, shift=(-d) % L, axis=1)    # XLU rotate
                    s = s * mask_ref[pl.ds(t, 1), :]             # (1, L) f32 mask
                patch_ref[pl.ds(t * C, C), :] = s.astype(jnp.bfloat16)

    fill_patches(x, xp_ref, Cxp)                                 # (K*K*Cxp, L) bf16
    fill_patches(h, hp_ref, Ch)                                  # (K*K*Ch,  L) bf16

    # Single MXU matmul for ALL x-side terms (update, reset, candidate).
    gx = jnp.dot(wx_ref[...], xp_ref[...],
                 preferred_element_type=jnp.float32)             # (3*Ch, L) f32

    # update & reset gates: one h-side matmul + one contiguous sigmoid pass.
    zr = jax.nn.sigmoid(
        gx[:2 * Ch]
        + jnp.dot(wzh_ref[...], hp_ref[...], preferred_element_type=jnp.float32)
        + bz_ref[...])
    update = zr[:Ch]                                             # sublane-aligned splits
    reset = zr[Ch:]

    # candidate ("out gate") conv uses cat([x, h * reset]); reuse hp scratch.
    fill_patches(h * reset, hp_ref, Ch)
    cand = jnp.tanh(
        gx[2 * Ch:]
        + jnp.dot(woh_ref[...], hp_ref[...], preferred_element_type=jnp.float32)
        + bo_ref[...])

    new_h = h * (1.0 - update) + cand * update                   # all f32
    o_ref[0] = new_h.astype(o_ref.dtype)                         # lane-dense store


# ----------------------------------------------------------------------------
# One-time host-side packing helpers (hoisted out of the per-timestep call)
# ----------------------------------------------------------------------------
def _pack_x_weight(w_x, Cxp):
    """(Cout, Cx, K, K) -> (Cout, K*K*Cxp) tap-major bf16, input channels padded."""
    Cout, Cx, K, _ = w_x.shape
    w_p = jnp.pad(w_x, ((0, 0), (0, Cxp - Cx), (0, 0), (0, 0)))
    return jnp.transpose(w_p, (0, 2, 3, 1)).reshape(Cout, K * K * Cxp).astype(jnp.bfloat16)


def _pack_h_weight(w_h):
    """(Cout, Ch, K, K) -> (Cout, K*K*Ch) tap-major bf16."""
    Cout, Ch, K, _ = w_h.shape
    return jnp.transpose(w_h, (0, 2, 3, 1)).reshape(Cout, K * K * Ch).astype(jnp.bfloat16)


def _border_masks(H, W, K, reps):
    """(K*K, reps*H*W) f32: 1 where a (dh, dw)-shifted read stays inside its image."""
    P = K // 2
    hh = np.arange(H).reshape(H, 1)
    ww = np.arange(W).reshape(1, W)
    rows = []
    for kh in range(K):
        for kw in range(K):
            dh, dw = kh - P, kw - P
            m = ((hh + dh >= 0) & (hh + dh < H) &
                 (ww + dw >= 0) & (ww + dw < W))
            rows.append(np.tile(m.reshape(1, H * W), (1, reps)))
    return jnp.asarray(np.concatenate(rows, axis=0), dtype=jnp.float32)


def _grid_steps(batch):
    """Dual-TensorCore chips (v7x) keep >=2 parallel grid steps so both cores
    get work; single-TC chips (v5e/v6e) fold the whole batch into lanes."""
    try:
        kind = jax.devices()[0].device_kind.lower()
    except Exception:
        kind = ""
    if "v7" in kind and batch >= 2 and batch % 2 == 0:
        return 2
    return 1


# ----------------------------------------------------------------------------
# Factory: pack weights/masks once, return a jitted ConvGRU.forward
# ----------------------------------------------------------------------------
def make_convgru(params, *, batch, height, width):
    Ch, Cin, K, _ = params["w_update"].shape
    Cx = Cin - Ch
    HW = height * width
    # Pad x channels to a multiple of 16 so bf16 patch-scratch stores stay
    # aligned to the packed (16, 128) sublane tile.
    Cxp = ((Cx + 15) // 16) * 16

    bsteps = _grid_steps(batch)
    bfold = batch // bsteps            # images folded into the lane axis
    L = bfold * HW                     # lane width per grid step

    # --- one-time weight / bias / mask packing (eager, device-resident) -----
    wx = jnp.concatenate([
        _pack_x_weight(params["w_update"][:, :Cx], Cxp),
        _pack_x_weight(params["w_reset"][:, :Cx], Cxp),
        _pack_x_weight(params["w_out"][:, :Cx], Cxp)], axis=0)      # (3Ch, K*K*Cxp)
    wzh = jnp.concatenate([
        _pack_h_weight(params["w_update"][:, Cx:]),
        _pack_h_weight(params["w_reset"][:, Cx:])], axis=0)         # (2Ch, K*K*Ch)
    woh = _pack_h_weight(params["w_out"][:, Cx:])                   # (Ch,  K*K*Ch)
    b_zr = jnp.concatenate([params["b_update"], params["b_reset"]]
                           ).reshape(2 * Ch, 1).astype(jnp.float32)
    b_o = params["b_out"].reshape(Ch, 1).astype(jnp.float32)
    masks = _border_masks(height, width, K, bfold)                  # (K*K, L) f32

    kernel = partial(_convgru_kernel, W=width, Cxp=Cxp, Ch=Ch, K=K, L=L)

    # TODO(synk): for much larger H*W the whole-chunk-per-block strategy must
    #             become an HW-tiled grid with a (K-1) halo and an explicit
    #             vmem_limit_bytes sized for v7x's 64 MiB VMEM.
    conv_call = pl.pallas_call(
        kernel,
        out_shape=jax.ShapeDtypeStruct((bsteps, Ch, L), jnp.float32),
        grid_spec=pltpu.PrefetchScalarGridSpec(
            num_scalar_prefetch=0,
            grid=(bsteps,),
            in_specs=[
                pl.BlockSpec((1, Cxp, L), lambda n: (n, 0, 0)),          # x (padded)
                pl.BlockSpec((1, Ch, L), lambda n: (n, 0, 0)),           # prev h
                pl.BlockSpec((K * K, L), lambda n: (0, 0)),              # halo masks
                pl.BlockSpec((3 * Ch, K * K * Cxp), lambda n: (0, 0)),   # stacked x weights
                pl.BlockSpec((2 * Ch, K * K * Ch), lambda n: (0, 0)),    # update/reset h weights
                pl.BlockSpec((Ch, K * K * Ch), lambda n: (0, 0)),        # out-gate h weights
                pl.BlockSpec((2 * Ch, 1), lambda n: (0, 0)),             # b_zr
                pl.BlockSpec((Ch, 1), lambda n: (0, 0)),                 # b_out
            ],
            out_specs=pl.BlockSpec((1, Ch, L), lambda n: (n, 0, 0)),
            scratch_shapes=[
                pltpu.VMEM((K * K * Cxp, L), jnp.bfloat16),              # x patches
                pltpu.VMEM((K * K * Ch, L), jnp.bfloat16),               # h / h*reset patches
            ],
        ),
        compiler_params=pltpu.CompilerParams(
            dimension_semantics=("parallel",)),
    )

    @jax.jit
    def _step(x_nchw, h_nchw, masks, wx, wzh, woh, b_zr, b_o):
        x = x_nchw.astype(jnp.float32)
        h = h_nchw.astype(jnp.float32)
        x = jnp.pad(x, ((0, 0), (0, Cxp - Cx), (0, 0), (0, 0)))   # host channel pad
        # Fold bfold images into the lane axis per grid step.
        xf = (x.reshape(bsteps, bfold, Cxp, HW)
               .transpose(0, 2, 1, 3).reshape(bsteps, Cxp, L))
        hf = (h.reshape(bsteps, bfold, Ch, HW)
               .transpose(0, 2, 1, 3).reshape(bsteps, Ch, L))
        out = conv_call(xf, hf, masks, wx, wzh, woh, b_zr, b_o)
        return (out.reshape(bsteps, Ch, bfold, HW)
                   .transpose(0, 2, 1, 3).reshape(batch, Ch, height, width))

    def forward(x_nchw, prev_state=None):
        if prev_state is None:
            prev_state = jnp.zeros((batch, Ch, height, width), jnp.float32)
        return _step(x_nchw, prev_state, masks, wx, wzh, woh, b_zr, b_o)

    return forward


# ----------------------------------------------------------------------------
# Pure-JAX reference (lax.conv, NCHW).  Conv operands cast to bf16 with f32
# accumulation to match the kernel's MXU precision; all other math f32.
# ----------------------------------------------------------------------------
def _reference(x, prev_state, params):
    N, Cx, H, W = x.shape
    Ch = params["w_update"].shape[0]
    if prev_state is None:
        prev_state = jnp.zeros((N, Ch, H, W), jnp.float32)
    x = x.astype(jnp.float32)
    prev_state = prev_state.astype(jnp.float32)

    def conv(inp, w, b):
        out = jax.lax.conv_general_dilated(
            inp.astype(jnp.bfloat16), w.astype(jnp.bfloat16),
            window_strides=(1, 1), padding="SAME",
            dimension_numbers=("NCHW", "OIHW", "NCHW"),
            preferred_element_type=jnp.float32)
        return out + b.reshape(1, -1, 1, 1)

    stacked = jnp.concatenate([x, prev_state], axis=1)
    update = jax.nn.sigmoid(conv(stacked, params["w_update"], params["b_update"]))
    reset = jax.nn.sigmoid(conv(stacked, params["w_reset"], params["b_reset"]))
    cand = jnp.tanh(conv(jnp.concatenate([x, prev_state * reset], axis=1),
                         params["w_out"], params["b_out"]))
    return prev_state * (1.0 - update) + cand * update


if __name__ == "__main__":
    # ConvGRU(input_size=4, hidden_size=32, kernel_size=3), 16x16 images, batch 2.
    N, Cx, H, W = 2, 4, 16, 16
    Ch, K = 32, 3

    key = jax.random.PRNGKey(0)
    kx1, kx2, ku, kr, ko, kb = jax.random.split(key, 6)
    x1 = jax.random.normal(kx1, (N, Cx, H, W), jnp.float32)
    x2 = jax.random.normal(kx2, (N, Cx, H, W), jnp.float32)

    Cin = Cx + Ch
    params = dict(
        # Module uses orthogonal weight init and zero biases; deterministic
        # synthetic values keep identical shapes and exercise the bias path.
        w_update=0.1 * jax.random.normal(ku, (Ch, Cin, K, K), jnp.float32),
        w_reset=0.1 * jax.random.normal(kr, (Ch, Cin, K, K), jnp.float32),
        w_out=0.1 * jax.random.normal(ko, (Ch, Cin, K, K), jnp.float32),
        b_update=jnp.zeros((Ch,), jnp.float32),
        b_reset=jnp.zeros((Ch,), jnp.float32),
        b_out=0.05 * jax.random.normal(kb, (Ch,), jnp.float32),
    )

    # Pack weights/masks once; reuse the same forward for every timestep.
    convgru = make_convgru(params, batch=N, height=H, width=W)

    # Step 1: prev_state=None (zeros).  Step 2: nonzero recurrent state, which
    # exercises the h-dependent conv terms and the reset/update blend.
    h1 = convgru(x1, None)
    h2 = convgru(x2, h1)
    jax.block_until_ready((h1, h2))

    r1 = _reference(x1, None, params)
    r2 = _reference(x2, r1, params)

    assert h1.shape == (N, Ch, H, W) and h2.shape == (N, Ch, H, W)
    assert jnp.allclose(h1, r1, atol=5e-3, rtol=5e-3), \
        f"step1 max abs err {float(jnp.max(jnp.abs(h1 - r1)))}"
    assert jnp.allclose(h2, r2, atol=5e-3, rtol=5e-3), \
        f"step2 max abs err {float(jnp.max(jnp.abs(h2 - r2)))}"

    print("KERNEL_OK")
</pallas_src>

<mosaic_0001>
module attributes {stable_mosaic.version = 11 : i64} {
  func.func @_convgru_kernel(%arg0: i32, %arg1: memref<1x16x512xf32, #tpu.memory_space<vmem>>, %arg2: memref<1x32x512xf32, #tpu.memory_space<vmem>>, %arg3: memref<9x512xf32, #tpu.memory_space<vmem>>, %arg4: memref<96x144xbf16, #tpu.memory_space<vmem>>, %arg5: memref<64x288xbf16, #tpu.memory_space<vmem>>, %arg6: memref<32x288xbf16, #tpu.memory_space<vmem>>, %arg7: memref<64x1xf32, #tpu.memory_space<vmem>>, %arg8: memref<32x1xf32, #tpu.memory_space<vmem>>, %arg9: memref<1x32x512xf32, #tpu.memory_space<vmem>>, %arg10: memref<144x512xbf16, #tpu.memory_space<vmem>>, %arg11: memref<288x512xbf16, #tpu.memory_space<vmem>>) attributes {dimension_semantics = [#tpu.dimension_semantics<parallel>], iteration_bounds = array<i64: 1>, scalar_prefetch = 0 : i64, scratch_operands = 2 : i64, tpu.core_type = #tpu.core_type<tc>, window_params = [{transform_indices = @transform_0, window_bounds = array<i64: 1, 16, 512>}, {transform_indices = @transform_1, window_bounds = array<i64: 1, 32, 512>}, {pipeline_mode = #tpu.pipeline_mode<synchronous>, transform_indices = @transform_2, window_bounds = array<i64: 9, 512>}, {pipeline_mode = #tpu.pipeline_mode<synchronous>, transform_indices = @transform_3, window_bounds = array<i64: 96, 144>}, {pipeline_mode = #tpu.pipeline_mode<synchronous>, transform_indices = @transform_4, window_bounds = array<i64: 64, 288>}, {pipeline_mode = #tpu.pipeline_mode<synchronous>, transform_indices = @transform_5, window_bounds = array<i64: 32, 288>}, {pipeline_mode = #tpu.pipeline_mode<synchronous>, transform_indices = @transform_6, window_bounds = array<i64: 64, 1>}, {pipeline_mode = #tpu.pipeline_mode<synchronous>, transform_indices = @transform_7, window_bounds = array<i64: 32, 1>}, {transform_indices = @transform_8, window_bounds = array<i64: 1, 32, 512>}]} {
    %c0 = arith.constant 0 : index
    %c0_0 = arith.constant 0 : index
    %c0_1 = arith.constant 0 : index
    %0 = vector.load %arg1[%c0, %c0_0, %c0_1] : memref<1x16x512xf32, #tpu.memory_space<vmem>>, vector<1x16x512xf32>
    %1 = vector.shape_cast %0 : vector<1x16x512xf32> to vector<16x512xf32>
    %c0_2 = arith.constant 0 : index
    %c0_3 = arith.constant 0 : index
    %c0_4 = arith.constant 0 : index
    %2 = vector.load %arg2[%c0_2, %c0_3, %c0_4] : memref<1x32x512xf32, #tpu.memory_space<vmem>>, vector<1x32x512xf32>
    %3 = vector.shape_cast %2 : vector<1x32x512xf32> to vector<32x512xf32>
    %c17_i32 = arith.constant 17 : i32
    %4 = tpu.dynamic_rotate %1 by %c17_i32 dim 1 : vector<16x512xf32>, i32 -> vector<16x512xf32>
    %c0_5 = arith.constant 0 : index
    %c0_6 = arith.constant 0 : index
    %5 = vector.load %arg3[%c0_5, %c0_6] : memref<9x512xf32, #tpu.memory_space<vmem>>, vector<1x512xf32>
    %6 = vector.broadcast %5 : vector<1x512xf32> to vector<16x512xf32>
    %7 = arith.mulf %4, %6 : vector<16x512xf32>
    %8 = arith.truncf %7 : vector<16x512xf32> to vector<16x512xbf16>
    %c0_7 = arith.constant 0 : index
    %c0_8 = arith.constant 0 : index
    %9 = vector.load %arg10[%c0_7, %c0_8] : memref<144x512xbf16, #tpu.memory_space<vmem>>, vector<16x512xbf16>
    tpu.vector_store %arg10[%c0_7, %c0_8], %8 {strides = array<i32>} : memref<144x512xbf16, #tpu.memory_space<vmem>>, vector<16x512xbf16>,
    %c16_i32 = arith.constant 16 : i32
    %10 = tpu.dynamic_rotate %1 by %c16_i32 dim 1 : vector<16x512xf32>, i32 -> vector<16x512xf32>
    %c1 = arith.constant 1 : index
    %c0_9 = arith.constant 0 : index
    %11 = vector.load %arg3[%c1, %c0_9] : memref<9x512xf32, #tpu.memory_space<vmem>>, vector<1x512xf32>
    %12 = vector.broadcast %11 : vector<1x512xf32> to vector<16x512xf32>
    %13 = arith.mulf %10, %12 : vector<16x512xf32>
    %14 = arith.truncf %13 : vector<16x512xf32> to vector<16x512xbf16>
    %c16 = arith.constant 16 : index
    %c0_10 = arith.constant 0 : index
    %15 = vector.load %arg10[%c16, %c0_10] : memref<144x512xbf16, #tpu.memory_space<vmem>>, vector<16x512xbf16>
    tpu.vector_store %arg10[%c16, %c0_10], %14 {strides = array<i32>} : memref<144x512xbf16, #tpu.memory_space<vmem>>, vector<16x512xbf16>,
    %c15_i32 = arith.constant 15 : i32
    %16 = tpu.dynamic_rotate %1 by %c15_i32 dim 1 : vector<16x512xf32>, i32 -> vector<16x512xf32>
    %c2 = arith.constant 2 : index
    %c0_11 = arith.constant 0 : index
    %17 = vector.load %arg3[%c2, %c0_11] : memref<9x512xf32, #tpu.memory_space<vmem>>, vector<1x512xf32>
    %18 = vector.broadcast %17 : vector<1x512xf32> to vector<16x512xf32>
    %19 = arith.mulf %16, %18 : vector<16x512xf32>
    %20 = arith.truncf %19 : vector<16x512xf32> to vector<16x512xbf16>
    %c32 = arith.constant 32 : index
    %c0_12 = arith.constant 0 : index
    %21 = vector.load %arg10[%c32, %c0_12] : memref<144x512xbf16, #tpu.memory_space<vmem>>, vector<16x512xbf16>
    tpu.vector_store %arg10[%c32, %c0_12], %20 {strides = array<i32>} : memref<144x512xbf16, #tpu.memory_space<vmem>>, vector<16x512xbf16>,
    %c1_i32 = arith.constant 1 : i32
    %22 = tpu.dynamic_rotate %1 by %c1_i32 dim 1 : vector<16x512xf32>, i32 -> vector<16x512xf32>
    %c3 = arith.constant 3 : index
    %c0_13 = arith.constant 0 : index
    %23 = vector.load %arg3[%c3, %c0_13] : memref<9x512xf32, #tpu.memory_space<vmem>>, vector<1x512xf32>
    %24 = vector.broadcast %23 : vector<1x512xf32> to vector<16x512xf32>
    %25 = arith.mulf %22, %24 : vector<16x512xf32>
    %26 = arith.truncf %25 : vector<16x512xf32> to vector<16x512xbf16>
    %c48 = arith.constant 48 : index
    %c0_14 = arith.constant 0 : index
    %27 = vector.load %arg10[%c48, %c0_14] : memref<144x512xbf16, #tpu.memory_space<vmem>>, vector<16x512xbf16>
    tpu.vector_store %arg10[%c48, %c0_14], %26 {strides = array<i32>} : memref<144x512xbf16, #tpu.memory_space<vmem>>, vector<16x512xbf16>,
    %28 = arith.truncf %1 : vector<16x512xf32> to vector<16x512xbf16>
    %c64 = arith.constant 64 : index
    %c0_15 = arith.constant 0 : index
    %29 = vector.load %arg10[%c64, %c0_15] : memref<144x512xbf16, #tpu.memory_space<vmem>>, vector<16x512xbf16>
    tpu.vector_store %arg10[%c64, %c0_15], %28 {strides = array<i32>} : memref<144x512xbf16, #tpu.memory_space<vmem>>, vector<16x512xbf16>,
    %c511_i32 = arith.constant 511 : i32
    %30 = tpu.dynamic_rotate %1 by %c511_i32 dim 1 : vector<16x512xf32>, i32 -> vector<16x512xf32>
    %c5 = arith.constant 5 : index
    %c0_16 = arith.constant 0 : index
    %31 = vector.load %arg3[%c5, %c0_16] : memref<9x512xf32, #tpu.memory_space<vmem>>, vector<1x512xf32>
    %32 = vector.broadcast %31 : vector<1x512xf32> to vector<16x512xf32>
    %33 = arith.mulf %30, %32 : vector<16x512xf32>
    %34 = arith.truncf %33 : vector<16x512xf32> to vector<16x512xbf16>
    %c80 = arith.constant 80 : index
    %c0_17 = arith.constant 0 : index
    %35 = vector.load %arg10[%c80, %c0_17] : memref<144x512xbf16, #tpu.memory_space<vmem>>, vector<16x512xbf16>
    tpu.vector_store %arg10[%c80, %c0_17], %34 {strides = array<i32>} : memref<144x512xbf16, #tpu.memory_space<vmem>>, vector<16x512xbf16>,
    %c497_i32 = arith.constant 497 : i32
    %36 = tpu.dynamic_rotate %1 by %c497_i32 dim 1 : vector<16x512xf32>, i32 -> vector<16x512xf32>
    %c6 = arith.constant 6 : index
    %c0_18 = arith.constant 0 : index
    %37 = vector.load %arg3[%c6, %c0_18] : memref<9x512xf32, #tpu.memory_space<vmem>>, vector<1x512xf32>
    %38 = vector.broadcast %37 : vector<1x512xf32> to vector<16x512xf32>
    %39 = arith.mulf %36, %38 : vector<16x512xf32>
    %40 = arith.truncf %39 : vector<16x512xf32> to vector<16x512xbf16>
    %c96 = arith.constant 96 : index
    %c0_19 = arith.constant 0 : index
    %41 = vector.load %arg10[%c96, %c0_19] : memref<144x512xbf16, #tpu.memory_space<vmem>>, vector<16x512xbf16>
    tpu.vector_store %arg10[%c96, %c0_19], %40 {strides = array<i32>} : memref<144x512xbf16, #tpu.memory_space<vmem>>, vector<16x512xbf16>,
    %c496_i32 = arith.constant 496 : i32
    %42 = tpu.dynamic_rotate %1 by %c496_i32 dim 1 : vector<16x512xf32>, i32 -> vector<16x512xf32>
    %c7 = arith.constant 7 : index
    %c0_20 = arith.constant 0 : index
    %43 = vector.load %arg3[%c7, %c0_20] : memref<9x512xf32, #tpu.memory_space<vmem>>, vector<1x512xf32>
    %44 = vector.broadcast %43 : vector<1x512xf32> to vector<16x512xf32>
    %45 = arith.mulf %42, %44 : vector<16x512xf32>
    %46 = arith.truncf %45 : vector<16x512xf32> to vector<16x512xbf16>
    %c112 = arith.constant 112 : index
    %c0_21 = arith.constant 0 : index
    %47 = vector.load %arg10[%c112, %c0_21] : memref<144x512xbf16, #tpu.memory_space<vmem>>, vector<16x512xbf16>
    tpu.vector_store %arg10[%c112, %c0_21], %46 {strides = array<i32>} : memref<144x512xbf16, #tpu.memory_space<vmem>>, vector<16x512xbf16>,
    %c495_i32 = arith.constant 495 : i32
    %48 = tpu.dynamic_rotate %1 by %c495_i32 dim 1 : vector<16x512xf32>, i32 -> vector<16x512xf32>
    %c8 = arith.constant 8 : index
    %c0_22 = arith.constant 0 : index
    %49 = vector.load %arg3[%c8, %c0_22] : memref<9x512xf32, #tpu.memory_space<vmem>>, vector<1x512xf32>
    %50 = vector.broadcast %49 : vector<1x512xf32> to vector<16x512xf32>
    %51 = arith.mulf %48, %50 : vector<16x512xf32>
    %52 = arith.truncf %51 : vector<16x512xf32> to vector<16x512xbf16>
    %c128 = arith.constant 128 : index
    %c0_23 = arith.constant 0 : index
    %53 = vector.load %arg10[%c128, %c0_23] : memref<144x512xbf16, #tpu.memory_space<vmem>>, vector<16x512xbf16>
    tpu.vector_store %arg10[%c128, %c0_23], %52 {strides = array<i32>} : memref<144x512xbf16, #tpu.memory_space<vmem>>, vector<16x512xbf16>,
    %c17_i32_24 = arith.constant 17 : i32
    %54 = tpu.dynamic_rotate %3 by %c17_i32_24 dim 1 : vector<32x512xf32>, i32 -> vector<32x512xf32>
    %c0_25 = arith.constant 0 : index
    %c0_26 = arith.constant 0 : index
    %55 = vector.load %arg3[%c0_25, %c0_26] : memref<9x512xf32, #tpu.memory_space<vmem>>, vector<1x512xf32>
    %56 = vector.broadcast %55 : vector<1x512xf32> to vector<32x512xf32>
    %57 = arith.mulf %54, %56 : vector<32x512xf32>
    %58 = arith.truncf %57 : vector<32x512xf32> to vector<32x512xbf16>
    %c0_27 = arith.constant 0 : index
    %c0_28 = arith.constant 0 : index
    %59 = vector.load %arg11[%c0_27, %c0_28] : memref<288x512xbf16, #tpu.memory_space<vmem>>, vector<32x512xbf16>
    tpu.vector_store %arg11[%c0_27, %c0_28], %58 {strides = array<i32>} : memref<288x512xbf16, #tpu.memory_space<vmem>>, vector<32x512xbf16>,
    %c16_i32_29 = arith.constant 16 : i32
    %60 = tpu.dynamic_rotate %3 by %c16_i32_29 dim 1 : vector<32x512xf32>, i32 -> vector<32x512xf32>
    %c1_30 = arith.constant 1 : index
    %c0_31 = arith.constant 0 : index
    %61 = vector.load %arg3[%c1_30, %c0_31] : memref<9x512xf32, #tpu.memory_space<vmem>>, vector<1x512xf32>
    %62 = vector.broadcast %61 : vector<1x512xf32> to vector<32x512xf32>
    %63 = arith.mulf %60, %62 : vector<32x512xf32>
    %64 = arith.truncf %63 : vector<32x512xf32> to vector<32x512xbf16>
    %c32_32 = arith.constant 32 : index
    %c0_33 = arith.constant 0 : index
    %65 = vector.load %arg11[%c32_32, %c0_33] : memref<288x512xbf16, #tpu.memory_space<vmem>>, vector<32x512xbf16>
    tpu.vector_store %arg11[%c32_32, %c0_33], %64 {strides = array<i32>} : memref<288x512xbf16, #tpu.memory_space<vmem>>, vector<32x512xbf16>,
    %c15_i32_34 = arith.constant 15 : i32
    %66 = tpu.dynamic_rotate %3 by %c15_i32_34 dim 1 : vector<32x512xf32>, i32 -> vector<32x512xf32>
    %c2_35 = arith.constant 2 : index
    %c0_36 = arith.constant 0 : index
    %67 = vector.load %arg3[%c2_35, %c0_36] : memref<9x512xf32, #tpu.memory_space<vmem>>, vector<1x512xf32>
    %68 = vector.broadcast %67 : vector<1x512xf32> to vector<32x512xf32>
    %69 = arith.mulf %66, %68 : vector<32x512xf32>
    %70 = arith.truncf %69 : vector<32x512xf32> to vector<32x512xbf16>
    %c64_37 = arith.constant 64 : index
    %c0_38 = arith.constant 0 : index
    %71 = vector.load %arg11[%c64_37, %c0_38] : memref<288x512xbf16, #tpu.memory_space<vmem>>, vector<32x512xbf16>
    tpu.vector_store %arg11[%c64_37, %c0_38], %70 {strides = array<i32>} : memref<288x512xbf16, #tpu.memory_space<vmem>>, vector<32x512xbf16>,
    %c1_i32_39 = arith.constant 1 : i32
    %72 = tpu.dynamic_rotate %3 by %c1_i32_39 dim 1 : vector<32x512xf32>, i32 -> vector<32x512xf32>
    %c3_40 = arith.constant 3 : index
    %c0_41 = arith.constant 0 : index
    %73 = vector.load %arg3[%c3_40, %c0_41] : memref<9x512xf32, #tpu.memory_space<vmem>>, vector<1x512xf32>
    %74 = vector.broadcast %73 : vector<1x512xf32> to vector<32x512xf32>
    %75 = arith.mulf %72, %74 : vector<32x512xf32>
    %76 = arith.truncf %75 : vector<32x512xf32> to vector<32x512xbf16>
    %c96_42 = arith.constant 96 : index
    %c0_43 = arith.constant 0 : index
    %77 = vector.load %arg11[%c96_42, %c0_43] : memref<288x512xbf16, #tpu.memory_space<vmem>>, vector<32x512xbf16>
    tpu.vector_store %arg11[%c96_42, %c0_43], %76 {strides = array<i32>} : memref<288x512xbf16, #tpu.memory_space<vmem>>, vector<32x512xbf16>,
    %78 = arith.truncf %3 : vector<32x512xf32> to vector<32x512xbf16>
    %c128_44 = arith.constant 128 : index
    %c0_45 = arith.constant 0 : index
    %79 = vector.load %arg11[%c128_44, %c0_45] : memref<288x512xbf16, #tpu.memory_space<vmem>>, vector<32x512xbf16>
    tpu.vector_store %arg11[%c128_44, %c0_45], %78 {strides = array<i32>} : memref<288x512xbf16, #tpu.memory_space<vmem>>, vector<32x512xbf16>,
    %c511_i32_46 = arith.constant 511 : i32
    %80 = tpu.dynamic_rotate %3 by %c511_i32_46 dim 1 : vector<32x512xf32>, i32 -> vector<32x512xf32>
    %c5_47 = arith.constant 5 : index
    %c0_48 = arith.constant 0 : index
    %81 = vector.load %arg3[%c5_47, %c0_48] : memref<9x512xf32, #tpu.memory_space<vmem>>, vector<1x512xf32>
    %82 = vector.broadcast %81 : vector<1x512xf32> to vector<32x512xf32>
    %83 = arith.mulf %80, %82 : vector<32x512xf32>
    %84 = arith.truncf %83 : vector<32x512xf32> to vector<32x512xbf16>
    %c160 = arith.constant 160 : index
    %c0_49 = arith.constant 0 : index
    %85 = vector.load %arg11[%c160, %c0_49] : memref<288x512xbf16, #tpu.memory_space<vmem>>, vector<32x512xbf16>
    tpu.vector_store %arg11[%c160, %c0_49], %84 {strides = array<i32>} : memref<288x512xbf16, #tpu.memory_space<vmem>>, vector<32x512xbf16>,
    %c497_i32_50 = arith.constant 497 : i32
    %86 = tpu.dynamic_rotate %3 by %c497_i32_50 dim 1 : vector<32x512xf32>, i32 -> vector<32x512xf32>
    %c6_51 = arith.constant 6 : index
    %c0_52 = arith.constant 0 : index
    %87 = vector.load %arg3[%c6_51, %c0_52] : memref<9x512xf32, #tpu.memory_space<vmem>>, vector<1x512xf32>
    %88 = vector.broadcast %87 : vector<1x512xf32> to vector<32x512xf32>
    %89 = arith.mulf %86, %88 : vector<32x512xf32>
    %90 = arith.truncf %89 : vector<32x512xf32> to vector<32x512xbf16>
    %c192 = arith.constant 192 : index
    %c0_53 = arith.constant 0 : index
    %91 = vector.load %arg11[%c192, %c0_53] : memref<288x512xbf16, #tpu.memory_space<vmem>>, vector<32x512xbf16>
    tpu.vector_store %arg11[%c192, %c0_53], %90 {strides = array<i32>} : memref<288x512xbf16, #tpu.memory_space<vmem>>, vector<32x512xbf16>,
    %c496_i32_54 = arith.constant 496 : i32
    %92 = tpu.dynamic_rotate %3 by %c496_i32_54 dim 1 : vector<32x512xf32>, i32 -> vector<32x512xf32>
    %c7_55 = arith.constant 7 : index
    %c0_56 = arith.constant 0 : index
    %93 = vector.load %arg3[%c7_55, %c0_56] : memref<9x512xf32, #tpu.memory_space<vmem>>, vector<1x512xf32>
    %94 = vector.broadcast %93 : vector<1x512xf32> to vector<32x512xf32>
    %95 = arith.mulf %92, %94 : vector<32x512xf32>
    %96 = arith.truncf %95 : vector<32x512xf32> to vector<32x512xbf16>
    %c224 = arith.constant 224 : index
    %c0_57 = arith.constant 0 : index
    %97 = vector.load %arg11[%c224, %c0_57] : memref<288x512xbf16, #tpu.memory_space<vmem>>, vector<32x512xbf16>
    tpu.vector_store %arg11[%c224, %c0_57], %96 {strides = array<i32>} : memref<288x512xbf16, #tpu.memory_space<vmem>>, vector<32x512xbf16>,
    %c495_i32_58 = arith.constant 495 : i32
    %98 = tpu.dynamic_rotate %3 by %c495_i32_58 dim 1 : vector<32x512xf32>, i32 -> vector<32x512xf32>
    %c8_59 = arith.constant 8 : index
    %c0_60 = arith.constant 0 : index
    %99 = vector.load %arg3[%c8_59, %c0_60] : memref<9x512xf32, #tpu.memory_space<vmem>>, vector<1x512xf32>
    %100 = vector.broadcast %99 : vector<1x512xf32> to vector<32x512xf32>
    %101 = arith.mulf %98, %100 : vector<32x512xf32>
    %102 = arith.truncf %101 : vector<32x512xf32> to vector<32x512xbf16>
    %c256 = arith.constant 256 : index
    %c0_61 = arith.constant 0 : index
    %103 = vector.load %arg11[%c256, %c0_61] : memref<288x512xbf16, #tpu.memory_space<vmem>>, vector<32x512xbf16>
    tpu.vector_store %arg11[%c256, %c0_61], %102 {strides = array<i32>} : memref<288x512xbf16, #tpu.memory_space<vmem>>, vector<32x512xbf16>,
    %c0_62 = arith.constant 0 : index
    %c0_63 = arith.constant 0 : index
    %104 = vector.load %arg4[%c0_62, %c0_63] : memref<96x144xbf16, #tpu.memory_space<vmem>>, vector<96x144xbf16>
    %c0_64 = arith.constant 0 : index
    %c0_65 = arith.constant 0 : index
    %105 = vector.load %arg10[%c0_64, %c0_65] : memref<144x512xbf16, #tpu.memory_space<vmem>>, vector<144x512xbf16>
    %cst = arith.constant dense<0.000000e+00> : vector<96x512xf32>
    %106 = tpu.matmul %104, %105, %cst {dimension_numbers = #tpu.dot_dimension_numbers<[1], [0], [0], [1], [0, 0, 1, 1], [], []>} : vector<96x144xbf16>, vector<144x512xbf16>, vector<96x512xf32> -> vector<96x512xf32>
    %107 = vector.extract_strided_slice %106 {offsets = [0, 0], sizes = [64, 512], strides = [1, 1]} : vector<96x512xf32> to vector<64x512xf32>
    %c0_66 = arith.constant 0 : index
    %c0_67 = arith.constant 0 : index
    %108 = vector.load %arg5[%c0_66, %c0_67] : memref<64x288xbf16, #tpu.memory_space<vmem>>, vector<64x288xbf16>
    %c0_68 = arith.constant 0 : index
    %c0_69 = arith.constant 0 : index
    %109 = vector.load %arg11[%c0_68, %c0_69] : memref<288x512xbf16, #tpu.memory_space<vmem>>, vector<288x512xbf16>
    %cst_70 = arith.constant dense<0.000000e+00> : vector<64x512xf32>
    %110 = tpu.matmul %108, %109, %cst_70 {dimension_numbers = #tpu.dot_dimension_numbers<[1], [0], [0], [1], [0, 0, 1, 1], [], []>} : vector<64x288xbf16>, vector<288x512xbf16>, vector<64x512xf32> -> vector<64x512xf32>
    %111 = arith.addf %107, %110 : vector<64x512xf32>
    %c0_71 = arith.constant 0 : index
    %c0_72 = arith.constant 0 : index
    %112 = vector.load %arg7[%c0_71, %c0_72] : memref<64x1xf32, #tpu.memory_space<vmem>>, vector<64x1xf32>
    %113 = vector.broadcast %112 : vector<64x1xf32> to vector<64x512xf32>
    %114 = arith.addf %111, %113 : vector<64x512xf32>
    %115 = arith.negf %114 : vector<64x512xf32>
    %116 = math.exp %115 : vector<64x512xf32>
    %cst_73 = arith.constant 1.000000e+00 : f32
    %117 = vector.broadcast %cst_73 : f32 to vector<64x512xf32>
    %118 = arith.addf %117, %116 : vector<64x512xf32>
    %119 = arith.divf %117, %118 : vector<64x512xf32>
    %120 = vector.extract_strided_slice %119 {offsets = [0, 0], sizes = [32, 512], strides = [1, 1]} : vector<64x512xf32> to vector<32x512xf32>
    %121 = vector.extract_strided_slice %119 {offsets = [32, 0], sizes = [32, 512], strides = [1, 1]} : vector<64x512xf32> to vector<32x512xf32>
    %122 = arith.mulf %3, %121 : vector<32x512xf32>
    %c17_i32_74 = arith.constant 17 : i32
    %123 = tpu.dynamic_rotate %122 by %c17_i32_74 dim 1 : vector<32x512xf32>, i32 -> vector<32x512xf32>
    %c0_75 = arith.constant 0 : index
    %c0_76 = arith.constant 0 : index
    %124 = vector.load %arg3[%c0_75, %c0_76] : memref<9x512xf32, #tpu.memory_space<vmem>>, vector<1x512xf32>
    %125 = vector.broadcast %124 : vector<1x512xf32> to vector<32x512xf32>
    %126 = arith.mulf %123, %125 : vector<32x512xf32>
    %127 = arith.truncf %126 : vector<32x512xf32> to vector<32x512xbf16>
    %c0_77 = arith.constant 0 : index
    %c0_78 = arith.constant 0 : index
    %128 = vector.load %arg11[%c0_77, %c0_78] : memref<288x512xbf16, #tpu.memory_space<vmem>>, vector<32x512xbf16>
    tpu.vector_store %arg11[%c0_77, %c0_78], %127 {strides = array<i32>} : memref<288x512xbf16, #tpu.memory_space<vmem>>, vector<32x512xbf16>,
    %c16_i32_79 = arith.constant 16 : i32
    %129 = tpu.dynamic_rotate %122 by %c16_i32_79 dim 1 : vector<32x512xf32>, i32 -> vector<32x512xf32>
    %c1_80 = arith.constant 1 : index
    %c0_81 = arith.constant 0 : index
    %130 = vector.load %arg3[%c1_80, %c0_81] : memref<9x512xf32, #tpu.memory_space<vmem>>, vector<1x512xf32>
    %131 = vector.broadcast %130 : vector<1x512xf32> to vector<32x512xf32>
    %132 = arith.mulf %129, %131 : vector<32x512xf32>
    %133 = arith.truncf %132 : vector<32x512xf32> to vector<32x512xbf16>
    %c32_82 = arith.constant 32 : index
    %c0_83 = arith.constant 0 : index
    %134 = vector.load %arg11[%c32_82, %c0_83] : memref<288x512xbf16, #tpu.memory_space<vmem>>, vector<32x512xbf16>
    tpu.vector_store %arg11[%c32_82, %c0_83], %133 {strides = array<i32>} : memref<288x512xbf16, #tpu.memory_space<vmem>>, vector<32x512xbf16>,
    %c15_i32_84 = arith.constant 15 : i32
    %135 = tpu.dynamic_rotate %122 by %c15_i32_84 dim 1 : vector<32x512xf32>, i32 -> vector<32x512xf32>
    %c2_85 = arith.constant 2 : index
    %c0_86 = arith.constant 0 : index
    %136 = vector.load %arg3[%c2_85, %c0_86] : memref<9x512xf32, #tpu.memory_space<vmem>>, vector<1x512xf32>
    %137 = vector.broadcast %136 : vector<1x512xf32> to vector<32x512xf32>
    %138 = arith.mulf %135, %137 : vector<32x512xf32>
    %139 = arith.truncf %138 : vector<32x512xf32> to vector<32x512xbf16>
    %c64_87 = arith.constant 64 : index
    %c0_88 = arith.constant 0 : index
    %140 = vector.load %arg11[%c64_87, %c0_88] : memref<288x512xbf16, #tpu.memory_space<vmem>>, vector<32x512xbf16>
    tpu.vector_store %arg11[%c64_87, %c0_88], %139 {strides = array<i32>} : memref<288x512xbf16, #tpu.memory_space<vmem>>, vector<32x512xbf16>,
    %c1_i32_89 = arith.constant 1 : i32
    %141 = tpu.dynamic_rotate %122 by %c1_i32_89 dim 1 : vector<32x512xf32>, i32 -> vector<32x512xf32>
    %c3_90 = arith.constant 3 : index
    %c0_91 = arith.constant 0 : index
    %142 = vector.load %arg3[%c3_90, %c0_91] : memref<9x512xf32, #tpu.memory_space<vmem>>, vector<1x512xf32>
    %143 = vector.broadcast %142 : vector<1x512xf32> to vector<32x512xf32>
    %144 = arith.mulf %141, %143 : vector<32x512xf32>
    %145 = arith.truncf %144 : vector<32x512xf32> to vector<32x512xbf16>
    %c96_92 = arith.constant 96 : index
    %c0_93 = arith.constant 0 : index
    %146 = vector.load %arg11[%c96_92, %c0_93] : memref<288x512xbf16, #tpu.memory_space<vmem>>, vector<32x512xbf16>
    tpu.vector_store %arg11[%c96_92, %c0_93], %145 {strides = array<i32>} : memref<288x512xbf16, #tpu.memory_space<vmem>>, vector<32x512xbf16>,
    %147 = arith.truncf %122 : vector<32x512xf32> to vector<32x512xbf16>
    %c128_94 = arith.constant 128 : index
    %c0_95 = arith.constant 0 : index
    %148 = vector.load %arg11[%c128_94, %c0_95] : memref<288x512xbf16, #tpu.memory_space<vmem>>, vector<32x512xbf16>
    tpu.vector_store %arg11[%c128_94, %c0_95], %147 {strides = array<i32>} : memref<288x512xbf16, #tpu.memory_space<vmem>>, vector<32x512xbf16>,
    %c511_i32_96 = arith.constant 511 : i32
    %149 = tpu.dynamic_rotate %122 by %c511_i32_96 dim 1 : vector<32x512xf32>, i32 -> vector<32x512xf32>
    %c5_97 = arith.constant 5 : index
    %c0_98 = arith.constant 0 : index
    %150 = vector.load %arg3[%c5_97, %c0_98] : memref<9x512xf32, #tpu.memory_space<vmem>>, vector<1x512xf32>
    %151 = vector.broadcast %150 : vector<1x512xf32> to vector<32x512xf32>
    %152 = arith.mulf %149, %151 : vector<32x512xf32>
    %153 = arith.truncf %152 : vector<32x512xf32> to vector<32x512xbf16>
    %c160_99 = arith.constant 160 : index
    %c0_100 = arith.constant 0 : index
    %154 = vector.load %arg11[%c160_99, %c0_100] : memref<288x512xbf16, #tpu.memory_space<vmem>>, vector<32x512xbf16>
    tpu.vector_store %arg11[%c160_99, %c0_100], %153 {strides = array<i32>} : memref<288x512xbf16, #tpu.memory_space<vmem>>, vector<32x512xbf16>,
    %c497_i32_101 = arith.constant 497 : i32
    %155 = tpu.dynamic_rotate %122 by %c497_i32_101 dim 1 : vector<32x512xf32>, i32 -> vector<32x512xf32>
    %c6_102 = arith.constant 6 : index
    %c0_103 = arith.constant 0 : index
    %156 = vector.load %arg3[%c6_102, %c0_103] : memref<9x512xf32, #tpu.memory_space<vmem>>, vector<1x512xf32>
    %157 = vector.broadcast %156 : vector<1x512xf32> to vector<32x512xf32>
    %158 = arith.mulf %155, %157 : vector<32x512xf32>
    %159 = arith.truncf %158 : vector<32x512xf32> to vector<32x512xbf16>
    %c192_104 = arith.constant 192 : index
    %c0_105 = arith.constant 0 : index
    %160 = vector.load %arg11[%c192_104, %c0_105] : memref<288x512xbf16, #tpu.memory_space<vmem>>, vector<32x512xbf16>
    tpu.vector_store %arg11[%c192_104, %c0_105], %159 {strides = array<i32>} : memref<288x512xbf16, #tpu.memory_space<vmem>>, vector<32x512xbf16>,
    %c496_i32_106 = arith.constant 496 : i32
    %161 = tpu.dynamic_rotate %122 by %c496_i32_106 dim 1 : vector<32x512xf32>, i32 -> vector<32x512xf32>
    %c7_107 = arith.constant 7 : index
    %c0_108 = arith.constant 0 : index
    %162 = vector.load %arg3[%c7_107, %c0_108] : memref<9x512xf32, #tpu.memory_space<vmem>>, vector<1x512xf32>
    %163 = vector.broadcast %162 : vector<1x512xf32> to vector<32x512xf32>
    %164 = arith.mulf %161, %163 : vector<32x512xf32>
    %165 = arith.truncf %164 : vector<32x512xf32> to vector<32x512xbf16>
    %c224_109 = arith.constant 224 : index
    %c0_110 = arith.constant 0 : index
    %166 = vector.load %arg11[%c224_109, %c0_110] : memref<288x512xbf16, #tpu.memory_space<vmem>>, vector<32x512xbf16>
    tpu.vector_store %arg11[%c224_109, %c0_110], %165 {strides = array<i32>} : memref<288x512xbf16, #tpu.memory_space<vmem>>, vector<32x512xbf16>,
    %c495_i32_111 = arith.constant 495 : i32
    %167 = tpu.dynamic_rotate %122 by %c495_i32_111 dim 1 : vector<32x512xf32>, i32 -> vector<32x512xf32>
    %c8_112 = arith.constant 8 : index
    %c0_113 = arith.constant 0 : index
    %168 = vector.load %arg3[%c8_112, %c0_113] : memref<9x512xf32, #tpu.memory_space<vmem>>, vector<1x512xf32>
    %169 = vector.broadcast %168 : vector<1x512xf32> to vector<32x512xf32>
    %170 = arith.mulf %167, %169 : vector<32x512xf32>
    %171 = arith.truncf %170 : vector<32x512xf32> to vector<32x512xbf16>
    %c256_114 = arith.constant 256 : index
    %c0_115 = arith.constant 0 : index
    %172 = vector.load %arg11[%c256_114, %c0_115] : memref<288x512xbf16, #tpu.memory_space<vmem>>, vector<32x512xbf16>
    tpu.vector_store %arg11[%c256_114, %c0_115], %171 {strides = array<i32>} : memref<288x512xbf16, #tpu.memory_space<vmem>>, vector<32x512xbf16>,
    %173 = vector.extract_strided_slice %106 {offsets = [64, 0], sizes = [32, 512], strides = [1, 1]} : vector<96x512xf32> to vector<32x512xf32>
    %c0_116 = arith.constant 0 : index
    %c0_117 = arith.constant 0 : index
    %174 = vector.load %arg6[%c0_116, %c0_117] : memref<32x288xbf16, #tpu.memory_space<vmem>>, vector<32x288xbf16>
    %c0_118 = arith.constant 0 : index
    %c0_119 = arith.constant 0 : index
    %175 = vector.load %arg11[%c0_118, %c0_119] : memref<288x512xbf16, #tpu.memory_space<vmem>>, vector<288x512xbf16>
    %cst_120 = arith.constant dense<0.000000e+00> : vector<32x512xf32>
    %176 = tpu.matmul %174, %175, %cst_120 {dimension_numbers = #tpu.dot_dimension_numbers<[1], [0], [0], [1], [0, 0, 1, 1], [], []>} : vector<32x288xbf16>, vector<288x512xbf16>, vector<32x512xf32> -> vector<32x512xf32>
    %177 = arith.addf %173, %176 : vector<32x512xf32>
    %c0_121 = arith.constant 0 : index
    %c0_122 = arith.constant 0 : index
    %178 = vector.load %arg8[%c0_121, %c0_122] : memref<32x1xf32, #tpu.memory_space<vmem>>, vector<32x1xf32>
    %179 = vector.broadcast %178 : vector<32x1xf32> to vector<32x512xf32>
    %180 = arith.addf %177, %179 : vector<32x512xf32>
    %181 = math.tanh %180 : vector<32x512xf32>
    %cst_123 = arith.constant 1.000000e+00 : f32
    %182 = vector.broadcast %cst_123 : f32 to vector<32x512xf32>
    %183 = arith.subf %182, %120 : vector<32x512xf32>
    %184 = arith.mulf %3, %183 : vector<32x512xf32>
    %185 = arith.mulf %181, %120 : vector<32x512xf32>
    %186 = arith.addf %184, %185 : vector<32x512xf32>
    %c0_124 = arith.constant 0 : index
    %c0_125 = arith.constant 0 : index
    %c0_126 = arith.constant 0 : index
    %187 = vector.load %arg9[%c0_124, %c0_125, %c0_126] : memref<1x32x512xf32, #tpu.memory_space<vmem>>, vector<1x32x512xf32>
    %188 = vector.shape_cast %187 : vector<1x32x512xf32> to vector<32x512xf32>
    %189 = vector.shape_cast %186 : vector<32x512xf32> to vector<1x32x512xf32>
    tpu.vector_store %arg9[%c0_124, %c0_125, %c0_126], %189 {strides = array<i32>} : memref<1x32x512xf32, #tpu.memory_space<vmem>>, vector<1x32x512xf32>,
    return
  }
  func.func @transform_0(%arg0: i32) -> (i32, i32, i32) {
    %c0_i32 = arith.constant 0 : i32
    %c0_i32_0 = arith.constant 0 : i32
    %c0_i32_1 = arith.constant 0 : i32
    return %arg0, %c0_i32, %c0_i32_0 : i32, i32, i32
  }
  func.func @transform_1(%arg0: i32) -> (i32, i32, i32) {
    %c0_i32 = arith.constant 0 : i32
    %c0_i32_0 = arith.constant 0 : i32
    %c0_i32_1 = arith.constant 0 : i32
    return %arg0, %c0_i32, %c0_i32_0 : i32, i32, i32
  }
  func.func @transform_2(%arg0: i32) -> (i32, i32) {
    %c0_i32 = arith.constant 0 : i32
    %c0_i32_0 = arith.constant 0 : i32
    %c0_i32_1 = arith.constant 0 : i32
    return %c0_i32, %c0_i32_0 : i32, i32
  }
  func.func @transform_3(%arg0: i32) -> (i32, i32) {
    %c0_i32 = arith.constant 0 : i32
    %c0_i32_0 = arith.constant 0 : i32
    %c0_i32_1 = arith.constant 0 : i32
    return %c0_i32, %c0_i32_0 : i32, i32
  }
  func.func @transform_4(%arg0: i32) -> (i32, i32) {
    %c0_i32 = arith.constant 0 : i32
    %c0_i32_0 = arith.constant 0 : i32
    %c0_i32_1 = arith.constant 0 : i32
    return %c0_i32, %c0_i32_0 : i32, i32
  }
  func.func @transform_5(%arg0: i32) -> (i32, i32) {
    %c0_i32 = arith.constant 0 : i32
    %c0_i32_0 = arith.constant 0 : i32
    %c0_i32_1 = arith.constant 0 : i32
    return %c0_i32, %c0_i32_0 : i32, i32
  }
  func.func @transform_6(%arg0: i32) -> (i32, i32) {
    %c0_i32 = arith.constant 0 : i32
    %c0_i32_0 = arith.constant 0 : i32
    %c0_i32_1 = arith.constant 0 : i32
    return %c0_i32, %c0_i32_0 : i32, i32
  }
  func.func @transform_7(%arg0: i32) -> (i32, i32) {
    %c0_i32 = arith.constant 0 : i32
    %c0_i32_0 = arith.constant 0 : i32
    %c0_i32_1 = arith.constant 0 : i32
    return %c0_i32, %c0_i32_0 : i32, i32
  }
  func.func @transform_8(%arg0: i32) -> (i32, i32, i32) {
    %c0_i32 = arith.constant 0 : i32
    %c0_i32_0 = arith.constant 0 : i32
    %c0_i32_1 = arith.constant 0 : i32
    return %arg0, %c0_i32, %c0_i32_0 : i32, i32, i32
  }
}

</mosaic_0001>

<llo_original>
// kernel: _step.1
$region0: #{_step.1}
  #allocation0 [shape = 'u32[]', space=smem, size = 0x4, offset = 0x4, fixed_abs, tag = 'smem constant byte address 0x4 - core index']
  #allocation1 [shape = 'u32[144,128]{1,0:T(1,128)}', space=vmem, size = 0x12000, scoped, tag = 'internal scratch']
  #allocation2 [shape = 'bf16[144,512]{1,0:T(16,128)(2,1)}', space=vmem, size = 0x24000, scoped, tag = 'scratch operand']
  #allocation3 [shape = 'bf16[288,512]{1,0:T(16,128)(2,1)}', space=vmem, size = 0x48000, scoped, tag = 'scratch operand']
  %s0 = inlined_call_operand.vmem [shape: f32[1,16,512], index: 0, kind: input, shape index: {}]
  %s1 = inlined_call_operand.vmem [shape: f32[1,32,512], index: 1, kind: input, shape index: {}]
  %s2 = inlined_call_operand.vmem [shape: f32[9,512], index: 2, kind: input, shape index: {}]
  %s3 = inlined_call_operand.vmem [shape: bf16[96,144], index: 3, kind: input, shape index: {}]
  %s4 = inlined_call_operand.vmem [shape: bf16[64,288], index: 4, kind: input, shape index: {}]
  %s5 = inlined_call_operand.vmem [shape: bf16[32,288], index: 5, kind: input, shape index: {}]
  %s6 = inlined_call_operand.vmem [shape: f32[64,1], index: 6, kind: input, shape index: {}]
  %s7 = inlined_call_operand.vmem [shape: f32[32,1], index: 7, kind: input, shape index: {}]
  %s8 = inlined_call_operand.vmem [shape: f32[1,32,512], index: 8, kind: output, shape index: {}]
  %s9 = sld [smem:[#allocation0]]
  $region42: #{_step.1} parent=0
    _
  %s11 = ssub.s32 1, %s9
  %s12 = scalar_select 0, %s11, %s9
  // Predicated region
  $region2: #{_step.1} parent=0 // pred_check
    _
  $region3: #{_step.1} parent=0 // pred_check_branch
    %14 = sbr.rel (0) target = $region5
  $region4: #{_step.1} parent=0 // pred_region
    _
  $region5: #{_step.1} parent=0 // pred_fallthru
    _
  // Predicated region
  $region6: #{_step.1} parent=0 // pred_check
    _
  $region7: #{_step.1} parent=0 // pred_check_branch
    %16 = sbr.rel (0) target = $region9
  $region8: #{_step.1} parent=0 // pred_region
    _
  $region9: #{_step.1} parent=0 // pred_fallthru
    _
  // Predicated region
  $region10: #{_step.1} parent=0 // pred_check
    _
  $region11: #{_step.1} parent=0 // pred_check_branch
    %18 = sbr.rel (0) target = $region13
  $region12: #{_step.1} parent=0 // pred_region
    _
  $region13: #{_step.1} parent=0 // pred_fallthru
    _
  // Predicated region
  $region14: #{_step.1} parent=0 // pred_check
    _
  $region15: #{_step.1} parent=0 // pred_check_branch
    %20 = sbr.rel (0) target = $region17
  $region16: #{_step.1} parent=0 // pred_region
    _
  $region17: #{_step.1} parent=0 // pred_fallthru
    _
  // Predicated region
  $region18: #{_step.1} parent=0 // pred_check
    _
  $region19: #{_step.1} parent=0 // pred_check_branch
    %22 = sbr.rel (0) target = $region21
  $region20: #{_step.1} parent=0 // pred_region
    _
  $region21: #{_step.1} parent=0 // pred_fallthru
    _
  // Predicated region
  $region22: #{_step.1} parent=0 // pred_check
    _
  $region23: #{_step.1} parent=0 // pred_check_branch
    %24 = sbr.rel (0) target = $region25
  $region24: #{_step.1} parent=0 // pred_region
    _
  $region25: #{_step.1} parent=0 // pred_fallthru
    _
  // Predicated region
  $region26: #{_step.1} parent=0 // pred_check
    _
  $region27: #{_step.1} parent=0 // pred_check_branch
    %26 = sbr.rel (0) target = $region29
  $region28: #{_step.1} parent=0 // pred_region
    _
  $region29: #{_step.1} parent=0 // pred_fallthru
    _
  // Predicated region
  $region30: #{_step.1} parent=0 // pred_check
    _
  $region31: #{_step.1} parent=0 // pred_check_branch
    %28 = sbr.rel (0) target = $region33
  $region32: #{_step.1} parent=0 // pred_region
    _
  $region33: #{_step.1} parent=0 // pred_fallthru
    _
  %v30 = vld [vmem:[%s0] sm:$0xff]
  %v31 = vld [vmem:[%s0 + $0x8] sm:$0xff]
  %v32 = vld [vmem:[%s0 + $0x10] sm:$0xff]
  %v33 = vld [vmem:[%s0 + $0x18] sm:$0xff]
  %v34 = vld [vmem:[%s0 + $0x20] sm:$0xff]
  %v35 = vld [vmem:[%s0 + $0x28] sm:$0xff]
  %v36 = vld [vmem:[%s0 + $0x30] sm:$0xff]
  %v37 = vld [vmem:[%s0 + $0x38] sm:$0xff]
  %v38 = vld [vmem:[%s1] sm:$0xff]
  %v39 = vld [vmem:[%s1 + $0x8] sm:$0xff]
  %v40 = vld [vmem:[%s1 + $0x10] sm:$0xff]
  %v41 = vld [vmem:[%s1 + $0x18] sm:$0xff]
  %v42 = vld [vmem:[%s1 + $0x20] sm:$0xff]
  %v43 = vld [vmem:[%s1 + $0x28] sm:$0xff]
  %v44 = vld [vmem:[%s1 + $0x30] sm:$0xff]
  %v45 = vld [vmem:[%s1 + $0x38] sm:$0xff]
  %v46 = vld [vmem:[%s1 + $0x40] sm:$0xff]
  %v47 = vld [vmem:[%s1 + $0x48] sm:$0xff]
  %v48 = vld [vmem:[%s1 + $0x50] sm:$0xff]
  %v49 = vld [vmem:[%s1 + $0x58] sm:$0xff]
  %v50 = vld [vmem:[%s1 + $0x60] sm:$0xff]
  %v51 = vld [vmem:[%s1 + $0x68] sm:$0xff]
  %v52 = vld [vmem:[%s1 + $0x70] sm:$0xff]
  %v53 = vld [vmem:[%s1 + $0x78] sm:$0xff]
  %54 = vrot.lane.b32.xlu0 %v30, 17
  %v55 = vpop.permute.xlu0 %54
  %56 = vrot.lane.b32.xlu0 %v34, 17
  %v57 = vpop.permute.xlu0 %56
  %58 = vrot.lane.b32.xlu0 %v31, 17
  %v59 = vpop.permute.xlu0 %58
  %60 = vrot.lane.b32.xlu0 %v35, 17
  %v61 = vpop.permute.xlu0 %60
  %62 = vrot.lane.b32.xlu0 %v32, 17
  %v63 = vpop.permute.xlu0 %62
  %64 = vrot.lane.b32.xlu0 %v36, 17
  %v65 = vpop.permute.xlu0 %64
  %66 = vrot.lane.b32.xlu0 %v33, 17
  %v67 = vpop.permute.xlu0 %66
  %68 = vrot.lane.b32.xlu0 %v37, 17
  %v69 = vpop.permute.xlu0 %68
  %v70 = vlaneseq
  %v71 = vand.u32 %v70, 127
  %vm72 = vcmp.lt.s32.totalorder %v71, 17
  %v73 = vsel %vm72, %v63, %v67
  %v74 = vsel %vm72, %v65, %v69
  %v75 = vsel %vm72, %v59, %v63
  %v76 = vsel %vm72, %v61, %v65
  %v77 = vsel %vm72, %v55, %v59
  %v78 = vsel %vm72, %v57, %v61
  %v79 = vsel %vm72, %v67, %v55
  %v80 = vsel %vm72, %v69, %v57
  %v81 = vld [vmem:[%s2] ss:$8 sm:$0xf]
  %v83 = vlaneseq
  %v84 = vshrl.u32 %v83, 7
  %v85 = vsub.s32 0, %v84
  %v86 = vrot.slane %v81, %v85
  %v87 = vlaneseq
  %v88 = vshrl.u32 %v87, 7
  %v89 = vsub.s32 1, %v88
  %v90 = vrot.slane %v81, %v89
  %v91 = vlaneseq
  %v92 = vshrl.u32 %v91, 7
  %v93 = vsub.s32 2, %v92
  %v94 = vrot.slane %v81, %v93
  %v95 = vlaneseq
  %v96 = vshrl.u32 %v95, 7
  %v97 = vsub.s32 3, %v96
  %v98 = vrot.slane %v81, %v97
  %v103 = vmul.f32 %v79, %v86
  %v104 = vmul.f32 %v77, %v90
  %v105 = vmul.f32 %v75, %v94
  %v106 = vmul.f32 %v73, %v98
  %v107 = vmul.f32 %v80, %v86
  %v108 = vmul.f32 %v78, %v90
  %v109 = vmul.f32 %v76, %v94
  %v110 = vmul.f32 %v74, %v98
  %v111 = vpack.c.bf16 %v107, %v103
  %v112 = vpack.c.bf16 %v108, %v104
  %v113 = vpack.c.bf16 %v109, %v105
  %v114 = vpack.c.bf16 %v110, %v106
  %115 = vst [vmem:[#allocation2] sm:$0xff] %v111
  %116 = vst [vmem:[#allocation2 + $0x8] sm:$0xff] %v112
  %117 = vst [vmem:[#allocation2 + $0x10] sm:$0xff] %v113
  %118 = vst [vmem:[#allocation2 + $0x18] sm:$0xff] %v114
  %119 = vrot.lane.b32.xlu0 %v30, 16
  %v120 = vpop.permute.xlu0 %119
  %121 = vrot.lane.b32.xlu0 %v34, 16
  %v122 = vpop.permute.xlu0 %121
  %123 = vrot.lane.b32.xlu0 %v31, 16
  %v124 = vpop.permute.xlu0 %123
  %125 = vrot.lane.b32.xlu0 %v35, 16
  %v126 = vpop.permute.xlu0 %125
  %127 = vrot.lane.b32.xlu0 %v32, 16
  %v128 = vpop.permute.xlu0 %127
  %129 = vrot.lane.b32.xlu0 %v36, 16
  %v130 = vpop.permute.xlu0 %129
  %131 = vrot.lane.b32.xlu0 %v33, 16
  %v132 = vpop.permute.xlu0 %131
  %133 = vrot.lane.b32.xlu0 %v37, 16
  %v134 = vpop.permute.xlu0 %133
  %vm135 = vcmp.lt.s32.totalorder %v71, 16
  %v136 = vsel %vm135, %v128, %v132
  %v137 = vsel %vm135, %v130, %v134
  %v138 = vsel %vm135, %v124, %v128
  %v139 = vsel %vm135, %v126, %v130
  %v140 = vsel %vm135, %v120, %v124
  %v141 = vsel %vm135, %v122, %v126
  %v142 = vsel %vm135, %v132, %v120
  %v143 = vsel %vm135, %v134, %v122
  %s144 = scalar_lea.vmem %s2, 1
  %v145 = vld [vmem:[%s144] ss:$8 sm:$0xf]
  %v147 = vlaneseq
  %v148 = vshrl.u32 %v147, 7
  %v149 = vsub.s32 0, %v148
  %v150 = vrot.slane %v145, %v149
  %v151 = vlaneseq
  %v152 = vshrl.u32 %v151, 7
  %v153 = vsub.s32 1, %v152
  %v154 = vrot.slane %v145, %v153
  %v155 = vlaneseq
  %v156 = vshrl.u32 %v155, 7
  %v157 = vsub.s32 2, %v156
  %v158 = vrot.slane %v145, %v157
  %v159 = vlaneseq
  %v160 = vshrl.u32 %v159, 7
  %v161 = vsub.s32 3, %v160
  %v162 = vrot.slane %v145, %v161
  %v167 = vmul.f32 %v142, %v150
  %v168 = vmul.f32 %v140, %v154
  %v169 = vmul.f32 %v138, %v158
  %v170 = vmul.f32 %v136, %v162
  %v171 = vmul.f32 %v143, %v150
  %v172 = vmul.f32 %v141, %v154
  %v173 = vmul.f32 %v139, %v158
  %v174 = vmul.f32 %v137, %v162
  %v175 = vpack.c.bf16 %v171, %v167
  %v176 = vpack.c.bf16 %v172, %v168
  %v177 = vpack.c.bf16 %v173, %v169
  %v178 = vpack.c.bf16 %v174, %v170
  %179 = vst [vmem:[#allocation2 + $0x20] sm:$0xff] %v175
  %180 = vst [vmem:[#allocation2 + $0x28] sm:$0xff] %v176
  %181 = vst [vmem:[#allocation2 + $0x30] sm:$0xff] %v177
  %182 = vst [vmem:[#allocation2 + $0x38] sm:$0xff] %v178
  %183 = vrot.lane.b32.xlu0 %v30, 15
  %v184 = vpop.permute.xlu0 %183
  %185 = vrot.lane.b32.xlu0 %v34, 15
  %v186 = vpop.permute.xlu0 %185
  %187 = vrot.lane.b32.xlu0 %v31, 15
  %v188 = vpop.permute.xlu0 %187
  %189 = vrot.lane.b32.xlu0 %v35, 15
  %v190 = vpop.permute.xlu0 %189
  %191 = vrot.lane.b32.xlu0 %v32, 15
  %v192 = vpop.permute.xlu0 %191
  %193 = vrot.lane.b32.xlu0 %v36, 15
  %v194 = vpop.permute.xlu0 %193
  %195 = vrot.lane.b32.xlu0 %v33, 15
  %v196 = vpop.permute.xlu0 %195
  %197 = vrot.lane.b32.xlu0 %v37, 15
  %v198 = vpop.permute.xlu0 %197
  %vm199 = vcmp.lt.s32.totalorder %v71, 15
  %v200 = vsel %vm199, %v192, %v196
  %v201 = vsel %vm199, %v194, %v198
  %v202 = vsel %vm199, %v188, %v192
  %v203 = vsel %vm199, %v190, %v194
  %v204 = vsel %vm199, %v184, %v188
  %v205 = vsel %vm199, %v186, %v190
  %v206 = vsel %vm199, %v196, %v184
  %v207 = vsel %vm199, %v198, %v186
  %s208 = scalar_lea.vmem %s2, 2
  %v209 = vld [vmem:[%s208] ss:$8 sm:$0xf]
  %v211 = vlaneseq
  %v212 = vshrl.u32 %v211, 7
  %v213 = vsub.s32 0, %v212
  %v214 = vrot.slane %v209, %v213
  %v215 = vlaneseq
  %v216 = vshrl.u32 %v215, 7
  %v217 = vsub.s32 1, %v216
  %v218 = vrot.slane %v209, %v217
  %v219 = vlaneseq
  %v220 = vshrl.u32 %v219, 7
  %v221 = vsub.s32 2, %v220
  %v222 = vrot.slane %v209, %v221
  %v223 = vlaneseq
  %v224 = vshrl.u32 %v223, 7
  %v225 = vsub.s32 3, %v224
  %v226 = vrot.slane %v209, %v225
  %v231 = vmul.f32 %v206, %v214
  %v232 = vmul.f32 %v204, %v218
  %v233 = vmul.f32 %v202, %v222
  %v234 = vmul.f32 %v200, %v226
  %v235 = vmul.f32 %v207, %v214
  %v236 = vmul.f32 %v205, %v218
  %v237 = vmul.f32 %v203, %v222
  %v238 = vmul.f32 %v201, %v226
  %v239 = vpack.c.bf16 %v235, %v231
  %v240 = vpack.c.bf16 %v236, %v232
  %v241 = vpack.c.bf16 %v237, %v233
  %v242 = vpack.c.bf16 %v238, %v234
  %243 = vst [vmem:[#allocation2 + $0x40] sm:$0xff] %v239
  %244 = vst [vmem:[#allocation2 + $0x48] sm:$0xff] %v240
  %245 = vst [vmem:[#allocation2 + $0x50] sm:$0xff] %v241
  %246 = vst [vmem:[#allocation2 + $0x58] sm:$0xff] %v242
  %247 = vrot.lane.b32.xlu0 %v30, 1
  %v248 = vpop.permute.xlu0 %247
  %249 = vrot.lane.b32.xlu0 %v34, 1
  %v250 = vpop.permute.xlu0 %249
  %251 = vrot.lane.b32.xlu0 %v31, 1
  %v252 = vpop.permute.xlu0 %251
  %253 = vrot.lane.b32.xlu0 %v35, 1
  %v254 = vpop.permute.xlu0 %253
  %255 = vrot.lane.b32.xlu0 %v32, 1
  %v256 = vpop.permute.xlu0 %255
  %257 = vrot.lane.b32.xlu0 %v36, 1
  %v258 = vpop.permute.xlu0 %257
  %259 = vrot.lane.b32.xlu0 %v33, 1
  %v260 = vpop.permute.xlu0 %259
  %261 = vrot.lane.b32.xlu0 %v37, 1
  %v262 = vpop.permute.xlu0 %261
  %vm263 = vcmp.lt.s32.totalorder %v71, 1
  %v264 = vsel %vm263, %v256, %v260
  %v265 = vsel %vm263, %v258, %v262
  %v266 = vsel %vm263, %v252, %v256
  %v267 = vsel %vm263, %v254, %v258
  %v268 = vsel %vm263, %v248, %v252
  %v269 = vsel %vm263, %v250, %v254
  %v270 = vsel %vm263, %v260, %v248
  %v271 = vsel %vm263, %v262, %v250
  %s272 = scalar_lea.vmem %s2, 3
  %v273 = vld [vmem:[%s272] ss:$8 sm:$0xf]
  %v275 = vlaneseq
  %v276 = vshrl.u32 %v275, 7
  %v277 = vsub.s32 0, %v276
  %v278 = vrot.slane %v273, %v277
  %v279 = vlaneseq
  %v280 = vshrl.u32 %v279, 7
  %v281 = vsub.s32 1, %v280
  %v282 = vrot.slane %v273, %v281
  %v283 = vlaneseq
  %v284 = vshrl.u32 %v283, 7
  %v285 = vsub.s32 2, %v284
  %v286 = vrot.slane %v273, %v285
  %v287 = vlaneseq
  %v288 = vshrl.u32 %v287, 7
  %v289 = vsub.s32 3, %v288
  %v290 = vrot.slane %v273, %v289
  %v295 = vmul.f32 %v270, %v278
  %v296 = vmul.f32 %v268, %v282
  %v297 = vmul.f32 %v266, %v286
  %v298 = vmul.f32 %v264, %v290
  %v299 = vmul.f32 %v271, %v278
  %v300 = vmul.f32 %v269, %v282
  %v301 = vmul.f32 %v267, %v286
  %v302 = vmul.f32 %v265, %v290
  %v303 = vpack.c.bf16 %v299, %v295
  %v304 = vpack.c.bf16 %v300, %v296
  %v305 = vpack.c.bf16 %v301, %v297
  %v306 = vpack.c.bf16 %v302, %v298
  %307 = vst [vmem:[#allocation2 + $0x60] sm:$0xff] %v303
  %308 = vst [vmem:[#allocation2 + $0x68] sm:$0xff] %v304
  %309 = vst [vmem:[#allocation2 + $0x70] sm:$0xff] %v305
  %310 = vst [vmem:[#allocation2 + $0x78] sm:$0xff] %v306
  %v311 = vpack.c.bf16 %v34, %v30
  %v312 = vpack.c.bf16 %v35, %v31
  %v313 = vpack.c.bf16 %v36, %v32
  %v314 = vpack.c.bf16 %v37, %v33
  %315 = vst [vmem:[#allocation2 + $0x80] sm:$0xff] %v311
  %316 = vst [vmem:[#allocation2 + $0x88] sm:$0xff] %v312
  %317 = vst [vmem:[#allocation2 + $0x90] sm:$0xff] %v313
  %318 = vst [vmem:[#allocation2 + $0x98] sm:$0xff] %v314
  %319 = vrot.lane.b32.xlu0 %v30, 127
  %v320 = vpop.permute.xlu0 %319
  %321 = vrot.lane.b32.xlu0 %v34, 127
  %v322 = vpop.permute.xlu0 %321
  %323 = vrot.lane.b32.xlu0 %v31, 127
  %v324 = vpop.permute.xlu0 %323
  %325 = vrot.lane.b32.xlu0 %v35, 127
  %v326 = vpop.permute.xlu0 %325
  %327 = vrot.lane.b32.xlu0 %v32, 127
  %v328 = vpop.permute.xlu0 %327
  %329 = vrot.lane.b32.xlu0 %v36, 127
  %v330 = vpop.permute.xlu0 %329
  %331 = vrot.lane.b32.xlu0 %v33, 127
  %v332 = vpop.permute.xlu0 %331
  %333 = vrot.lane.b32.xlu0 %v37, 127
  %v334 = vpop.permute.xlu0 %333
  %vm335 = vcmp.lt.s32.totalorder %v71, 127
  %v336 = vsel %vm335, %v328, %v332
  %v337 = vsel %vm335, %v330, %v334
  %v338 = vsel %vm335, %v324, %v328
  %v339 = vsel %vm335, %v326, %v330
  %v340 = vsel %vm335, %v320, %v324
  %v341 = vsel %vm335, %v322, %v326
  %v342 = vsel %vm335, %v332, %v320
  %v343 = vsel %vm335, %v334, %v322
  %s344 = scalar_lea.vmem %s2, 5
  %v345 = vld [vmem:[%s344] ss:$8 sm:$0xf]
  %v347 = vlaneseq
  %v348 = vshrl.u32 %v347, 7
  %v349 = vsub.s32 0, %v348
  %v350 = vrot.slane %v345, %v349
  %v351 = vlaneseq
  %v352 = vshrl.u32 %v351, 7
  %v353 = vsub.s32 1, %v352
  %v354 = vrot.slane %v345, %v353
  %v355 = vlaneseq
  %v356 = vshrl.u32 %v355, 7
  %v357 = vsub.s32 2, %v356
  %v358 = vrot.slane %v345, %v357
  %v359 = vlaneseq
  %v360 = vshrl.u32 %v359, 7
  %v361 = vsub.s32 3, %v360
  %v362 = vrot.slane %v345, %v361
  %v367 = vmul.f32 %v340, %v350
  %v368 = vmul.f32 %v338, %v354
  %v369 = vmul.f32 %v336, %v358
  %v370 = vmul.f32 %v342, %v362
  %v371 = vmul.f32 %v341, %v350
  %v372 = vmul.f32 %v339, %v354
  %v373 = vmul.f32 %v337, %v358
  %v374 = vmul.f32 %v343, %v362
  %v375 = vpack.c.bf16 %v371, %v367
  %v376 = vpack.c.bf16 %v372, %v368
  %v377 = vpack.c.bf16 %v373, %v369
  %v378 = vpack.c.bf16 %v374, %v370
  %379 = vst [vmem:[#allocation2 + $0xa0] sm:$0xff] %v375
  %380 = vst [vmem:[#allocation2 + $0xa8] sm:$0xff] %v376
  %381 = vst [vmem:[#allocation2 + $0xb0] sm:$0xff] %v377
  %382 = vst [vmem:[#allocation2 + $0xb8] sm:$0xff] %v378
  %383 = vrot.lane.b32.xlu0 %v30, 113
  %v384 = vpop.permute.xlu0 %383
  %385 = vrot.lane.b32.xlu0 %v34, 113
  %v386 = vpop.permute.xlu0 %385
  %387 = vrot.lane.b32.xlu0 %v31, 113
  %v388 = vpop.permute.xlu0 %387
  %389 = vrot.lane.b32.xlu0 %v35, 113
  %v390 = vpop.permute.xlu0 %389
  %391 = vrot.lane.b32.xlu0 %v32, 113
  %v392 = vpop.permute.xlu0 %391
  %393 = vrot.lane.b32.xlu0 %v36, 113
  %v394 = vpop.permute.xlu0 %393
  %395 = vrot.lane.b32.xlu0 %v33, 113
  %v396 = vpop.permute.xlu0 %395
  %397 = vrot.lane.b32.xlu0 %v37, 113
  %v398 = vpop.permute.xlu0 %397
  %vm399 = vcmp.lt.s32.totalorder %v71, 113
  %v400 = vsel %vm399, %v392, %v396
  %v401 = vsel %vm399, %v394, %v398
  %v402 = vsel %vm399, %v388, %v392
  %v403 = vsel %vm399, %v390, %v394
  %v404 = vsel %vm399, %v384, %v388
  %v405 = vsel %vm399, %v386, %v390
  %v406 = vsel %vm399, %v396, %v384
  %v407 = vsel %vm399, %v398, %v386
  %s408 = scalar_lea.vmem %s2, 6
  %v409 = vld [vmem:[%s408] ss:$8 sm:$0xf]
  %v411 = vlaneseq
  %v412 = vshrl.u32 %v411, 7
  %v413 = vsub.s32 0, %v412
  %v414 = vrot.slane %v409, %v413
  %v415 = vlaneseq
  %v416 = vshrl.u32 %v415, 7
  %v417 = vsub.s32 1, %v416
  %v418 = vrot.slane %v409, %v417
  %v419 = vlaneseq
  %v420 = vshrl.u32 %v419, 7
  %v421 = vsub.s32 2, %v420
  %v422 = vrot.slane %v409, %v421
  %v423 = vlaneseq
  %v424 = vshrl.u32 %v423, 7
  %v425 = vsub.s32 3, %v424
  %v426 = vrot.slane %v409, %v425
  %v431 = vmul.f32 %v404, %v414
  %v432 = vmul.f32 %v402, %v418
  %v433 = vmul.f32 %v400, %v422
  %v434 = vmul.f32 %v406, %v426
  %v435 = vmul.f32 %v405, %v414
  %v436 = vmul.f32 %v403, %v418
  %v437 = vmul.f32 %v401, %v422
  %v438 = vmul.f32 %v407, %v426
  %v439 = vpack.c.bf16 %v435, %v431
  %v440 = vpack.c.bf16 %v436, %v432
  %v441 = vpack.c.bf16 %v437, %v433
  %v442 = vpack.c.bf16 %v438, %v434
  %443 = vst [vmem:[#allocation2 + $0xc0] sm:$0xff] %v439
  %444 = vst [vmem:[#allocation2 + $0xc8] sm:$0xff] %v440
  %445 = vst [vmem:[#allocation2 + $0xd0] sm:$0xff] %v441
  %446 = vst [vmem:[#allocation2 + $0xd8] sm:$0xff] %v442
  %447 = vrot.lane.b32.xlu0 %v30, 112
  %v448 = vpop.permute.xlu0 %447
  %449 = vrot.lane.b32.xlu0 %v34, 112
  %v450 = vpop.permute.xlu0 %449
  %451 = vrot.lane.b32.xlu0 %v31, 112
  %v452 = vpop.permute.xlu0 %451
  %453 = vrot.lane.b32.xlu0 %v35, 112
  %v454 = vpop.permute.xlu0 %453
  %455 = vrot.lane.b32.xlu0 %v32, 112
  %v456 = vpop.permute.xlu0 %455
  %457 = vrot.lane.b32.xlu0 %v36, 112
  %v458 = vpop.permute.xlu0 %457
  %459 = vrot.lane.b32.xlu0 %v33, 112
  %v460 = vpop.permute.xlu0 %459
  %461 = vrot.lane.b32.xlu0 %v37, 112
  %v462 = vpop.permute.xlu0 %461
  %vm463 = vcmp.lt.s32.totalorder %v71, 112
  %v464 = vsel %vm463, %v456, %v460
  %v465 = vsel %vm463, %v458, %v462
  %v466 = vsel %vm463, %v452, %v456
  %v467 = vsel %vm463, %v454, %v458
  %v468 = vsel %vm463, %v448, %v452
  %v469 = vsel %vm463, %v450, %v454
  %v470 = vsel %vm463, %v460, %v448
  %v471 = vsel %vm463, %v462, %v450
  %s472 = scalar_lea.vmem %s2, 7
  %v473 = vld [vmem:[%s472] ss:$8 sm:$0xf]
  %v475 = vlaneseq
  %v476 = vshrl.u32 %v475, 7
  %v477 = vsub.s32 0, %v476
  %v478 = vrot.slane %v473, %v477
  %v479 = vlaneseq
  %v480 = vshrl.u32 %v479, 7
  %v481 = vsub.s32 1, %v480
  %v482 = vrot.slane %v473, %v481
  %v483 = vlaneseq
  %v484 = vshrl.u32 %v483, 7
  %v485 = vsub.s32 2, %v484
  %v486 = vrot.slane %v473, %v485
  %v487 = vlaneseq
  %v488 = vshrl.u32 %v487, 7
  %v489 = vsub.s32 3, %v488
  %v490 = vrot.slane %v473, %v489
  %v495 = vmul.f32 %v468, %v478
  %v496 = vmul.f32 %v466, %v482
  %v497 = vmul.f32 %v464, %v486
  %v498 = vmul.f32 %v470, %v490
  %v499 = vmul.f32 %v469, %v478
  %v500 = vmul.f32 %v467, %v482
  %v501 = vmul.f32 %v465, %v486
  %v502 = vmul.f32 %v471, %v490
  %v503 = vpack.c.bf16 %v499, %v495
  %v504 = vpack.c.bf16 %v500, %v496
  %v505 = vpack.c.bf16 %v501, %v497
  %v506 = vpack.c.bf16 %v502, %v498
  %507 = vst [vmem:[#allocation2 + $0xe0] sm:$0xff] %v503
  %508 = vst [vmem:[#allocation2 + $0xe8] sm:$0xff] %v504
  %509 = vst [vmem:[#allocation2 + $0xf0] sm:$0xff] %v505
  %510 = vst [vmem:[#allocation2 + $0xf8] sm:$0xff] %v506
  %511 = vrot.lane.b32.xlu0 %v30, 111
  %v512 = vpop.permute.xlu0 %511
  %513 = vrot.lane.b32.xlu0 %v34, 111
  %v514 = vpop.permute.xlu0 %513
  %515 = vrot.lane.b32.xlu0 %v31, 111
  %v516 = vpop.permute.xlu0 %515
  %517 = vrot.lane.b32.xlu0 %v35, 111
  %v518 = vpop.permute.xlu0 %517
  %519 = vrot.lane.b32.xlu0 %v32, 111
  %v520 = vpop.permute.xlu0 %519
  %521 = vrot.lane.b32.xlu0 %v36, 111
  %v522 = vpop.permute.xlu0 %521
  %523 = vrot.lane.b32.xlu0 %v33, 111
  %v524 = vpop.permute.xlu0 %523
  %525 = vrot.lane.b32.xlu0 %v37, 111
  %v526 = vpop.permute.xlu0 %525
  %vm527 = vcmp.lt.s32.totalorder %v71, 111
  %v528 = vsel %vm527, %v520, %v524
  %v529 = vsel %vm527, %v522, %v526
  %v530 = vsel %vm527, %v516, %v520
  %v531 = vsel %vm527, %v518, %v522
  %v532 = vsel %vm527, %v512, %v516
  %v533 = vsel %vm527, %v514, %v518
  %v534 = vsel %vm527, %v524, %v512
  %v535 = vsel %vm527, %v526, %v514
  %s536 = scalar_lea.vmem %s2, 32
  %v537 = vld [vmem:[%s536] ss:$8 sm:$0xf]
  %v539 = vlaneseq
  %v540 = vshrl.u32 %v539, 7
  %v541 = vsub.s32 0, %v540
  %v542 = vrot.slane %v537, %v541
  %v543 = vlaneseq
  %v544 = vshrl.u32 %v543, 7
  %v545 = vsub.s32 1, %v544
  %v546 = vrot.slane %v537, %v545
  %v547 = vlaneseq
  %v548 = vshrl.u32 %v547, 7
  %v549 = vsub.s32 2, %v548
  %v550 = vrot.slane %v537, %v549
  %v551 = vlaneseq
  %v552 = vshrl.u32 %v551, 7
  %v553 = vsub.s32 3, %v552
  %v554 = vrot.slane %v537, %v553
  %v559 = vmul.f32 %v532, %v542
  %v560 = vmul.f32 %v530, %v546
  %v561 = vmul.f32 %v528, %v550
  %v562 = vmul.f32 %v534, %v554
  %v563 = vmul.f32 %v533, %v542
  %v564 = vmul.f32 %v531, %v546
  %v565 = vmul.f32 %v529, %v550
  %v566 = vmul.f32 %v535, %v554
  %v567 = vpack.c.bf16 %v563, %v559
  %v568 = vpack.c.bf16 %v564, %v560
  %v569 = vpack.c.bf16 %v565, %v561
  %v570 = vpack.c.bf16 %v566, %v562
  %571 = vst [vmem:[#allocation2 + $0x100] sm:$0xff] %v567
  %572 = vst [vmem:[#allocation2 + $0x108] sm:$0xff] %v568
  %573 = vst [vmem:[#allocation2 + $0x110] sm:$0xff] %v569
  %574 = vst [vmem:[#allocation2 + $0x118] sm:$0xff] %v570
  %575 = vrot.lane.b32.xlu0 %v38, 17
  %v576 = vpop.permute.xlu0 %575
  %577 = vrot.lane.b32.xlu0 %v42, 17
  %v578 = vpop.permute.xlu0 %577
  %579 = vrot.lane.b32.xlu0 %v46, 17
  %v580 = vpop.permute.xlu0 %579
  %581 = vrot.lane.b32.xlu0 %v50, 17
  %v582 = vpop.permute.xlu0 %581
  %583 = vrot.lane.b32.xlu0 %v39, 17
  %v584 = vpop.permute.xlu0 %583
  %585 = vrot.lane.b32.xlu0 %v43, 17
  %v586 = vpop.permute.xlu0 %585
  %587 = vrot.lane.b32.xlu0 %v47, 17
  %v588 = vpop.permute.xlu0 %587
  %589 = vrot.lane.b32.xlu0 %v51, 17
  %v590 = vpop.permute.xlu0 %589
  %591 = vrot.lane.b32.xlu0 %v40, 17
  %v592 = vpop.permute.xlu0 %591
  %593 = vrot.lane.b32.xlu0 %v44, 17
  %v594 = vpop.permute.xlu0 %593
  %595 = vrot.lane.b32.xlu0 %v48, 17
  %v596 = vpop.permute.xlu0 %595
  %597 = vrot.lane.b32.xlu0 %v52, 17
  %v598 = vpop.permute.xlu0 %597
  %599 = vrot.lane.b32.xlu0 %v41, 17
  %v600 = vpop.permute.xlu0 %599
  %601 = vrot.lane.b32.xlu0 %v45, 17
  %v602 = vpop.permute.xlu0 %601
  %603 = vrot.lane.b32.xlu0 %v49, 17
  %v604 = vpop.permute.xlu0 %603
  %605 = vrot.lane.b32.xlu0 %v53, 17
  %v606 = vpop.permute.xlu0 %605
  %v607 = vsel %vm72, %v592, %v600
  %v608 = vsel %vm72, %v594, %v602
  %v609 = vsel %vm72, %v596, %v604
  %v610 = vsel %vm72, %v598, %v606
  %v611 = vsel %vm72, %v584, %v592
  %v612 = vsel %vm72, %v586, %v594
  %v613 = vsel %vm72, %v588, %v596
  %v614 = vsel %vm72, %v590, %v598
  %v615 = vsel %vm72, %v576, %v584
  %v616 = vsel %vm72, %v578, %v586
  %v617 = vsel %vm72, %v580, %v588
  %v618 = vsel %vm72, %v582, %v590
  %v619 = vsel %vm72, %v600, %v576
  %v620 = vsel %vm72, %v602, %v578
  %v621 = vsel %vm72, %v604, %v580
  %v622 = vsel %vm72, %v606, %v582
  %v623 = vld [vmem:[%s2] ss:$8 sm:$0xf]
  %v625 = vlaneseq
  %v626 = vshrl.u32 %v625, 7
  %v627 = vsub.s32 0, %v626
  %v628 = vrot.slane %v623, %v627
  %v629 = vlaneseq
  %v630 = vshrl.u32 %v629, 7
  %v631 = vsub.s32 1, %v630
  %v632 = vrot.slane %v623, %v631
  %v633 = vlaneseq
  %v634 = vshrl.u32 %v633, 7
  %v635 = vsub.s32 2, %v634
  %v636 = vrot.slane %v623, %v635
  %v637 = vlaneseq
  %v638 = vshrl.u32 %v637, 7
  %v639 = vsub.s32 3, %v638
  %v640 = vrot.slane %v623, %v639
  %v645 = vmul.f32 %v619, %v628
  %v646 = vmul.f32 %v615, %v632
  %v647 = vmul.f32 %v611, %v636
  %v648 = vmul.f32 %v607, %v640
  %v649 = vmul.f32 %v620, %v628
  %v650 = vmul.f32 %v616, %v632
  %v651 = vmul.f32 %v612, %v636
  %v652 = vmul.f32 %v608, %v640
  %v653 = vmul.f32 %v621, %v628
  %v654 = vmul.f32 %v617, %v632
  %v655 = vmul.f32 %v613, %v636
  %v656 = vmul.f32 %v609, %v640
  %v657 = vmul.f32 %v622, %v628
  %v658 = vmul.f32 %v618, %v632
  %v659 = vmul.f32 %v614, %v636
  %v660 = vmul.f32 %v610, %v640
  %v661 = vpack.c.bf16 %v649, %v645
  %v662 = vpack.c.bf16 %v650, %v646
  %v663 = vpack.c.bf16 %v651, %v647
  %v664 = vpack.c.bf16 %v652, %v648
  %v665 = vpack.c.bf16 %v657, %v653
  %v666 = vpack.c.bf16 %v658, %v654
  %v667 = vpack.c.bf16 %v659, %v655
  %v668 = vpack.c.bf16 %v660, %v656
  %669 = vst [vmem:[#allocation3] sm:$0xff] %v661
  %670 = vst [vmem:[#allocation3 + $0x8] sm:$0xff] %v662
  %671 = vst [vmem:[#allocation3 + $0x10] sm:$0xff] %v663
  %672 = vst [vmem:[#allocation3 + $0x18] sm:$0xff] %v664
  %673 = vst [vmem:[#allocation3 + $0x20] sm:$0xff] %v665
  %674 = vst [vmem:[#allocation3 + $0x28] sm:$0xff] %v666
  %675 = vst [vmem:[#allocation3 + $0x30] sm:$0xff] %v667
  %676 = vst [vmem:[#allocation3 + $0x38] sm:$0xff] %v668
  %677 = vrot.lane.b32.xlu0 %v38, 16
  %v678 = vpop.permute.xlu0 %677
  %679 = vrot.lane.b32.xlu0 %v42, 16
  %v680 = vpop.permute.xlu0 %679
  %681 = vrot.lane.b32.xlu0 %v46, 16
  %v682 = vpop.permute.xlu0 %681
  %683 = vrot.lane.b32.xlu0 %v50, 16
  %v684 = vpop.permute.xlu0 %683
  %685 = vrot.lane.b32.xlu0 %v39, 16
  %v686 = vpop.permute.xlu0 %685
  %687 = vrot.lane.b32.xlu0 %v43, 16
  %v688 = vpop.permute.xlu0 %687
  %689 = vrot.lane.b32.xlu0 %v47, 16
  %v690 = vpop.permute.xlu0 %689
  %691 = vrot.lane.b32.xlu0 %v51, 16
  %v692 = vpop.permute.xlu0 %691
  %693 = vrot.lane.b32.xlu0 %v40, 16
  %v694 = vpop.permute.xlu0 %693
  %695 = vrot.lane.b32.xlu0 %v44, 16
  %v696 = vpop.permute.xlu0 %695
  %697 = vrot.lane.b32.xlu0 %v48, 16
  %v698 = vpop.permute.xlu0 %697
  %699 = vrot.lane.b32.xlu0 %v52, 16
  %v700 = vpop.permute.xlu0 %699
  %701 = vrot.lane.b32.xlu0 %v41, 16
  %v702 = vpop.permute.xlu0 %701
  %703 = vrot.lane.b32.xlu0 %v45, 16
  %v704 = vpop.permute.xlu0 %703
  %705 = vrot.lane.b32.xlu0 %v49, 16
  %v706 = vpop.permute.xlu0 %705
  %707 = vrot.lane.b32.xlu0 %v53, 16
  %v708 = vpop.permute.xlu0 %707
  %v709 = vsel %vm135, %v694, %v702
  %v710 = vsel %vm135, %v696, %v704
  %v711 = vsel %vm135, %v698, %v706
  %v712 = vsel %vm135, %v700, %v708
  %v713 = vsel %vm135, %v686, %v694
  %v714 = vsel %vm135, %v688, %v696
  %v715 = vsel %vm135, %v690, %v698
  %v716 = vsel %vm135, %v692, %v700
  %v717 = vsel %vm135, %v678, %v686
  %v718 = vsel %vm135, %v680, %v688
  %v719 = vsel %vm135, %v682, %v690
  %v720 = vsel %vm135, %v684, %v692
  %v721 = vsel %vm135, %v702, %v678
  %v722 = vsel %vm135, %v704, %v680
  %v723 = vsel %vm135, %v706, %v682
  %v724 = vsel %vm135, %v708, %v684
  %v725 = vld [vmem:[%s144] ss:$8 sm:$0xf]
  %v727 = vlaneseq
  %v728 = vshrl.u32 %v727, 7
  %v729 = vsub.s32 0, %v728
  %v730 = vrot.slane %v725, %v729
  %v731 = vlaneseq
  %v732 = vshrl.u32 %v731, 7
  %v733 = vsub.s32 1, %v732
  %v734 = vrot.slane %v725, %v733
  %v735 = vlaneseq
  %v736 = vshrl.u32 %v735, 7
  %v737 = vsub.s32 2, %v736
  %v738 = vrot.slane %v725, %v737
  %v739 = vlaneseq
  %v740 = vshrl.u32 %v739, 7
  %v741 = vsub.s32 3, %v740
  %v742 = vrot.slane %v725, %v741
  %v747 = vmul.f32 %v721, %v730
  %v748 = vmul.f32 %v717, %v734
  %v749 = vmul.f32 %v713, %v738
  %v750 = vmul.f32 %v709, %v742
  %v751 = vmul.f32 %v722, %v730
  %v752 = vmul.f32 %v718, %v734
  %v753 = vmul.f32 %v714, %v738
  %v754 = vmul.f32 %v710, %v742
  %v755 = vmul.f32 %v723, %v730
  %v756 = vmul.f32 %v719, %v734
  %v757 = vmul.f32 %v715, %v738
  %v758 = vmul.f32 %v711, %v742
  %v759 = vmul.f32 %v724, %v730
  %v760 = vmul.f32 %v720, %v734
  %v761 = vmul.f32 %v716, %v738
  %v762 = vmul.f32 %v712, %v742
  %v763 = vpack.c.bf16 %v751, %v747
  %v764 = vpack.c.bf16 %v752, %v748
  %v765 = vpack.c.bf16 %v753, %v749
  %v766 = vpack.c.bf16 %v754, %v750
  %v767 = vpack.c.bf16 %v759, %v755
  %v768 = vpack.c.bf16 %v760, %v756
  %v769 = vpack.c.bf16 %v761, %v757
  %v770 = vpack.c.bf16 %v762, %v758
  %771 = vst [vmem:[#allocation3 + $0x40] sm:$0xff] %v763
  %772 = vst [vmem:[#allocation3 + $0x48] sm:$0xff] %v764
  %773 = vst [vmem:[#allocation3 + $0x50] sm:$0xff] %v765
  %774 = vst [vmem:[#allocation3 + $0x58] sm:$0xff] %v766
  %775 = vst [vmem:[#allocation3 + $0x60] sm:$0xff] %v767
  %776 = vst [vmem:[#allocation3 + $0x68] sm:$0xff] %v768
  %777 = vst [vmem:[#allocation3 + $0x70] sm:$0xff] %v769
  %778 = vst [vmem:[#allocation3 + $0x78] sm:$0xff] %v770
  %779 = vrot.lane.b32.xlu0 %v38, 15
  %v780 = vpop.permute.xlu0 %779
  %781 = vrot.lane.b32.xlu0 %v42, 15
  %v782 = vpop.permute.xlu0 %781
  %783 = vrot.lane.b32.xlu0 %v46, 15
  %v784 = vpop.permute.xlu0 %783
  %785 = vrot.lane.b32.xlu0 %v50, 15
  %v786 = vpop.permute.xlu0 %785
  %787 = vrot.lane.b32.xlu0 %v39, 15
  %v788 = vpop.permute.xlu0 %787
  %789 = vrot.lane.b32.xlu0 %v43, 15
  %v790 = vpop.permute.xlu0 %789
  %791 = vrot.lane.b32.xlu0 %v47, 15
  %v792 = vpop.permute.xlu0 %791
  %793 = vrot.lane.b32.xlu0 %v51, 15
  %v794 = vpop.permute.xlu0 %793
  %795 = vrot.lane.b32.xlu0 %v40, 15
  %v796 = vpop.permute.xlu0 %795
  %797 = vrot.lane.b32.xlu0 %v44, 15
  %v798 = vpop.permute.xlu0 %797
  %799 = vrot.lane.b32.xlu0 %v48, 15
  %v800 = vpop.permute.xlu0 %799
  %801 = vrot.lane.b32.xlu0 %v52, 15
  %v802 = vpop.permute.xlu0 %801
  %803 = vrot.lane.b32.xlu0 %v41, 15
  %v804 = vpop.permute.xlu0 %803
  %805 = vrot.lane.b32.xlu0 %v45, 15
  %v806 = vpop.permute.xlu0 %805
  %807 = vrot.lane.b32.xlu0 %v49, 15
  %v808 = vpop.permute.xlu0 %807
  %809 = vrot.lane.b32.xlu0 %v53, 15
  %v810 = vpop.permute.xlu0 %809
  %v811 = vsel %vm199, %v796, %v804
  %v812 = vsel %vm199, %v798, %v806
  %v813 = vsel %vm199, %v800, %v808
  %v814 = vsel %vm199, %v802, %v810
  %v815 = vsel %vm199, %v788, %v796
  %v816 = vsel %vm199, %v790, %v798
  %v817 = vsel %vm199, %v792, %v800
  %v818 = vsel %vm199, %v794, %v802
  %v819 = vsel %vm199, %v780, %v788
  %v820 = vsel %vm199, %v782, %v790
  %v821 = vsel %vm199, %v784, %v792
  %v822 = vsel %vm199, %v786, %v794
  %v823 = vsel %vm199, %v804, %v780
  %v824 = vsel %vm199, %v806, %v782
  %v825 = vsel %vm199, %v808, %v784
  %v826 = vsel %vm199, %v810, %v786
  %v827 = vld [vmem:[%s208] ss:$8 sm:$0xf]
  %v829 = vlaneseq
  %v830 = vshrl.u32 %v829, 7
  %v831 = vsub.s32 0, %v830
  %v832 = vrot.slane %v827, %v831
  %v833 = vlaneseq
  %v834 = vshrl.u32 %v833, 7
  %v835 = vsub.s32 1, %v834
  %v836 = vrot.slane %v827, %v835
  %v837 = vlaneseq
  %v838 = vshrl.u32 %v837, 7
  %v839 = vsub.s32 2, %v838
  %v840 = vrot.slane %v827, %v839
  %v841 = vlaneseq
  %v842 = vshrl.u32 %v841, 7
  %v843 = vsub.s32 3, %v842
  %v844 = vrot.slane %v827, %v843
  %v849 = vmul.f32 %v823, %v832
  %v850 = vmul.f32 %v819, %v836
  %v851 = vmul.f32 %v815, %v840
  %v852 = vmul.f32 %v811, %v844
  %v853 = vmul.f32 %v824, %v832
  %v854 = vmul.f32 %v820, %v836
  %v855 = vmul.f32 %v816, %v840
  %v856 = vmul.f32 %v812, %v844
  %v857 = vmul.f32 %v825, %v832
  %v858 = vmul.f32 %v821, %v836
  %v859 = vmul.f32 %v817, %v840
  %v860 = vmul.f32 %v813, %v844
  %v861 = vmul.f32 %v826, %v832
  %v862 = vmul.f32 %v822, %v836
  %v863 = vmul.f32 %v818, %v840
  %v864 = vmul.f32 %v814, %v844
  %v865 = vpack.c.bf16 %v853, %v849
  %v866 = vpack.c.bf16 %v854, %v850
  %v867 = vpack.c.bf16 %v855, %v851
  %v868 = vpack.c.bf16 %v856, %v852
  %v869 = vpack.c.bf16 %v861, %v857
  %v870 = vpack.c.bf16 %v862, %v858
  %v871 = vpack.c.bf16 %v863, %v859
  %v872 = vpack.c.bf16 %v864, %v860
  %873 = vst [vmem:[#allocation3 + $0x80] sm:$0xff] %v865
  %874 = vst [vmem:[#allocation3 + $0x88] sm:$0xff] %v866
  %875 = vst [vmem:[#allocation3 + $0x90] sm:$0xff] %v867
  %876 = vst [vmem:[#allocation3 + $0x98] sm:$0xff] %v868
  %877 = vst [vmem:[#allocation3 + $0xa0] sm:$0xff] %v869
  %878 = vst [vmem:[#allocation3 + $0xa8] sm:$0xff] %v870
  %879 = vst [vmem:[#allocation3 + $0xb0] sm:$0xff] %v871
  %880 = vst [vmem:[#allocation3 + $0xb8] sm:$0xff] %v872
  %881 = vrot.lane.b32.xlu0 %v38, 1
  %v882 = vpop.permute.xlu0 %881
  %883 = vrot.lane.b32.xlu0 %v42, 1
  %v884 = vpop.permute.xlu0 %883
  %885 = vrot.lane.b32.xlu0 %v46, 1
  %v886 = vpop.permute.xlu0 %885
  %887 = vrot.lane.b32.xlu0 %v50, 1
  %v888 = vpop.permute.xlu0 %887
  %889 = vrot.lane.b32.xlu0 %v39, 1
  %v890 = vpop.permute.xlu0 %889
  %891 = vrot.lane.b32.xlu0 %v43, 1
  %v892 = vpop.permute.xlu0 %891
  %893 = vrot.lane.b32.xlu0 %v47, 1
  %v894 = vpop.permute.xlu0 %893
  %895 = vrot.lane.b32.xlu0 %v51, 1
  %v896 = vpop.permute.xlu0 %895
  %897 = vrot.lane.b32.xlu0 %v40, 1
  %v898 = vpop.permute.xlu0 %897
  %899 = vrot.lane.b32.xlu0 %v44, 1
  %v900 = vpop.permute.xlu0 %899
  %901 = vrot.lane.b32.xlu0 %v48, 1
  %v902 = vpop.permute.xlu0 %901
  %903 = vrot.lane.b32.xlu0 %v52, 1
  %v904 = vpop.permute.xlu0 %903
  %905 = vrot.lane.b32.xlu0 %v41, 1
  %v906 = vpop.permute.xlu0 %905
  %907 = vrot.lane.b32.xlu0 %v45, 1
  %v908 = vpop.permute.xlu0 %907
  %909 = vrot.lane.b32.xlu0 %v49, 1
  %v910 = vpop.permute.xlu0 %909
  %911 = vrot.lane.b32.xlu0 %v53, 1
  %v912 = vpop.permute.xlu0 %911
  %v913 = vsel %vm263, %v898, %v906
  %v914 = vsel %vm263, %v900, %v908
  %v915 = vsel %vm263, %v902, %v910
  %v916 = vsel %vm263, %v904, %v912
  %v917 = vsel %vm263, %v890, %v898
  %v918 = vsel %vm263, %v892, %v900
  %v919 = vsel %vm263, %v894, %v902
  %v920 = vsel %vm263, %v896, %v904
  %v921 = vsel %vm263, %v882, %v890
  %v922 = vsel %vm263, %v884, %v892
  %v923 = vsel %vm263, %v886, %v894
  %v924 = vsel %vm263, %v888, %v896
  %v925 = vsel %vm263, %v906, %v882
  %v926 = vsel %vm263, %v908, %v884
  %v927 = vsel %vm263, %v910, %v886
  %v928 = vsel %vm263, %v912, %v888
  %v929 = vld [vmem:[%s272] ss:$8 sm:$0xf]
  %v931 = vlaneseq
  %v932 = vshrl.u32 %v931, 7
  %v933 = vsub.s32 0, %v932
  %v934 = vrot.slane %v929, %v933
  %v935 = vlaneseq
  %v936 = vshrl.u32 %v935, 7
  %v937 = vsub.s32 1, %v936
  %v938 = vrot.slane %v929, %v937
  %v939 = vlaneseq
  %v940 = vshrl.u32 %v939, 7
  %v941 = vsub.s32 2, %v940
  %v942 = vrot.slane %v929, %v941
  %v943 = vlaneseq
  %v944 = vshrl.u32 %v943, 7
  %v945 = vsub.s32 3, %v944
  %v946 = vrot.slane %v929, %v945
  %v951 = vmul.f32 %v925, %v934
  %v952 = vmul.f32 %v921, %v938
  %v953 = vmul.f32 %v917, %v942
  %v954 = vmul.f32 %v913, %v946
  %v955 = vmul.f32 %v926, %v934
  %v956 = vmul.f32 %v922, %v938
  %v957 = vmul.f32 %v918, %v942
  %v958 = vmul.f32 %v914, %v946
  %v959 = vmul.f32 %v927, %v934
  %v960 = vmul.f32 %v923, %v938
  %v961 = vmul.f32 %v919, %v942
  %v962 = vmul.f32 %v915, %v946
  %v963 = vmul.f32 %v928, %v934
  %v964 = vmul.f32 %v924, %v938
  %v965 = vmul.f32 %v920, %v942
  %v966 = vmul.f32 %v916, %v946
  %v967 = vpack.c.bf16 %v955, %v951
  %v968 = vpack.c.bf16 %v956, %v952
  %v969 = vpack.c.bf16 %v957, %v953
  %v970 = vpack.c.bf16 %v958, %v954
  %v971 = vpack.c.bf16 %v963, %v959
  %v972 = vpack.c.bf16 %v964, %v960
  %v973 = vpack.c.bf16 %v965, %v961
  %v974 = vpack.c.bf16 %v966, %v962
  %975 = vst [vmem:[#allocation3 + $0xc0] sm:$0xff] %v967
  %976 = vst [vmem:[#allocation3 + $0xc8] sm:$0xff] %v968
  %977 = vst [vmem:[#allocation3 + $0xd0] sm:$0xff] %v969
  %978 = vst [vmem:[#allocation3 + $0xd8] sm:$0xff] %v970
  %979 = vst [vmem:[#allocation3 + $0xe0] sm:$0xff] %v971
  %980 = vst [vmem:[#allocation3 + $0xe8] sm:$0xff] %v972
  %981 = vst [vmem:[#allocation3 + $0xf0] sm:$0xff] %v973
  %982 = vst [vmem:[#allocation3 + $0xf8] sm:$0xff] %v974
  %v983 = vpack.c.bf16 %v42, %v38
  %v984 = vpack.c.bf16 %v43, %v39
  %v985 = vpack.c.bf16 %v44, %v40
  %v986 = vpack.c.bf16 %v45, %v41
  %v987 = vpack.c.bf16 %v50, %v46
  %v988 = vpack.c.bf16 %v51, %v47
  %v989 = vpack.c.bf16 %v52, %v48
  %v990 = vpack.c.bf16 %v53, %v49
  %991 = vst [vmem:[#allocation3 + $0x100] sm:$0xff] %v983
  %992 = vst [vmem:[#allocation3 + $0x108] sm:$0xff] %v984
  %993 = vst [vmem:[#allocation3 + $0x110] sm:$0xff] %v985
  %994 = vst [vmem:[#allocation3 + $0x118] sm:$0xff] %v986
  %995 = vst [vmem:[#allocation3 + $0x120] sm:$0xff] %v987
  %996 = vst [vmem:[#allocation3 + $0x128] sm:$0xff] %v988
  %997 = vst [vmem:[#allocation3 + $0x130] sm:$0xff] %v989
  %998 = vst [vmem:[#allocation3 + $0x138] sm:$0xff] %v990
  %999 = vrot.lane.b32.xlu0 %v38, 127
  %v1000 = vpop.permute.xlu0 %999
  %1001 = vrot.lane.b32.xlu0 %v42, 127
  %v1002 = vpop.permute.xlu0 %1001
  %1003 = vrot.lane.b32.xlu0 %v46, 127
  %v1004 = vpop.permute.xlu0 %1003
  %1005 = vrot.lane.b32.xlu0 %v50, 127
  %v1006 = vpop.permute.xlu0 %1005
  %1007 = vrot.lane.b32.xlu0 %v39, 127
  %v1008 = vpop.permute.xlu0 %1007
  %1009 = vrot.lane.b32.xlu0 %v43, 127
  %v1010 = vpop.permute.xlu0 %1009
  %1011 = vrot.lane.b32.xlu0 %v47, 127
  %v1012 = vpop.permute.xlu0 %1011
  %1013 = vrot.lane.b32.xlu0 %v51, 127
  %v1014 = vpop.permute.xlu0 %1013
  %1015 = vrot.lane.b32.xlu0 %v40, 127
  %v1016 = vpop.permute.xlu0 %1015
  %1017 = vrot.lane.b32.xlu0 %v44, 127
  %v1018 = vpop.permute.xlu0 %1017
  %1019 = vrot.lane.b32.xlu0 %v48, 127
  %v1020 = vpop.permute.xlu0 %1019
  %1021 = vrot.lane.b32.xlu0 %v52, 127
  %v1022 = vpop.permute.xlu0 %1021
  %1023 = vrot.lane.b32.xlu0 %v41, 127
  %v1024 = vpop.permute.xlu0 %1023
  %1025 = vrot.lane.b32.xlu0 %v45, 127
  %v1026 = vpop.permute.xlu0 %1025
  %1027 = vrot.lane.b32.xlu0 %v49, 127
  %v1028 = vpop.permute.xlu0 %1027
  %1029 = vrot.lane.b32.xlu0 %v53, 127
  %v1030 = vpop.permute.xlu0 %1029
  %v1031 = vsel %vm335, %v1016, %v1024
  %v1032 = vsel %vm335, %v1018, %v1026
  %v1033 = vsel %vm335, %v1020, %v1028
  %v1034 = vsel %vm335, %v1022, %v1030
  %v1035 = vsel %vm335, %v1008, %v1016
  %v1036 = vsel %vm335, %v1010, %v1018
  %v1037 = vsel %vm335, %v1012, %v1020
  %v1038 = vsel %vm335, %v1014, %v1022
  %v1039 = vsel %vm335, %v1000, %v1008
  %v1040 = vsel %vm335, %v1002, %v1010
  %v1041 = vsel %vm335, %v1004, %v1012
  %v1042 = vsel %vm335, %v1006, %v1014
  %v1043 = vsel %vm335, %v1024, %v1000
  %v1044 = vsel %vm335, %v1026, %v1002
  %v1045 = vsel %vm335, %v1028, %v1004
  %v1046 = vsel %vm335, %v1030, %v1006
  %v1047 = vld [vmem:[%s344] ss:$8 sm:$0xf]
  %v1049 = vlaneseq
  %v1050 = vshrl.u32 %v1049, 7
  %v1051 = vsub.s32 0, %v1050
  %v1052 = vrot.slane %v1047, %v1051
  %v1053 = vlaneseq
  %v1054 = vshrl.u32 %v1053, 7
  %v1055 = vsub.s32 1, %v1054
  %v1056 = vrot.slane %v1047, %v1055
  %v1057 = vlaneseq
  %v1058 = vshrl.u32 %v1057, 7
  %v1059 = vsub.s32 2, %v1058
  %v1060 = vrot.slane %v1047, %v1059
  %v1061 = vlaneseq
  %v1062 = vshrl.u32 %v1061, 7
  %v1063 = vsub.s32 3, %v1062
  %v1064 = vrot.slane %v1047, %v1063
  %v1069 = vmul.f32 %v1039, %v1052
  %v1070 = vmul.f32 %v1035, %v1056
  %v1071 = vmul.f32 %v1031, %v1060
  %v1072 = vmul.f32 %v1043, %v1064
  %v1073 = vmul.f32 %v1040, %v1052
  %v1074 = vmul.f32 %v1036, %v1056
  %v1075 = vmul.f32 %v1032, %v1060
  %v1076 = vmul.f32 %v1044, %v1064
  %v1077 = vmul.f32 %v1041, %v1052
  %v1078 = vmul.f32 %v1037, %v1056
  %v1079 = vmul.f32 %v1033, %v1060
  %v1080 = vmul.f32 %v1045, %v1064
  %v1081 = vmul.f32 %v1042, %v1052
  %v1082 = vmul.f32 %v1038, %v1056
  %v1083 = vmul.f32 %v1034, %v1060
  %v1084 = vmul.f32 %v1046, %v1064
  %v1085 = vpack.c.bf16 %v1073, %v1069
  %v1086 = vpack.c.bf16 %v1074, %v1070
  %v1087 = vpack.c.bf16 %v1075, %v1071
  %v1088 = vpack.c.bf16 %v1076, %v1072
  %v1089 = vpack.c.bf16 %v1081, %v1077
  %v1090 = vpack.c.bf16 %v1082, %v1078
  %v1091 = vpack.c.bf16 %v1083, %v1079
  %v1092 = vpack.c.bf16 %v1084, %v1080
  %1093 = vst [vmem:[#allocation3 + $0x140] sm:$0xff] %v1085
  %1094 = vst [vmem:[#allocation3 + $0x148] sm:$0xff] %v1086
  %1095 = vst [vmem:[#allocation3 + $0x150] sm:$0xff] %v1087
  %1096 = vst [vmem:[#allocation3 + $0x158] sm:$0xff] %v1088
  %1097 = vst [vmem:[#allocation3 + $0x160] sm:$0xff] %v1089
  %1098 = vst [vmem:[#allocation3 + $0x168] sm:$0xff] %v1090
  %1099 = vst [vmem:[#allocation3 + $0x170] sm:$0xff] %v1091
  %1100 = vst [vmem:[#allocation3 + $0x178] sm:$0xff] %v1092
  %1101 = vrot.lane.b32.xlu0 %v38, 113
  %v1102 = vpop.permute.xlu0 %1101
  %1103 = vrot.lane.b32.xlu0 %v42, 113
  %v1104 = vpop.permute.xlu0 %1103
  %1105 = vrot.lane.b32.xlu0 %v46, 113
  %v1106 = vpop.permute.xlu0 %1105
  %1107 = vrot.lane.b32.xlu0 %v50, 113
  %v1108 = vpop.permute.xlu0 %1107
  %1109 = vrot.lane.b32.xlu0 %v39, 113
  %v1110 = vpop.permute.xlu0 %1109
  %1111 = vrot.lane.b32.xlu0 %v43, 113
  %v1112 = vpop.permute.xlu0 %1111
  %1113 = vrot.lane.b32.xlu0 %v47, 113
  %v1114 = vpop.permute.xlu0 %1113
  %1115 = vrot.lane.b32.xlu0 %v51, 113
  %v1116 = vpop.permute.xlu0 %1115
  %1117 = vrot.lane.b32.xlu0 %v40, 113
  %v1118 = vpop.permute.xlu0 %1117
  %1119 = vrot.lane.b32.xlu0 %v44, 113
  %v1120 = vpop.permute.xlu0 %1119
  %1121 = vrot.lane.b32.xlu0 %v48, 113
  %v1122 = vpop.permute.xlu0 %1121
  %1123 = vrot.lane.b32.xlu0 %v52, 113
  %v1124 = vpop.permute.xlu0 %1123
  %1125 = vrot.lane.b32.xlu0 %v41, 113
  %v1126 = vpop.permute.xlu0 %1125
  %1127 = vrot.lane.b32.xlu0 %v45, 113
  %v1128 = vpop.permute.xlu0 %1127
  %1129 = vrot.lane.b32.xlu0 %v49, 113
  %v1130 = vpop.permute.xlu0 %1129
  %1131 = vrot.lane.b32.xlu0 %v53, 113
  %v1132 = vpop.permute.xlu0 %1131
  %v1133 = vsel %vm399, %v1118, %v1126
  %v1134 = vsel %vm399, %v1120, %v1128
  %v1135 = vsel %vm399, %v1122, %v1130
  %v1136 = vsel %vm399, %v1124, %v1132
  %v1137 = vsel %vm399, %v1110, %v1118
  %v1138 = vsel %vm399, %v1112, %v1120
  %v1139 = vsel %vm399, %v1114, %v1122
  %v1140 = vsel %vm399, %v1116, %v1124
  %v1141 = vsel %vm399, %v1102, %v1110
  %v1142 = vsel %vm399, %v1104, %v1112
  %v1143 = vsel %vm399, %v1106, %v1114
  %v1144 = vsel %vm399, %v1108, %v1116
  %v1145 = vsel %vm399, %v1126, %v1102
  %v1146 = vsel %vm399, %v1128, %v1104
  %v1147 = vsel %vm399, %v1130, %v1106
  %v1148 = vsel %vm399, %v1132, %v1108
  %v1149 = vld [vmem:[%s408] ss:$8 sm:$0xf]
  %v1151 = vlaneseq
  %v1152 = vshrl.u32 %v1151, 7
  %v1153 = vsub.s32 0, %v1152
  %v1154 = vrot.slane %v1149, %v1153
  %v1155 = vlaneseq
  %v1156 = vshrl.u32 %v1155, 7
  %v1157 = vsub.s32 1, %v1156
  %v1158 = vrot.slane %v1149, %v1157
  %v1159 = vlaneseq
  %v1160 = vshrl.u32 %v1159, 7
  %v1161 = vsub.s32 2, %v1160
  %v1162 = vrot.slane %v1149, %v1161
  %v1163 = vlaneseq
  %v1164 = vshrl.u32 %v1163, 7
  %v1165 = vsub.s32 3, %v1164
  %v1166 = vrot.slane %v1149, %v1165
  %v1171 = vmul.f32 %v1141, %v1154
  %v1172 = vmul.f32 %v1137, %v1158
  %v1173 = vmul.f32 %v1133, %v1162
  %v1174 = vmul.f32 %v1145, %v1166
  %v1175 = vmul.f32 %v1142, %v1154
  %v1176 = vmul.f32 %v1138, %v1158
  %v1177 = vmul.f32 %v1134, %v1162
  %v1178 = vmul.f32 %v1146, %v1166
  %v1179 = vmul.f32 %v1143, %v1154
  %v1180 = vmul.f32 %v1139, %v1158
  %v1181 = vmul.f32 %v1135, %v1162
  %v1182 = vmul.f32 %v1147, %v1166
  %v1183 = vmul.f32 %v1144, %v1154
  %v1184 = vmul.f32 %v1140, %v1158
  %v1185 = vmul.f32 %v1136, %v1162
  %v1186 = vmul.f32 %v1148, %v1166
  %v1187 = vpack.c.bf16 %v1175, %v1171
  %v1188 = vpack.c.bf16 %v1176, %v1172
  %v1189 = vpack.c.bf16 %v1177, %v1173
  %v1190 = vpack.c.bf16 %v1178, %v1174
  %v1191 = vpack.c.bf16 %v1183, %v1179
  %v1192 = vpack.c.bf16 %v1184, %v1180
  %v1193 = vpack.c.bf16 %v1185, %v1181
  %v1194 = vpack.c.bf16 %v1186, %v1182
  %1195 = vst [vmem:[#allocation3 + $0x180] sm:$0xff] %v1187
  %1196 = vst [vmem:[#allocation3 + $0x188] sm:$0xff] %v1188
  %1197 = vst [vmem:[#allocation3 + $0x190] sm:$0xff] %v1189
  %1198 = vst [vmem:[#allocation3 + $0x198] sm:$0xff] %v1190
  %1199 = vst [vmem:[#allocation3 + $0x1a0] sm:$0xff] %v1191
  %1200 = vst [vmem:[#allocation3 + $0x1a8] sm:$0xff] %v1192
  %1201 = vst [vmem:[#allocation3 + $0x1b0] sm:$0xff] %v1193
  %1202 = vst [vmem:[#allocation3 + $0x1b8] sm:$0xff] %v1194
  %1203 = vrot.lane.b32.xlu0 %v38, 112
  %v1204 = vpop.permute.xlu0 %1203
  %1205 = vrot.lane.b32.xlu0 %v42, 112
  %v1206 = vpop.permute.xlu0 %1205
  %1207 = vrot.lane.b32.xlu0 %v46, 112
  %v1208 = vpop.permute.xlu0 %1207
  %1209 = vrot.lane.b32.xlu0 %v50, 112
  %v1210 = vpop.permute.xlu0 %1209
  %1211 = vrot.lane.b32.xlu0 %v39, 112
  %v1212 = vpop.permute.xlu0 %1211
  %1213 = vrot.lane.b32.xlu0 %v43, 112
  %v1214 = vpop.permute.xlu0 %1213
  %1215 = vrot.lane.b32.xlu0 %v47, 112
  %v1216 = vpop.permute.xlu0 %1215
  %1217 = vrot.lane.b32.xlu0 %v51, 112
  %v1218 = vpop.permute.xlu0 %1217
  %1219 = vrot.lane.b32.xlu0 %v40, 112
  %v1220 = vpop.permute.xlu0 %1219
  %1221 = vrot.lane.b32.xlu0 %v44, 112
  %v1222 = vpop.permute.xlu0 %1221
  %1223 = vrot.lane.b32.xlu0 %v48, 112
  %v1224 = vpop.permute.xlu0 %1223
  %1225 = vrot.lane.b32.xlu0 %v52, 112
  %v1226 = vpop.permute.xlu0 %1225
  %1227 = vrot.lane.b32.xlu0 %v41, 112
  %v1228 = vpop.permute.xlu0 %1227
  %1229 = vrot.lane.b32.xlu0 %v45, 112
  %v1230 = vpop.permute.xlu0 %1229
  %1231 = vrot.lane.b32.xlu0 %v49, 112
  %v1232 = vpop.permute.xlu0 %1231
  %1233 = vrot.lane.b32.xlu0 %v53, 112
  %v1234 = vpop.permute.xlu0 %1233
  %v1235 = vsel %vm463, %v1220, %v1228
  %v1236 = vsel %vm463, %v1222, %v1230
  %v1237 = vsel %vm463, %v1224, %v1232
  %v1238 = vsel %vm463, %v1226, %v1234
  %v1239 = vsel %vm463, %v1212, %v1220
  %v1240 = vsel %vm463, %v1214, %v1222
  %v1241 = vsel %vm463, %v1216, %v1224
  %v1242 = vsel %vm463, %v1218, %v1226
  %v1243 = vsel %vm463, %v1204, %v1212
  %v1244 = vsel %vm463, %v1206, %v1214
  %v1245 = vsel %vm463, %v1208, %v1216
  %v1246 = vsel %vm463, %v1210, %v1218
  %v1247 = vsel %vm463, %v1228, %v1204
  %v1248 = vsel %vm463, %v1230, %v1206
  %v1249 = vsel %vm463, %v1232, %v1208
  %v1250 = vsel %vm463, %v1234, %v1210
  %v1251 = vld [vmem:[%s472] ss:$8 sm:$0xf]
  %v1253 = vlaneseq
  %v1254 = vshrl.u32 %v1253, 7
  %v1255 = vsub.s32 0, %v1254
  %v1256 = vrot.slane %v1251, %v1255
  %v1257 = vlaneseq
  %v1258 = vshrl.u32 %v1257, 7
  %v1259 = vsub.s32 1, %v1258
  %v1260 = vrot.slane %v1251, %v1259
  %v1261 = vlaneseq
  %v1262 = vshrl.u32 %v1261, 7
  %v1263 = vsub.s32 2, %v1262
  %v1264 = vrot.slane %v1251, %v1263
  %v1265 = vlaneseq
  %v1266 = vshrl.u32 %v1265, 7
  %v1267 = vsub.s32 3, %v1266
  %v1268 = vrot.slane %v1251, %v1267
  %v1273 = vmul.f32 %v1243, %v1256
  %v1274 = vmul.f32 %v1239, %v1260
  %v1275 = vmul.f32 %v1235, %v1264
  %v1276 = vmul.f32 %v1247, %v1268
  %v1277 = vmul.f32 %v1244, %v1256
  %v1278 = vmul.f32 %v1240, %v1260
  %v1279 = vmul.f32 %v1236, %v1264
  %v1280 = vmul.f32 %v1248, %v1268
  %v1281 = vmul.f32 %v1245, %v1256
  %v1282 = vmul.f32 %v1241, %v1260
  %v1283 = vmul.f32 %v1237, %v1264
  %v1284 = vmul.f32 %v1249, %v1268
  %v1285 = vmul.f32 %v1246, %v1256
  %v1286 = vmul.f32 %v1242, %v1260
  %v1287 = vmul.f32 %v1238, %v1264
  %v1288 = vmul.f32 %v1250, %v1268
  %v1289 = vpack.c.bf16 %v1277, %v1273
  %v1290 = vpack.c.bf16 %v1278, %v1274
  %v1291 = vpack.c.bf16 %v1279, %v1275
  %v1292 = vpack.c.bf16 %v1280, %v1276
  %v1293 = vpack.c.bf16 %v1285, %v1281
  %v1294 = vpack.c.bf16 %v1286, %v1282
  %v1295 = vpack.c.bf16 %v1287, %v1283
  %v1296 = vpack.c.bf16 %v1288, %v1284
  %1297 = vst [vmem:[#allocation3 + $0x1c0] sm:$0xff] %v1289
  %1298 = vst [vmem:[#allocation3 + $0x1c8] sm:$0xff] %v1290
  %1299 = vst [vmem:[#allocation3 + $0x1d0] sm:$0xff] %v1291
  %1300 = vst [vmem:[#allocation3 + $0x1d8] sm:$0xff] %v1292
  %1301 = vst [vmem:[#allocation3 + $0x1e0] sm:$0xff] %v1293
  %1302 = vst [vmem:[#allocation3 + $0x1e8] sm:$0xff] %v1294
  %1303 = vst [vmem:[#allocation3 + $0x1f0] sm:$0xff] %v1295
  %1304 = vst [vmem:[#allocation3 + $0x1f8] sm:$0xff] %v1296
  %1305 = vrot.lane.b32.xlu0 %v38, 111
  %v1306 = vpop.permute.xlu0 %1305
  %1307 = vrot.lane.b32.xlu0 %v42, 111
  %v1308 = vpop.permute.xlu0 %1307
  %1309 = vrot.lane.b32.xlu0 %v46, 111
  %v1310 = vpop.permute.xlu0 %1309
  %1311 = vrot.lane.b32.xlu0 %v50, 111
  %v1312 = vpop.permute.xlu0 %1311
  %1313 = vrot.lane.b32.xlu0 %v39, 111
  %v1314 = vpop.permute.xlu0 %1313
  %1315 = vrot.lane.b32.xlu0 %v43, 111
  %v1316 = vpop.permute.xlu0 %1315
  %1317 = vrot.lane.b32.xlu0 %v47, 111
  %v1318 = vpop.permute.xlu0 %1317
  %1319 = vrot.lane.b32.xlu0 %v51, 111
  %v1320 = vpop.permute.xlu0 %1319
  %1321 = vrot.lane.b32.xlu0 %v40, 111
  %v1322 = vpop.permute.xlu0 %1321
  %1323 = vrot.lane.b32.xlu0 %v44, 111
  %v1324 = vpop.permute.xlu0 %1323
  %1325 = vrot.lane.b32.xlu0 %v48, 111
  %v1326 = vpop.permute.xlu0 %1325
  %1327 = vrot.lane.b32.xlu0 %v52, 111
  %v1328 = vpop.permute.xlu0 %1327
  %1329 = vrot.lane.b32.xlu0 %v41, 111
  %v1330 = vpop.permute.xlu0 %1329
  %1331 = vrot.lane.b32.xlu0 %v45, 111
  %v1332 = vpop.permute.xlu0 %1331
  %1333 = vrot.lane.b32.xlu0 %v49, 111
  %v1334 = vpop.permute.xlu0 %1333
  %1335 = vrot.lane.b32.xlu0 %v53, 111
  %v1336 = vpop.permute.xlu0 %1335
  %v1337 = vsel %vm527, %v1322, %v1330
  %v1338 = vsel %vm527, %v1324, %v1332
  %v1339 = vsel %vm527, %v1326, %v1334
  %v1340 = vsel %vm527, %v1328, %v1336
  %v1341 = vsel %vm527, %v1314, %v1322
  %v1342 = vsel %vm527, %v1316, %v1324
  %v1343 = vsel %vm527, %v1318, %v1326
  %v1344 = vsel %vm527, %v1320, %v1328
  %v1345 = vsel %vm527, %v1306, %v1314
  %v1346 = vsel %vm527, %v1308, %v1316
  %v1347 = vsel %vm527, %v1310, %v1318
  %v1348 = vsel %vm527, %v1312, %v1320
  %v1349 = vsel %vm527, %v1330, %v1306
  %v1350 = vsel %vm527, %v1332, %v1308
  %v1351 = vsel %vm527, %v1334, %v1310
  %v1352 = vsel %vm527, %v1336, %v1312
  %v1353 = vld [vmem:[%s536] ss:$8 sm:$0xf]
  %v1355 = vlaneseq
  %v1356 = vshrl.u32 %v1355, 7
  %v1357 = vsub.s32 0, %v1356
  %v1358 = vrot.slane %v1353, %v1357
  %v1359 = vlaneseq
  %v1360 = vshrl.u32 %v1359, 7
  %v1361 = vsub.s32 1, %v1360
  %v1362 = vrot.slane %v1353, %v1361
  %v1363 = vlaneseq
  %v1364 = vshrl.u32 %v1363, 7
  %v1365 = vsub.s32 2, %v1364
  %v1366 = vrot.slane %v1353, %v1365
  %v1367 = vlaneseq
  %v1368 = vshrl.u32 %v1367, 7
  %v1369 = vsub.s32 3, %v1368
  %v1370 = vrot.slane %v1353, %v1369
  %v1375 = vmul.f32 %v1345, %v1358
  %v1376 = vmul.f32 %v1341, %v1362
  %v1377 = vmul.f32 %v1337, %v1366
  %v1378 = vmul.f32 %v1349, %v1370
  %v1379 = vmul.f32 %v1346, %v1358
  %v1380 = vmul.f32 %v1342, %v1362
  %v1381 = vmul.f32 %v1338, %v1366
  %v1382 = vmul.f32 %v1350, %v1370
  %v1383 = vmul.f32 %v1347, %v1358
  %v1384 = vmul.f32 %v1343, %v1362
  %v1385 = vmul.f32 %v1339, %v1366
  %v1386 = vmul.f32 %v1351, %v1370
  %v1387 = vmul.f32 %v1348, %v1358
  %v1388 = vmul.f32 %v1344, %v1362
  %v1389 = vmul.f32 %v1340, %v1366
  %v1390 = vmul.f32 %v1352, %v1370
  %v1391 = vpack.c.bf16 %v1379, %v1375
  %v1392 = vpack.c.bf16 %v1380, %v1376
  %v1393 = vpack.c.bf16 %v1381, %v1377
  %v1394 = vpack.c.bf16 %v1382, %v1378
  %v1395 = vpack.c.bf16 %v1387, %v1383
  %v1396 = vpack.c.bf16 %v1388, %v1384
  %v1397 = vpack.c.bf16 %v1389, %v1385
  %v1398 = vpack.c.bf16 %v1390, %v1386
  %1399 = vst [vmem:[#allocation3 + $0x200] sm:$0xff] %v1391
  %1400 = vst [vmem:[#allocation3 + $0x208] sm:$0xff] %v1392
  %1401 = vst [vmem:[#allocation3 + $0x210] sm:$0xff] %v1393
  %1402 = vst [vmem:[#allocation3 + $0x218] sm:$0xff] %v1394
  %1403 = vst [vmem:[#allocation3 + $0x220] sm:$0xff] %v1395
  %1404 = vst [vmem:[#allocation3 + $0x228] sm:$0xff] %v1396
  %1405 = vst [vmem:[#allocation3 + $0x230] sm:$0xff] %v1397
  %1406 = vst [vmem:[#allocation3 + $0x238] sm:$0xff] %v1398
  %v1407 = vld [vmem:[%s3] sm:$0xff]
  %v1408 = vld [vmem:[%s3 + $0x8] sm:$0xff]
  %v1409 = vld [vmem:[%s3 + $0x10] sm:$0xff]
  %v1410 = vld [vmem:[%s3 + $0x18] sm:$0xff]
  %v1411 = vld [vmem:[%s3 + $0x20] sm:$0xff]
  %v1412 = vld [vmem:[%s3 + $0x28] sm:$0xff]
  %v1413 = vld [vmem:[%s3 + $0x30] sm:$0xff]
  %v1414 = vld [vmem:[%s3 + $0x38] sm:$0xff]
  %v1415 = vld [vmem:[%s3 + $0x40] sm:$0xff]
  %v1416 = vld [vmem:[%s3 + $0x48] sm:$0xff]
  %v1417 = vld [vmem:[%s3 + $0x50] sm:$0xff]
  %v1418 = vld [vmem:[%s3 + $0x58] sm:$0xff]
  %v1419 = vld [vmem:[#allocation2] sm:$0xff]
  %v1420 = vld [vmem:[#allocation2 + $0x8] sm:$0xff]
  %v1421 = vld [vmem:[#allocation2 + $0x10] sm:$0xff]
  %v1422 = vld [vmem:[#allocation2 + $0x18] sm:$0xff]
  %v1423 = vld [vmem:[#allocation2 + $0x20] sm:$0xff]
  %v1424 = vld [vmem:[#allocation2 + $0x28] sm:$0xff]
  %v1425 = vld [vmem:[#allocation2 + $0x30] sm:$0xff]
  %v1426 = vld [vmem:[#allocation2 + $0x38] sm:$0xff]
  %v1427 = vld [vmem:[#allocation2 + $0x40] sm:$0xff]
  %v1428 = vld [vmem:[#allocation2 + $0x48] sm:$0xff]
  %v1429 = vld [vmem:[#allocation2 + $0x50] sm:$0xff]
  %v1430 = vld [vmem:[#allocation2 + $0x58] sm:$0xff]
  %v1431 = vld [vmem:[#allocation2 + $0x60] sm:$0xff]
  %v1432 = vld [vmem:[#allocation2 + $0x68] sm:$0xff]
  %v1433 = vld [vmem:[#allocation2 + $0x70] sm:$0xff]
  %v1434 = vld [vmem:[#allocation2 + $0x78] sm:$0xff]
  %v1435 = vld [vmem:[#allocation2 + $0x80] sm:$0xff]
  %v1436 = vld [vmem:[#allocation2 + $0x88] sm:$0xff]
  %v1437 = vld [vmem:[#allocation2 + $0x90] sm:$0xff]
  %v1438 = vld [vmem:[#allocation2 + $0x98] sm:$0xff]
  %v1439 = vld [vmem:[#allocation2 + $0xa0] sm:$0xff]
  %v1440 = vld [vmem:[#allocation2 + $0xa8] sm:$0xff]
  %v1441 = vld [vmem:[#allocation2 + $0xb0] sm:$0xff]
  %v1442 = vld [vmem:[#allocation2 + $0xb8] sm:$0xff]
  %v1443 = vld [vmem:[#allocation2 + $0xc0] sm:$0xff]
  %v1444 = vld [vmem:[#allocation2 + $0xc8] sm:$0xff]
  %v1445 = vld [vmem:[#allocation2 + $0xd0] sm:$0xff]
  %v1446 = vld [vmem:[#allocation2 + $0xd8] sm:$0xff]
  %v1447 = vld [vmem:[#allocation2 + $0xe0] sm:$0xff]
  %v1448 = vld [vmem:[#allocation2 + $0xe8] sm:$0xff]
  %v1449 = vld [vmem:[#allocation2 + $0xf0] sm:$0xff]
  %v1450 = vld [vmem:[#allocation2 + $0xf8] sm:$0xff]
  %v1451 = vld [vmem:[#allocation2 + $0x100] sm:$0xff]
  %v1452 = vld [vmem:[#allocation2 + $0x108] sm:$0xff]
  %v1453 = vld [vmem:[#allocation2 + $0x110] sm:$0xff]
  %v1454 = vld [vmem:[#allocation2 + $0x118] sm:$0xff]
  %v1467 = vunpack.c.l.b16 %v1407
  %v1468 = vunpack.c.h.b16 %v1407
  %v1469 = vunpack.c.l.b16 %v1408
  %v1470 = vunpack.c.h.b16 %v1408
  %v1471 = vunpack.c.l.b16 %v1409
  %v1472 = vunpack.c.h.b16 %v1409
  %v1473 = vunpack.c.l.b16 %v1410
  %v1474 = vunpack.c.h.b16 %v1410
  %v1475 = vunpack.c.l.b16 %v1411
  %v1476 = vunpack.c.h.b16 %v1411
  %v1477 = vunpack.c.l.b16 %v1412
  %v1478 = vunpack.c.h.b16 %v1412
  %v1479 = vunpack.c.l.b16 %v1413
  %v1480 = vunpack.c.h.b16 %v1413
  %v1481 = vunpack.c.l.b16 %v1414
  %v1482 = vunpack.c.h.b16 %v1414
  %v1483 = vunpack.c.l.b16 %v1415
  %v1484 = vunpack.c.h.b16 %v1415
  %v1485 = vunpack.c.l.b16 %v1416
  %v1486 = vunpack.c.h.b16 %v1416
  %v1487 = vunpack.c.l.b16 %v1417
  %v1488 = vunpack.c.h.b16 %v1417
  %v1489 = vunpack.c.l.b16 %v1418
  %v1490 = vunpack.c.h.b16 %v1418
  %v1491 = vpack.c.b16 %v1469, %v1467
  %v1492 = vpack.c.b16 %v1470, %v1468
  %v1493 = vpack.c.b16 %v1473, %v1471
  %v1494 = vpack.c.b16 %v1474, %v1472
  %v1495 = vpack.c.b16 %v1477, %v1475
  %v1496 = vpack.c.b16 %v1478, %v1476
  %v1497 = vpack.c.b16 %v1481, %v1479
  %v1498 = vpack.c.b16 %v1482, %v1480
  %v1499 = vpack.c.b16 %v1485, %v1483
  %v1500 = vpack.c.b16 %v1486, %v1484
  %v1501 = vpack.c.b16 %v1489, %v1487
  %v1502 = vpack.c.b16 %v1490, %v1488
  %vm1509 = vcmask 130048
  %v1511 = vsel %vm1509, %v1492, 0
  %v1514 = vsel %vm1509, %v1494, 0
  %v1517 = vsel %vm1509, %v1496, 0
  %v1520 = vsel %vm1509, %v1498, 0
  %v1523 = vsel %vm1509, %v1500, 0
  %v1526 = vsel %vm1509, %v1502, 0
  %1528 = vmatprep.subr.bf16.mxu0 %v1420
  %1529 = vmatpush1.bf16.msra.mxu0 %v1419
  %1530 = vmatprep.subr.bf16.mxu0 %v1424
  %1531 = vmatpush1.bf16.msra.mxu0 %v1423
  %1532 = vmatprep.subr.bf16.mxu0 %v1428
  %1533 = vmatpush1.bf16.msra.mxu0 %v1427
  %1534 = vmatprep.subr.bf16.mxu0 %v1432
  %1535 = vmatpush1.bf16.msra.mxu0 %v1431
  %1536 = vmatprep.subr.bf16.mxu0 %v1436
  %1537 = vmatpush1.bf16.msra.mxu0 %v1435
  %1538 = vmatprep.subr.bf16.mxu0 %v1440
  %1539 = vmatpush1.bf16.msra.mxu0 %v1439
  %1540 = vmatprep.subr.bf16.mxu0 %v1444
  %1541 = vmatpush1.bf16.msra.mxu0 %v1443
  %1542 = vmatprep.subr.bf16.mxu0 %v1448
  %1543 = vmatpush1.bf16.msra.mxu0 %v1447
  %1544 = vmatprep.subr.bf16.mxu0 %v1452
  %1545 = vmatpush1.bf16.msra.mxu0 %v1451
  %1546 = vmatprep.subr.bf16.mxu0 0
  %1547 = vmatpush1.bf16.msra.mxu0 0
  %1548 = vmatprep.subr.bf16.mxu0 0
  %1549 = vmatpush1.bf16.msra.mxu0 0
  %1550 = vmatprep.subr.bf16.mxu0 0
  %1551 = vmatpush1.bf16.msra.mxu0 0
  %1552 = vmatprep.subr.bf16.mxu0 0
  %1553 = vmatpush1.bf16.msra.mxu0 0
  %1554 = vmatprep.subr.bf16.mxu0 0
  %1555 = vmatpush1.bf16.msra.mxu0 0
  %1556 = vmatprep.subr.bf16.mxu0 0
  %1557 = vmatpush1.bf16.msra.mxu0 0
  %1558 = vmatprep.subr.bf16.mxu0 0
  %1559 = vmatpush1.bf16.msra.mxu0 0
  %1560 = vmatprep.mubr.bf16.mxu0 %v1511
  %1561 = vmatmul.mubr.bf16.gmra.mrb[0].mxu0 %v1491
  %v1562 = vpop.f32.mrb[0].mxu0
  %v1563 = vadd.f32 0.0, %v1562
  %v1564 = vpop.f32.mrb[0].mxu0
  %v1565 = vadd.f32 0.0, %v1564
  %v1566 = vpop.f32.mrb[0].mxu0
  %v1567 = vadd.f32 0.0, %v1566
  %v1568 = vpop.f32.mrb[0].mxu0
  %v1569 = vadd.f32 0.0, %v1568
  %1570 = vmatprep.mubr.bf16.mxu0 %v1514
  %1571 = vmatmul.mubr.bf16.gmra.mrb[0].mxu0 %v1493
  %v1572 = vpop.f32.mrb[0].mxu0
  %v1573 = vadd.f32 0.0, %v1572
  %v1574 = vpop.f32.mrb[0].mxu0
  %v1575 = vadd.f32 0.0, %v1574
  %v1576 = vpop.f32.mrb[0].mxu0
  %v1577 = vadd.f32 0.0, %v1576
  %v1578 = vpop.f32.mrb[0].mxu0
  %v1579 = vadd.f32 0.0, %v1578
  %1580 = vmatprep.mubr.bf16.mxu0 %v1517
  %1581 = vmatmul.mubr.bf16.gmra.mrb[0].mxu0 %v1495
  %v1582 = vpop.f32.mrb[0].mxu0
  %v1583 = vadd.f32 0.0, %v1582
  %v1584 = vpop.f32.mrb[0].mxu0
  %v1585 = vadd.f32 0.0, %v1584
  %v1586 = vpop.f32.mrb[0].mxu0
  %v1587 = vadd.f32 0.0, %v1586
  %v1588 = vpop.f32.mrb[0].mxu0
  %v1589 = vadd.f32 0.0, %v1588
  %1590 = vmatprep.mubr.bf16.mxu0 %v1520
  %1591 = vmatmul.mubr.bf16.gmra.mrb[0].mxu0 %v1497
  %v1592 = vpop.f32.mrb[0].mxu0
  %v1593 = vadd.f32 0.0, %v1592
  %v1594 = vpop.f32.mrb[0].mxu0
  %v1595 = vadd.f32 0.0, %v1594
  %v1596 = vpop.f32.mrb[0].mxu0
  %v1597 = vadd.f32 0.0, %v1596
  %v1598 = vpop.f32.mrb[0].mxu0
  %v1599 = vadd.f32 0.0, %v1598
  %1600 = vmatprep.mubr.bf16.mxu0 %v1523
  %1601 = vmatmul.mubr.bf16.gmra.mrb[0].mxu0 %v1499
  %v1602 = vpop.f32.mrb[0].mxu0
  %v1603 = vadd.f32 0.0, %v1602
  %v1604 = vpop.f32.mrb[0].mxu0
  %v1605 = vadd.f32 0.0, %v1604
  %v1606 = vpop.f32.mrb[0].mxu0
  %v1607 = vadd.f32 0.0, %v1606
  %v1608 = vpop.f32.mrb[0].mxu0
  %v1609 = vadd.f32 0.0, %v1608
  %1610 = vmatprep.mubr.bf16.mxu0 %v1526
  %1611 = vmatmul.mubr.bf16.gmra.mrb[0].mxu0 %v1501
  %v1612 = vpop.f32.mrb[0].mxu0
  %v1613 = vadd.f32 0.0, %v1612
  %v1614 = vpop.f32.mrb[0].mxu0
  %v1615 = vadd.f32 0.0, %v1614
  %v1616 = vpop.f32.mrb[0].mxu0
  %v1617 = vadd.f32 0.0, %v1616
  %v1618 = vpop.f32.mrb[0].mxu0
  %v1619 = vadd.f32 0.0, %v1618
  %1620 = vdwg.mxu0
  %1621 = vmatprep.subr.bf16.mxu0 %v1422
  %1622 = vmatpush1.bf16.msra.mxu0 %v1421
  %1623 = vmatprep.subr.bf16.mxu0 %v1426
  %1624 = vmatpush1.bf16.msra.mxu0 %v1425
  %1625 = vmatprep.subr.bf16.mxu0 %v1430
  %1626 = vmatpush1.bf16.msra.mxu0 %v1429
  %1627 = vmatprep.subr.bf16.mxu0 %v1434
  %1628 = vmatpush1.bf16.msra.mxu0 %v1433
  %1629 = vmatprep.subr.bf16.mxu0 %v1438
  %1630 = vmatpush1.bf16.msra.mxu0 %v1437
  %1631 = vmatprep.subr.bf16.mxu0 %v1442
  %1632 = vmatpush1.bf16.msra.mxu0 %v1441
  %1633 = vmatprep.subr.bf16.mxu0 %v1446
  %1634 = vmatpush1.bf16.msra.mxu0 %v1445
  %1635 = vmatprep.subr.bf16.mxu0 %v1450
  %1636 = vmatpush1.bf16.msra.mxu0 %v1449
  %1637 = vmatprep.subr.bf16.mxu0 %v1454
  %1638 = vmatpush1.bf16.msra.mxu0 %v1453
  %1639 = vmatprep.subr.bf16.mxu0 0
  %1640 = vmatpush1.bf16.msra.mxu0 0
  %1641 = vmatprep.subr.bf16.mxu0 0
  %1642 = vmatpush1.bf16.msra.mxu0 0
  %1643 = vmatprep.subr.bf16.mxu0 0
  %1644 = vmatpush1.bf16.msra.mxu0 0
  %1645 = vmatprep.subr.bf16.mxu0 0
  %1646 = vmatpush1.bf16.msra.mxu0 0
  %1647 = vmatprep.subr.bf16.mxu0 0
  %1648 = vmatpush1.bf16.msra.mxu0 0
  %1649 = vmatprep.subr.bf16.mxu0 0
  %1650 = vmatpush1.bf16.msra.mxu0 0
  %1651 = vmatprep.subr.bf16.mxu0 0
  %1652 = vmatpush1.bf16.msra.mxu0 0
  %1653 = vmatprep.mubr.bf16.mxu0 %v1511
  %1654 = vmatmul.mubr.bf16.gmra.mrb[0].mxu0 %v1491
  %v1655 = vpop.f32.mrb[0].mxu0
  %v1656 = vadd.f32 0.0, %v1655
  %v1657 = vpop.f32.mrb[0].mxu0
  %v1658 = vadd.f32 0.0, %v1657
  %v1659 = vpop.f32.mrb[0].mxu0
  %v1660 = vadd.f32 0.0, %v1659
  %v1661 = vpop.f32.mrb[0].mxu0
  %v1662 = vadd.f32 0.0, %v1661
  %1663 = vmatprep.mubr.bf16.mxu0 %v1514
  %1664 = vmatmul.mubr.bf16.gmra.mrb[0].mxu0 %v1493
  %v1665 = vpop.f32.mrb[0].mxu0
  %v1666 = vadd.f32 0.0, %v1665
  %v1667 = vpop.f32.mrb[0].mxu0
  %v1668 = vadd.f32 0.0, %v1667
  %v1669 = vpop.f32.mrb[0].mxu0
  %v1670 = vadd.f32 0.0, %v1669
  %v1671 = vpop.f32.mrb[0].mxu0
  %v1672 = vadd.f32 0.0, %v1671
  %1673 = vmatprep.mubr.bf16.mxu0 %v1517
  %1674 = vmatmul.mubr.bf16.gmra.mrb[0].mxu0 %v1495
  %v1675 = vpop.f32.mrb[0].mxu0
  %v1676 = vadd.f32 0.0, %v1675
  %v1677 = vpop.f32.mrb[0].mxu0
  %v1678 = vadd.f32 0.0, %v1677
  %v1679 = vpop.f32.mrb[0].mxu0
  %v1680 = vadd.f32 0.0, %v1679
  %v1681 = vpop.f32.mrb[0].mxu0
  %v1682 = vadd.f32 0.0, %v1681
  %1683 = vmatprep.mubr.bf16.mxu0 %v1520
  %1684 = vmatmul.mubr.bf16.gmra.mrb[0].mxu0 %v1497
  %v1685 = vpop.f32.mrb[0].mxu0
  %v1686 = vadd.f32 0.0, %v1685
  %v1687 = vpop.f32.mrb[0].mxu0
  %v1688 = vadd.f32 0.0, %v1687
  %v1689 = vpop.f32.mrb[0].mxu0
  %v1690 = vadd.f32 0.0, %v1689
  %v1691 = vpop.f32.mrb[0].mxu0
  %v1692 = vadd.f32 0.0, %v1691
  %1693 = vmatprep.mubr.bf16.mxu0 %v1523
  %1694 = vmatmul.mubr.bf16.gmra.mrb[0].mxu0 %v1499
  %v1695 = vpop.f32.mrb[0].mxu0
  %v1696 = vadd.f32 0.0, %v1695
  %v1697 = vpop.f32.mrb[0].mxu0
  %v1698 = vadd.f32 0.0, %v1697
  %v1699 = vpop.f32.mrb[0].mxu0
  %v1700 = vadd.f32 0.0, %v1699
  %v1701 = vpop.f32.mrb[0].mxu0
  %v1702 = vadd.f32 0.0, %v1701
  %1703 = vmatprep.mubr.bf16.mxu0 %v1526
  %1704 = vmatmul.mubr.bf16.gmra.mrb[0].mxu0 %v1501
  %v1705 = vpop.f32.mrb[0].mxu0
  %v1706 = vadd.f32 0.0, %v1705
  %v1707 = vpop.f32.mrb[0].mxu0
  %v1708 = vadd.f32 0.0, %v1707
  %v1709 = vpop.f32.mrb[0].mxu0
  %v1710 = vadd.f32 0.0, %v1709
  %v1711 = vpop.f32.mrb[0].mxu0
  %v1712 = vadd.f32 0.0, %v1711
  %1713 = vdwg.mxu0
  %v1714 = vld [vmem:[%s4] sm:$0xff]
  %v1715 = vld [vmem:[%s4 + $0x8] sm:$0xf]
  %v1716 = vld [vmem:[%s4 + $0xc] sm:$0xff]
  %v1717 = vld [vmem:[%s4 + $0x14] sm:$0xf]
  %v1718 = vld [vmem:[%s4 + $0x18] sm:$0xff]
  %v1719 = vld [vmem:[%s4 + $0x20] sm:$0xf]
  %v1720 = vld [vmem:[%s4 + $0x24] sm:$0xff]
  %v1721 = vld [vmem:[%s4 + $0x2c] sm:$0xf]
  %v1722 = vld [vmem:[%s4 + $0x30] sm:$0xff]
  %v1723 = vld [vmem:[%s4 + $0x38] sm:$0xf]
  %v1724 = vld [vmem:[%s4 + $0x3c] sm:$0xff]
  %v1725 = vld [vmem:[%s4 + $0x44] sm:$0xf]
  %v1726 = vld [vmem:[%s4 + $0x48] sm:$0xff]
  %v1727 = vld [vmem:[%s4 + $0x50] sm:$0xf]
  %v1728 = vld [vmem:[%s4 + $0x54] sm:$0xff]
  %v1729 = vld [vmem:[%s4 + $0x5c] sm:$0xf]
  %v1730 = vld [vmem:[#allocation3] sm:$0xff]
  %v1731 = vld [vmem:[#allocation3 + $0x8] sm:$0xff]
  %v1732 = vld [vmem:[#allocation3 + $0x10] sm:$0xff]
  %v1733 = vld [vmem:[#allocation3 + $0x18] sm:$0xff]
  %v1734 = vld [vmem:[#allocation3 + $0x20] sm:$0xff]
  %v1735 = vld [vmem:[#allocation3 + $0x28] sm:$0xff]
  %v1736 = vld [vmem:[#allocation3 + $0x30] sm:$0xff]
  %v1737 = vld [vmem:[#allocation3 + $0x38] sm:$0xff]
  %v1738 = vld [vmem:[#allocation3 + $0x40] sm:$0xff]
  %v1739 = vld [vmem:[#allocation3 + $0x48] sm:$0xff]
  %v1740 = vld [vmem:[#allocation3 + $0x50] sm:$0xff]
  %v1741 = vld [vmem:[#allocation3 + $0x58] sm:$0xff]
  %v1742 = vld [vmem:[#allocation3 + $0x60] sm:$0xff]
  %v1743 = vld [vmem:[#allocation3 + $0x68] sm:$0xff]
  %v1744 = vld [vmem:[#allocation3 + $0x70] sm:$0xff]
  %v1745 = vld [vmem:[#allocation3 + $0x78] sm:$0xff]
  %v1746 = vld [vmem:[#allocation3 + $0x80] sm:$0xff]
  %v1747 = vld [vmem:[#allocation3 + $0x88] sm:$0xff]
  %v1748 = vld [vmem:[#allocation3 + $0x90] sm:$0xff]
  %v1749 = vld [vmem:[#allocation3 + $0x98] sm:$0xff]
  %v1750 = vld [vmem:[#allocation3 + $0xa0] sm:$0xff]
  %v1751 = vld [vmem:[#allocation3 + $0xa8] sm:$0xff]
  %v1752 = vld [vmem:[#allocation3 + $0xb0] sm:$0xff]
  %v1753 = vld [vmem:[#allocation3 + $0xb8] sm:$0xff]
  %v1754 = vld [vmem:[#allocation3 + $0xc0] sm:$0xff]
  %v1755 = vld [vmem:[#allocation3 + $0xc8] sm:$0xff]
  %v1756 = vld [vmem:[#allocation3 + $0xd0] sm:$0xff]
  %v1757 = vld [vmem:[#allocation3 + $0xd8] sm:$0xff]
  %v1758 = vld [vmem:[#allocation3 + $0xe0] sm:$0xff]
  %v1759 = vld [vmem:[#allocation3 + $0xe8] sm:$0xff]
  %v1760 = vld [vmem:[#allocation3 + $0xf0] sm:$0xff]
  %v1761 = vld [vmem:[#allocation3 + $0xf8] sm:$0xff]
  %v1762 = vld [vmem:[#allocation3 + $0x100] sm:$0xff]
  %v1763 = vld [vmem:[#allocation3 + $0x108] sm:$0xff]
  %v1764 = vld [vmem:[#allocation3 + $0x110] sm:$0xff]
  %v1765 = vld [vmem:[#allocation3 + $0x118] sm:$0xff]
  %v1766 = vld [vmem:[#allocation3 + $0x120] sm:$0xff]
  %v1767 = vld [vmem:[#allocation3 + $0x128] sm:$0xff]
  %v1768 = vld [vmem:[#allocation3 + $0x130] sm:$0xff]
  %v1769 = vld [vmem:[#allocation3 + $0x138] sm:$0xff]
  %v1770 = vld [vmem:[#allocation3 + $0x140] sm:$0xff]
  %v1771 = vld [vmem:[#allocation3 + $0x148] sm:$0xff]
  %v1772 = vld [vmem:[#allocation3 + $0x150] sm:$0xff]
  %v1773 = vld [vmem:[#allocation3 + $0x158] sm:$0xff]
  %v1774 = vld [vmem:[#allocation3 + $0x160] sm:$0xff]
  %v1775 = vld [vmem:[#allocation3 + $0x168] sm:$0xff]
  %v1776 = vld [vmem:[#allocation3 + $0x170] sm:$0xff]
  %v1777 = vld [vmem:[#allocation3 + $0x178] sm:$0xff]
  %v1778 = vld [vmem:[#allocation3 + $0x180] sm:$0xff]
  %v1779 = vld [vmem:[#allocation3 + $0x188] sm:$0xff]
  %v1780 = vld [vmem:[#allocation3 + $0x190] sm:$0xff]
  %v1781 = vld [vmem:[#allocation3 + $0x198] sm:$0xff]
  %v1782 = vld [vmem:[#allocation3 + $0x1a0] sm:$0xff]
  %v1783 = vld [vmem:[#allocation3 + $0x1a8] sm:$0xff]
  %v1784 = vld [vmem:[#allocation3 + $0x1b0] sm:$0xff]
  %v1785 = vld [vmem:[#allocation3 + $0x1b8] sm:$0xff]
  %v1786 = vld [vmem:[#allocation3 + $0x1c0] sm:$0xff]
  %v1787 = vld [vmem:[#allocation3 + $0x1c8] sm:$0xff]
  %v1788 = vld [vmem:[#allocation3 + $0x1d0] sm:$0xff]
  %v1789 = vld [vmem:[#allocation3 + $0x1d8] sm:$0xff]
  %v1790 = vld [vmem:[#allocation3 + $0x1e0] sm:$0xff]
  %v1791 = vld [vmem:[#allocation3 + $0x1e8] sm:$0xff]
  %v1792 = vld [vmem:[#allocation3 + $0x1f0] sm:$0xff]
  %v1793 = vld [vmem:[#allocation3 + $0x1f8] sm:$0xff]
  %v1794 = vld [vmem:[#allocation3 + $0x200] sm:$0xff]
  %v1795 = vld [vmem:[#allocation3 + $0x208] sm:$0xff]
  %v1796 = vld [vmem:[#allocation3 + $0x210] sm:$0xff]
  %v1797 = vld [vmem:[#allocation3 + $0x218] sm:$0xff]
  %v1798 = vld [vmem:[#allocation3 + $0x220] sm:$0xff]
  %v1799 = vld [vmem:[#allocation3 + $0x228] sm:$0xff]
  %v1800 = vld [vmem:[#allocation3 + $0x230] sm:$0xff]
  %v1801 = vld [vmem:[#allocation3 + $0x238] sm:$0xff]
  %v1818 = vunpack.c.l.b16 %v1714
  %v1819 = vunpack.c.h.b16 %v1714
  %v1820 = vunpack.c.l.b16 %v1715
  %v1821 = vunpack.c.l.b16 %v1716
  %v1822 = vunpack.c.h.b16 %v1716
  %v1823 = vunpack.c.l.b16 %v1717
  %v1824 = vunpack.c.l.b16 %v1718
  %v1825 = vunpack.c.h.b16 %v1718
  %v1826 = vunpack.c.l.b16 %v1719
  %v1827 = vunpack.c.l.b16 %v1720
  %v1828 = vunpack.c.h.b16 %v1720
  %v1829 = vunpack.c.l.b16 %v1721
  %v1830 = vunpack.c.l.b16 %v1722
  %v1831 = vunpack.c.h.b16 %v1722
  %v1832 = vunpack.c.l.b16 %v1723
  %v1833 = vunpack.c.l.b16 %v1724
  %v1834 = vunpack.c.h.b16 %v1724
  %v1835 = vunpack.c.l.b16 %v1725
  %v1836 = vunpack.c.l.b16 %v1726
  %v1837 = vunpack.c.h.b16 %v1726
  %v1838 = vunpack.c.l.b16 %v1727
  %v1839 = vunpack.c.l.b16 %v1728
  %v1840 = vunpack.c.h.b16 %v1728
  %v1841 = vunpack.c.l.b16 %v1729
  %v1842 = vpack.c.b16 %v1821, %v1818
  %v1843 = vpack.c.b16 %v1822, %v1819
  %v1844 = vpack.c.b16 %v1823, %v1820
  %v1845 = vpack.c.b16 %v1827, %v1824
  %v1846 = vpack.c.b16 %v1828, %v1825
  %v1847 = vpack.c.b16 %v1829, %v1826
  %v1848 = vpack.c.b16 %v1833, %v1830
  %v1849 = vpack.c.b16 %v1834, %v1831
  %v1850 = vpack.c.b16 %v1835, %v1832
  %v1851 = vpack.c.b16 %v1839, %v1836
  %v1852 = vpack.c.b16 %v1840, %v1837
  %v1853 = vpack.c.b16 %v1841, %v1838
  %vm1862 = vcmask 261120
  %v1864 = vsel %vm1862, %v1844, 0
  %v1867 = vsel %vm1862, %v1847, 0
  %v1870 = vsel %vm1862, %v1850, 0
  %v1873 = vsel %vm1862, %v1853, 0
  %1875 = vmatprep.subr.bf16.mxu0 %v1731
  %1876 = vmatpush1.bf16.msra.mxu0 %v1730
  %1877 = vmatprep.subr.bf16.mxu0 %v1735
  %1878 = vmatpush1.bf16.msra.mxu0 %v1734
  %1879 = vmatprep.subr.bf16.mxu0 %v1739
  %1880 = vmatpush1.bf16.msra.mxu0 %v1738
  %1881 = vmatprep.subr.bf16.mxu0 %v1743
  %1882 = vmatpush1.bf16.msra.mxu0 %v1742
  %1883 = vmatprep.subr.bf16.mxu0 %v1747
  %1884 = vmatpush1.bf16.msra.mxu0 %v1746
  %1885 = vmatprep.subr.bf16.mxu0 %v1751
  %1886 = vmatpush1.bf16.msra.mxu0 %v1750
  %1887 = vmatprep.subr.bf16.mxu0 %v1755
  %1888 = vmatpush1.bf16.msra.mxu0 %v1754
  %1889 = vmatprep.subr.bf16.mxu0 %v1759
  %1890 = vmatpush1.bf16.msra.mxu0 %v1758
  %1891 = vmatprep.subr.bf16.mxu0 %v1763
  %1892 = vmatpush1.bf16.msra.mxu0 %v1762
  %1893 = vmatprep.subr.bf16.mxu0 %v1767
  %1894 = vmatpush1.bf16.msra.mxu0 %v1766
  %1895 = vmatprep.subr.bf16.mxu0 %v1771
  %1896 = vmatpush1.bf16.msra.mxu0 %v1770
  %1897 = vmatprep.subr.bf16.mxu0 %v1775
  %1898 = vmatpush1.bf16.msra.mxu0 %v1774
  %1899 = vmatprep.subr.bf16.mxu0 %v1779
  %1900 = vmatpush1.bf16.msra.mxu0 %v1778
  %1901 = vmatprep.subr.bf16.mxu0 %v1783
  %1902 = vmatpush1.bf16.msra.mxu0 %v1782
  %1903 = vmatprep.subr.bf16.mxu0 %v1787
  %1904 = vmatpush1.bf16.msra.mxu0 %v1786
  %1905 = vmatprep.subr.bf16.mxu0 %v1791
  %1906 = vmatpush1.bf16.msra.mxu0 %v1790
  %1907 = vmatprep.mubr.bf16.mxu0 %v1843
  %1908 = vmatmul.mubr.bf16.gmra.mrb[0].mxu0 %v1842
  %v1909 = vpop.f32.mrb[0].mxu0
  %v1910 = vadd.f32 0.0, %v1909
  %v1911 = vpop.f32.mrb[0].mxu0
  %v1912 = vadd.f32 0.0, %v1911
  %v1913 = vpop.f32.mrb[0].mxu0
  %v1914 = vadd.f32 0.0, %v1913
  %v1915 = vpop.f32.mrb[0].mxu0
  %v1916 = vadd.f32 0.0, %v1915
  %1917 = vmatprep.mubr.bf16.mxu0 %v1846
  %1918 = vmatmul.mubr.bf16.gmra.mrb[0].mxu0 %v1845
  %v1919 = vpop.f32.mrb[0].mxu0
  %v1920 = vadd.f32 0.0, %v1919
  %v1921 = vpop.f32.mrb[0].mxu0
  %v1922 = vadd.f32 0.0, %v1921
  %v1923 = vpop.f32.mrb[0].mxu0
  %v1924 = vadd.f32 0.0, %v1923
  %v1925 = vpop.f32.mrb[0].mxu0
  %v1926 = vadd.f32 0.0, %v1925
  %1927 = vmatprep.mubr.bf16.mxu0 %v1849
  %1928 = vmatmul.mubr.bf16.gmra.mrb[0].mxu0 %v1848
  %v1929 = vpop.f32.mrb[0].mxu0
  %v1930 = vadd.f32 0.0, %v1929
  %v1931 = vpop.f32.mrb[0].mxu0
  %v1932 = vadd.f32 0.0, %v1931
  %v1933 = vpop.f32.mrb[0].mxu0
  %v1934 = vadd.f32 0.0, %v1933
  %v1935 = vpop.f32.mrb[0].mxu0
  %v1936 = vadd.f32 0.0, %v1935
  %1937 = vmatprep.mubr.bf16.mxu0 %v1852
  %1938 = vmatmul.mubr.bf16.gmra.mrb[0].mxu0 %v1851
  %v1939 = vpop.f32.mrb[0].mxu0
  %v1940 = vadd.f32 0.0, %v1939
  %v1941 = vpop.f32.mrb[0].mxu0
  %v1942 = vadd.f32 0.0, %v1941
  %v1943 = vpop.f32.mrb[0].mxu0
  %v1944 = vadd.f32 0.0, %v1943
  %v1945 = vpop.f32.mrb[0].mxu0
  %v1946 = vadd.f32 0.0, %v1945
  %1947 = vdwg.mxu0
  %1948 = vmatprep.subr.bf16.mxu0 %v1795
  %1949 = vmatpush1.bf16.msra.mxu0 %v1794
  %1950 = vmatprep.subr.bf16.mxu0 %v1799
  %1951 = vmatpush1.bf16.msra.mxu0 %v1798
  %1952 = vmatprep.subr.bf16.mxu0 0
  %1953 = vmatpush1.bf16.msra.mxu0 0
  %1954 = vmatprep.subr.bf16.mxu0 0
  %1955 = vmatpush1.bf16.msra.mxu0 0
  %1956 = vmatprep.subr.bf16.mxu0 0
  %1957 = vmatpush1.bf16.msra.mxu0 0
  %1958 = vmatprep.subr.bf16.mxu0 0
  %1959 = vmatpush1.bf16.msra.mxu0 0
  %1960 = vmatprep.subr.bf16.mxu0 0
  %1961 = vmatpush1.bf16.msra.mxu0 0
  %1962 = vmatprep.subr.bf16.mxu0 0
  %1963 = vmatpush1.bf16.msra.mxu0 0
  %1964 = vmatprep.subr.bf16.mxu0 0
  %1965 = vmatpush1.bf16.msra.mxu0 0
  %1966 = vmatprep.subr.bf16.mxu0 0
  %1967 = vmatpush1.bf16.msra.mxu0 0
  %1968 = vmatprep.subr.bf16.mxu0 0
  %1969 = vmatpush1.bf16.msra.mxu0 0
  %1970 = vmatprep.subr.bf16.mxu0 0
  %1971 = vmatpush1.bf16.msra.mxu0 0
  %1972 = vmatprep.subr.bf16.mxu0 0
  %1973 = vmatpush1.bf16.msra.mxu0 0
  %1974 = vmatprep.subr.bf16.mxu0 0
  %1975 = vmatpush1.bf16.msra.mxu0 0
  %1976 = vmatprep.subr.bf16.mxu0 0
  %1977 = vmatpush1.bf16.msra.mxu0 0
  %1978 = vmatprep.subr.bf16.mxu0 0
  %1979 = vmatpush1.bf16.msra.mxu0 0
  %1980 = vmatprep.mubr.bf16.mxu0 0
  %1981 = vmatmul.mubr.bf16.gmra.mrb[0].mxu0 %v1864
  %v1982 = vpop.f32.mrb[0].mxu0
  %v1983 = vadd.f32 %v1910, %v1982
  %v1984 = vpop.f32.mrb[0].mxu0
  %v1985 = vadd.f32 %v1912, %v1984
  %v1986 = vpop.f32.mrb[0].mxu0
  %v1987 = vadd.f32 %v1914, %v1986
  %v1988 = vpop.f32.mrb[0].mxu0
  %v1989 = vadd.f32 %v1916, %v1988
  %1990 = vmatprep.mubr.bf16.mxu0 0
  %1991 = vmatmul.mubr.bf16.gmra.mrb[0].mxu0 %v1867
  %v1992 = vpop.f32.mrb[0].mxu0
  %v1993 = vadd.f32 %v1920, %v1992
  %v1994 = vpop.f32.mrb[0].mxu0
  %v1995 = vadd.f32 %v1922, %v1994
  %v1996 = vpop.f32.mrb[0].mxu0
  %v1997 = vadd.f32 %v1924, %v1996
  %v1998 = vpop.f32.mrb[0].mxu0
  %v1999 = vadd.f32 %v1926, %v1998
  %2000 = vmatprep.mubr.bf16.mxu0 0
  %2001 = vmatmul.mubr.bf16.gmra.mrb[0].mxu0 %v1870
  %v2002 = vpop.f32.mrb[0].mxu0
  %v2003 = vadd.f32 %v1930, %v2002
  %v2004 = vpop.f32.mrb[0].mxu0
  %v2005 = vadd.f32 %v1932, %v2004
  %v2006 = vpop.f32.mrb[0].mxu0
  %v2007 = vadd.f32 %v1934, %v2006
  %v2008 = vpop.f32.mrb[0].mxu0
  %v2009 = vadd.f32 %v1936, %v2008
  %2010 = vmatprep.mubr.bf16.mxu0 0
  %2011 = vmatmul.mubr.bf16.gmra.mrb[0].mxu0 %v1873
  %v2012 = vpop.f32.mrb[0].mxu0
  %v2013 = vadd.f32 %v1940, %v2012
  %v2014 = vpop.f32.mrb[0].mxu0
  %v2015 = vadd.f32 %v1942, %v2014
  %v2016 = vpop.f32.mrb[0].mxu0
  %v2017 = vadd.f32 %v1944, %v2016
  %v2018 = vpop.f32.mrb[0].mxu0
  %v2019 = vadd.f32 %v1946, %v2018
  %2020 = vdwg.mxu0
  %2021 = vmatprep.subr.bf16.mxu0 %v1733
  %2022 = vmatpush1.bf16.msra.mxu0 %v1732
  %2023 = vmatprep.subr.bf16.mxu0 %v1737
  %2024 = vmatpush1.bf16.msra.mxu0 %v1736
  %2025 = vmatprep.subr.bf16.mxu0 %v1741
  %2026 = vmatpush1.bf16.msra.mxu0 %v1740
  %2027 = vmatprep.subr.bf16.mxu0 %v1745
  %2028 = vmatpush1.bf16.msra.mxu0 %v1744
  %2029 = vmatprep.subr.bf16.mxu0 %v1749
  %2030 = vmatpush1.bf16.msra.mxu0 %v1748
  %2031 = vmatprep.subr.bf16.mxu0 %v1753
  %2032 = vmatpush1.bf16.msra.mxu0 %v1752
  %2033 = vmatprep.subr.bf16.mxu0 %v1757
  %2034 = vmatpush1.bf16.msra.mxu0 %v1756
  %2035 = vmatprep.subr.bf16.mxu0 %v1761
  %2036 = vmatpush1.bf16.msra.mxu0 %v1760
  %2037 = vmatprep.subr.bf16.mxu0 %v1765
  %2038 = vmatpush1.bf16.msra.mxu0 %v1764
  %2039 = vmatprep.subr.bf16.mxu0 %v1769
  %2040 = vmatpush1.bf16.msra.mxu0 %v1768
  %2041 = vmatprep.subr.bf16.mxu0 %v1773
  %2042 = vmatpush1.bf16.msra.mxu0 %v1772
  %2043 = vmatprep.subr.bf16.mxu0 %v1777
  %2044 = vmatpush1.bf16.msra.mxu0 %v1776
  %2045 = vmatprep.subr.bf16.mxu0 %v1781
  %2046 = vmatpush1.bf16.msra.mxu0 %v1780
  %2047 = vmatprep.subr.bf16.mxu0 %v1785
  %2048 = vmatpush1.bf16.msra.mxu0 %v1784
  %2049 = vmatprep.subr.bf16.mxu0 %v1789
  %2050 = vmatpush1.bf16.msra.mxu0 %v1788
  %2051 = vmatprep.subr.bf16.mxu0 %v1793
  %2052 = vmatpush1.bf16.msra.mxu0 %v1792
  %2053 = vmatprep.mubr.bf16.mxu0 %v1843
  %2054 = vmatmul.mubr.bf16.gmra.mrb[0].mxu0 %v1842
  %v2055 = vpop.f32.mrb[0].mxu0
  %v2056 = vadd.f32 0.0, %v2055
  %v2057 = vpop.f32.mrb[0].mxu0
  %v2058 = vadd.f32 0.0, %v2057
  %v2059 = vpop.f32.mrb[0].mxu0
  %v2060 = vadd.f32 0.0, %v2059
  %v2061 = vpop.f32.mrb[0].mxu0
  %v2062 = vadd.f32 0.0, %v2061
  %2063 = vmatprep.mubr.bf16.mxu0 %v1846
  %2064 = vmatmul.mubr.bf16.gmra.mrb[0].mxu0 %v1845
  %v2065 = vpop.f32.mrb[0].mxu0
  %v2066 = vadd.f32 0.0, %v2065
  %v2067 = vpop.f32.mrb[0].mxu0
  %v2068 = vadd.f32 0.0, %v2067
  %v2069 = vpop.f32.mrb[0].mxu0
  %v2070 = vadd.f32 0.0, %v2069
  %v2071 = vpop.f32.mrb[0].mxu0
  %v2072 = vadd.f32 0.0, %v2071
  %2073 = vmatprep.mubr.bf16.mxu0 %v1849
  %2074 = vmatmul.mubr.bf16.gmra.mrb[0].mxu0 %v1848
  %v2075 = vpop.f32.mrb[0].mxu0
  %v2076 = vadd.f32 0.0, %v2075
  %v2077 = vpop.f32.mrb[0].mxu0
  %v2078 = vadd.f32 0.0, %v2077
  %v2079 = vpop.f32.mrb[0].mxu0
  %v2080 = vadd.f32 0.0, %v2079
  %v2081 = vpop.f32.mrb[0].mxu0
  %v2082 = vadd.f32 0.0, %v2081
  %2083 = vmatprep.mubr.bf16.mxu0 %v1852
  %2084 = vmatmul.mubr.bf16.gmra.mrb[0].mxu0 %v1851
  %v2085 = vpop.f32.mrb[0].mxu0
  %v2086 = vadd.f32 0.0, %v2085
  %v2087 = vpop.f32.mrb[0].mxu0
  %v2088 = vadd.f32 0.0, %v2087
  %v2089 = vpop.f32.mrb[0].mxu0
  %v2090 = vadd.f32 0.0, %v2089
  %v2091 = vpop.f32.mrb[0].mxu0
  %v2092 = vadd.f32 0.0, %v2091
  %2093 = vdwg.mxu0
  %2094 = vmatprep.subr.bf16.mxu0 %v1797
  %2095 = vmatpush1.bf16.msra.mxu0 %v1796
  %2096 = vmatprep.subr.bf16.mxu0 %v1801
  %2097 = vmatpush1.bf16.msra.mxu0 %v1800
  %2098 = vmatprep.subr.bf16.mxu0 0
  %2099 = vmatpush1.bf16.msra.mxu0 0
  %2100 = vmatprep.subr.bf16.mxu0 0
  %2101 = vmatpush1.bf16.msra.mxu0 0
  %2102 = vmatprep.subr.bf16.mxu0 0
  %2103 = vmatpush1.bf16.msra.mxu0 0
  %2104 = vmatprep.subr.bf16.mxu0 0
  %2105 = vmatpush1.bf16.msra.mxu0 0
  %2106 = vmatprep.subr.bf16.mxu0 0
  %2107 = vmatpush1.bf16.msra.mxu0 0
  %2108 = vmatprep.subr.bf16.mxu0 0
  %2109 = vmatpush1.bf16.msra.mxu0 0
  %2110 = vmatprep.subr.bf16.mxu0 0
  %2111 = vmatpush1.bf16.msra.mxu0 0
  %2112 = vmatprep.subr.bf16.mxu0 0
  %2113 = vmatpush1.bf16.msra.mxu0 0
  %2114 = vmatprep.subr.bf16.mxu0 0
  %2115 = vmatpush1.bf16.msra.mxu0 0
  %2116 = vmatprep.subr.bf16.mxu0 0
  %2117 = vmatpush1.bf16.msra.mxu0 0
  %2118 = vmatprep.subr.bf16.mxu0 0
  %2119 = vmatpush1.bf16.msra.mxu0 0
  %2120 = vmatprep.subr.bf16.mxu0 0
  %2121 = vmatpush1.bf16.msra.mxu0 0
  %2122 = vmatprep.subr.bf16.mxu0 0
  %2123 = vmatpush1.bf16.msra.mxu0 0
  %2124 = vmatprep.subr.bf16.mxu0 0
  %2125 = vmatpush1.bf16.msra.mxu0 0
  %2126 = vmatprep.mubr.bf16.mxu0 0
  %2127 = vmatmul.mubr.bf16.gmra.mrb[0].mxu0 %v1864
  %v2128 = vpop.f32.mrb[0].mxu0
  %v2129 = vadd.f32 %v2056, %v2128
  %v2130 = vpop.f32.mrb[0].mxu0
  %v2131 = vadd.f32 %v2058, %v2130
  %v2132 = vpop.f32.mrb[0].mxu0
  %v2133 = vadd.f32 %v2060, %v2132
  %v2134 = vpop.f32.mrb[0].mxu0
  %v2135 = vadd.f32 %v2062, %v2134
  %2136 = vmatprep.mubr.bf16.mxu0 0
  %2137 = vmatmul.mubr.bf16.gmra.mrb[0].mxu0 %v1867
  %v2138 = vpop.f32.mrb[0].mxu0
  %v2139 = vadd.f32 %v2066, %v2138
  %v2140 = vpop.f32.mrb[0].mxu0
  %v2141 = vadd.f32 %v2068, %v2140
  %v2142 = vpop.f32.mrb[0].mxu0
  %v2143 = vadd.f32 %v2070, %v2142
  %v2144 = vpop.f32.mrb[0].mxu0
  %v2145 = vadd.f32 %v2072, %v2144
  %2146 = vmatprep.mubr.bf16.mxu0 0
  %2147 = vmatmul.mubr.bf16.gmra.mrb[0].mxu0 %v1870
  %v2148 = vpop.f32.mrb[0].mxu0
  %v2149 = vadd.f32 %v2076, %v2148
  %v2150 = vpop.f32.mrb[0].mxu0
  %v2151 = vadd.f32 %v2078, %v2150
  %v2152 = vpop.f32.mrb[0].mxu0
  %v2153 = vadd.f32 %v2080, %v2152
  %v2154 = vpop.f32.mrb[0].mxu0
  %v2155 = vadd.f32 %v2082, %v2154
  %2156 = vmatprep.mubr.bf16.mxu0 0
  %2157 = vmatmul.mubr.bf16.gmra.mrb[0].mxu0 %v1873
  %v2158 = vpop.f32.mrb[0].mxu0
  %v2159 = vadd.f32 %v2086, %v2158
  %v2160 = vpop.f32.mrb[0].mxu0
  %v2161 = vadd.f32 %v2088, %v2160
  %v2162 = vpop.f32.mrb[0].mxu0
  %v2163 = vadd.f32 %v2090, %v2162
  %v2164 = vpop.f32.mrb[0].mxu0
  %v2165 = vadd.f32 %v2092, %v2164
  %2166 = vdwg.mxu0
  %v2167 = vadd.f32 %v1563, %v1983
  %v2168 = vadd.f32 %v1565, %v1985
  %v2169 = vadd.f32 %v1656, %v2129
  %v2170 = vadd.f32 %v1658, %v2131
  %v2171 = vadd.f32 %v1567, %v1987
  %v2172 = vadd.f32 %v1569, %v1989
  %v2173 = vadd.f32 %v1660, %v2133
  %v2174 = vadd.f32 %v1662, %v2135
  %v2175 = vadd.f32 %v1573, %v1993
  %v2176 = vadd.f32 %v1575, %v1995
  %v2177 = vadd.f32 %v1666, %v2139
  %v2178 = vadd.f32 %v1668, %v2141
  %v2179 = vadd.f32 %v1577, %v1997
  %v2180 = vadd.f32 %v1579, %v1999
  %v2181 = vadd.f32 %v1670, %v2143
  %v2182 = vadd.f32 %v1672, %v2145
  %v2183 = vadd.f32 %v1583, %v2003
  %v2184 = vadd.f32 %v1585, %v2005
  %v2185 = vadd.f32 %v1676, %v2149
  %v2186 = vadd.f32 %v1678, %v2151
  %v2187 = vadd.f32 %v1587, %v2007
  %v2188 = vadd.f32 %v1589, %v2009
  %v2189 = vadd.f32 %v1680, %v2153
  %v2190 = vadd.f32 %v1682, %v2155
  %v2191 = vadd.f32 %v1593, %v2013
  %v2192 = vadd.f32 %v1595, %v2015
  %v2193 = vadd.f32 %v1686, %v2159
  %v2194 = vadd.f32 %v1688, %v2161
  %v2195 = vadd.f32 %v1597, %v2017
  %v2196 = vadd.f32 %v1599, %v2019
  %v2197 = vadd.f32 %v1690, %v2163
  %v2198 = vadd.f32 %v1692, %v2165
  %v2199 = vld [vmem:[%s6] sm:$0xff]
  %v2200 = vld [vmem:[%s6 + $0x8] sm:$0xff]
  %v2201 = vld [vmem:[%s6 + $0x10] sm:$0xff]
  %v2202 = vld [vmem:[%s6 + $0x18] sm:$0xff]
  %v2203 = vld [vmem:[%s6 + $0x20] sm:$0xff]
  %v2204 = vld [vmem:[%s6 + $0x28] sm:$0xff]
  %v2205 = vld [vmem:[%s6 + $0x30] sm:$0xff]
  %v2206 = vld [vmem:[%s6 + $0x38] sm:$0xff]
  %2208 = vset.pattern.permute.xlu0 0
  %2209 = vperm.xlu0 %2208, %v2199
  %v2210 = vpop.permute.xlu0 %2209
  %2213 = vset.pattern.permute.xlu0 0
  %2214 = vperm.xlu0 %2213, %v2200
  %v2215 = vpop.permute.xlu0 %2214
  %2218 = vset.pattern.permute.xlu0 0
  %2219 = vperm.xlu0 %2218, %v2201
  %v2220 = vpop.permute.xlu0 %2219
  %2223 = vset.pattern.permute.xlu0 0
  %2224 = vperm.xlu0 %2223, %v2202
  %v2225 = vpop.permute.xlu0 %2224
  %2228 = vset.pattern.permute.xlu0 0
  %2229 = vperm.xlu0 %2228, %v2203
  %v2230 = vpop.permute.xlu0 %2229
  %2233 = vset.pattern.permute.xlu0 0
  %2234 = vperm.xlu0 %2233, %v2204
  %v2235 = vpop.permute.xlu0 %2234
  %2238 = vset.pattern.permute.xlu0 0
  %2239 = vperm.xlu0 %2238, %v2205
  %v2240 = vpop.permute.xlu0 %2239
  %2243 = vset.pattern.permute.xlu0 0
  %2244 = vperm.xlu0 %2243, %v2206
  %v2245 = vpop.permute.xlu0 %2244
  %v2247 = vadd.f32 %v2167, %v2210
  %v2248 = vadd.f32 %v2168, %v2210
  %v2249 = vadd.f32 %v2169, %v2210
  %v2250 = vadd.f32 %v2170, %v2210
  %v2251 = vadd.f32 %v2171, %v2215
  %v2252 = vadd.f32 %v2172, %v2215
  %v2253 = vadd.f32 %v2173, %v2215
  %v2254 = vadd.f32 %v2174, %v2215
  %v2255 = vadd.f32 %v2175, %v2220
  %v2256 = vadd.f32 %v2176, %v2220
  %v2257 = vadd.f32 %v2177, %v2220
  %v2258 = vadd.f32 %v2178, %v2220
  %v2259 = vadd.f32 %v2179, %v2225
  %v2260 = vadd.f32 %v2180, %v2225
  %v2261 = vadd.f32 %v2181, %v2225
  %v2262 = vadd.f32 %v2182, %v2225
  %v2263 = vadd.f32 %v2183, %v2230
  %v2264 = vadd.f32 %v2184, %v2230
  %v2265 = vadd.f32 %v2185, %v2230
  %v2266 = vadd.f32 %v2186, %v2230
  %v2267 = vadd.f32 %v2187, %v2235
  %v2268 = vadd.f32 %v2188, %v2235
  %v2269 = vadd.f32 %v2189, %v2235
  %v2270 = vadd.f32 %v2190, %v2235
  %v2271 = vadd.f32 %v2191, %v2240
  %v2272 = vadd.f32 %v2192, %v2240
  %v2273 = vadd.f32 %v2193, %v2240
  %v2274 = vadd.f32 %v2194, %v2240
  %v2275 = vadd.f32 %v2195, %v2245
  %v2276 = vadd.f32 %v2196, %v2245
  %v2277 = vadd.f32 %v2197, %v2245
  %v2278 = vadd.f32 %v2198, %v2245
  %v2279 = vxor.u32 %v2247, 2147483648
  %v2280 = vxor.u32 %v2248, 2147483648
  %v2281 = vxor.u32 %v2249, 2147483648
  %v2282 = vxor.u32 %v2250, 2147483648
  %v2283 = vxor.u32 %v2251, 2147483648
  %v2284 = vxor.u32 %v2252, 2147483648
  %v2285 = vxor.u32 %v2253, 2147483648
  %v2286 = vxor.u32 %v2254, 2147483648
  %v2287 = vxor.u32 %v2255, 2147483648
  %v2288 = vxor.u32 %v2256, 2147483648
  %v2289 = vxor.u32 %v2257, 2147483648
  %v2290 = vxor.u32 %v2258, 2147483648
  %v2291 = vxor.u32 %v2259, 2147483648
  %v2292 = vxor.u32 %v2260, 2147483648
  %v2293 = vxor.u32 %v2261, 2147483648
  %v2294 = vxor.u32 %v2262, 2147483648
  %v2295 = vxor.u32 %v2263, 2147483648
  %v2296 = vxor.u32 %v2264, 2147483648
  %v2297 = vxor.u32 %v2265, 2147483648
  %v2298 = vxor.u32 %v2266, 2147483648
  %v2299 = vxor.u32 %v2267, 2147483648
  %v2300 = vxor.u32 %v2268, 2147483648
  %v2301 = vxor.u32 %v2269, 2147483648
  %v2302 = vxor.u32 %v2270, 2147483648
  %v2303 = vxor.u32 %v2271, 2147483648
  %v2304 = vxor.u32 %v2272, 2147483648
  %v2305 = vxor.u32 %v2273, 2147483648
  %v2306 = vxor.u32 %v2274, 2147483648
  %v2307 = vxor.u32 %v2275, 2147483648
  %v2308 = vxor.u32 %v2276, 2147483648
  %v2309 = vxor.u32 %v2277, 2147483648
  %v2310 = vxor.u32 %v2278, 2147483648
  %v2311 = vmul.f32 %v2279, 1.442695
  %v2312 = vpow.pop %v2311
  %v2313 = vmul.f32 %v2280, 1.442695
  %v2314 = vpow.pop %v2313
  %v2315 = vmul.f32 %v2281, 1.442695
  %v2316 = vpow.pop %v2315
  %v2317 = vmul.f32 %v2282, 1.442695
  %v2318 = vpow.pop %v2317
  %v2319 = vmul.f32 %v2283, 1.442695
  %v2320 = vpow.pop %v2319
  %v2321 = vmul.f32 %v2284, 1.442695
  %v2322 = vpow.pop %v2321
  %v2323 = vmul.f32 %v2285, 1.442695
  %v2324 = vpow.pop %v2323
  %v2325 = vmul.f32 %v2286, 1.442695
  %v2326 = vpow.pop %v2325
  %v2327 = vmul.f32 %v2287, 1.442695
  %v2328 = vpow.pop %v2327
  %v2329 = vmul.f32 %v2288, 1.442695
  %v2330 = vpow.pop %v2329
  %v2331 = vmul.f32 %v2289, 1.442695
  %v2332 = vpow.pop %v2331
  %v2333 = vmul.f32 %v2290, 1.442695
  %v2334 = vpow.pop %v2333
  %v2335 = vmul.f32 %v2291, 1.442695
  %v2336 = vpow.pop %v2335
  %v2337 = vmul.f32 %v2292, 1.442695
  %v2338 = vpow.pop %v2337
  %v2339 = vmul.f32 %v2293, 1.442695
  %v2340 = vpow.pop %v2339
  %v2341 = vmul.f32 %v2294, 1.442695
  %v2342 = vpow.pop %v2341
  %v2343 = vmul.f32 %v2295, 1.442695
  %v2344 = vpow.pop %v2343
  %v2345 = vmul.f32 %v2296, 1.442695
  %v2346 = vpow.pop %v2345
  %v2347 = vmul.f32 %v2297, 1.442695
  %v2348 = vpow.pop %v2347
  %v2349 = vmul.f32 %v2298, 1.442695
  %v2350 = vpow.pop %v2349
  %v2351 = vmul.f32 %v2299, 1.442695
  %v2352 = vpow.pop %v2351
  %v2353 = vmul.f32 %v2300, 1.442695
  %v2354 = vpow.pop %v2353
  %v2355 = vmul.f32 %v2301, 1.442695
  %v2356 = vpow.pop %v2355
  %v2357 = vmul.f32 %v2302, 1.442695
  %v2358 = vpow.pop %v2357
  %v2359 = vmul.f32 %v2303, 1.442695
  %v2360 = vpow.pop %v2359
  %v2361 = vmul.f32 %v2304, 1.442695
  %v2362 = vpow.pop %v2361
  %v2363 = vmul.f32 %v2305, 1.442695
  %v2364 = vpow.pop %v2363
  %v2365 = vmul.f32 %v2306, 1.442695
  %v2366 = vpow.pop %v2365
  %v2367 = vmul.f32 %v2307, 1.442695
  %v2368 = vpow.pop %v2367
  %v2369 = vmul.f32 %v2308, 1.442695
  %v2370 = vpow.pop %v2369
  %v2371 = vmul.f32 %v2309, 1.442695
  %v2372 = vpow.pop %v2371
  %v2373 = vmul.f32 %v2310, 1.442695
  %v2374 = vpow.pop %v2373
  %v2375 = vadd.f32 %v2312, 1.0
  %v2376 = vadd.f32 %v2314, 1.0
  %v2377 = vadd.f32 %v2316, 1.0
  %v2378 = vadd.f32 %v2318, 1.0
  %v2379 = vadd.f32 %v2320, 1.0
  %v2380 = vadd.f32 %v2322, 1.0
  %v2381 = vadd.f32 %v2324, 1.0
  %v2382 = vadd.f32 %v2326, 1.0
  %v2383 = vadd.f32 %v2328, 1.0
  %v2384 = vadd.f32 %v2330, 1.0
  %v2385 = vadd.f32 %v2332, 1.0
  %v2386 = vadd.f32 %v2334, 1.0
  %v2387 = vadd.f32 %v2336, 1.0
  %v2388 = vadd.f32 %v2338, 1.0
  %v2389 = vadd.f32 %v2340, 1.0
  %v2390 = vadd.f32 %v2342, 1.0
  %v2391 = vadd.f32 %v2344, 1.0
  %v2392 = vadd.f32 %v2346, 1.0
  %v2393 = vadd.f32 %v2348, 1.0
  %v2394 = vadd.f32 %v2350, 1.0
  %v2395 = vadd.f32 %v2352, 1.0
  %v2396 = vadd.f32 %v2354, 1.0
  %v2397 = vadd.f32 %v2356, 1.0
  %v2398 = vadd.f32 %v2358, 1.0
  %v2399 = vadd.f32 %v2360, 1.0
  %v2400 = vadd.f32 %v2362, 1.0
  %v2401 = vadd.f32 %v2364, 1.0
  %v2402 = vadd.f32 %v2366, 1.0
  %v2403 = vadd.f32 %v2368, 1.0
  %v2404 = vadd.f32 %v2370, 1.0
  %v2405 = vadd.f32 %v2372, 1.0
  %v2406 = vadd.f32 %v2374, 1.0
  %v2407 = vrcp.pop %v2375
  %v2408 = vmul.f32 1.0, %v2407
  %v2409 = vrcp.pop %v2376
  %v2410 = vmul.f32 1.0, %v2409
  %v2411 = vrcp.pop %v2377
  %v2412 = vmul.f32 1.0, %v2411
  %v2413 = vrcp.pop %v2378
  %v2414 = vmul.f32 1.0, %v2413
  %v2415 = vrcp.pop %v2379
  %v2416 = vmul.f32 1.0, %v2415
  %v2417 = vrcp.pop %v2380
  %v2418 = vmul.f32 1.0, %v2417
  %v2419 = vrcp.pop %v2381
  %v2420 = vmul.f32 1.0, %v2419
  %v2421 = vrcp.pop %v2382
  %v2422 = vmul.f32 1.0, %v2421
  %v2423 = vrcp.pop %v2383
  %v2424 = vmul.f32 1.0, %v2423
  %v2425 = vrcp.pop %v2384
  %v2426 = vmul.f32 1.0, %v2425
  %v2427 = vrcp.pop %v2385
  %v2428 = vmul.f32 1.0, %v2427
  %v2429 = vrcp.pop %v2386
  %v2430 = vmul.f32 1.0, %v2429
  %v2431 = vrcp.pop %v2387
  %v2432 = vmul.f32 1.0, %v2431
  %v2433 = vrcp.pop %v2388
  %v2434 = vmul.f32 1.0, %v2433
  %v2435 = vrcp.pop %v2389
  %v2436 = vmul.f32 1.0, %v2435
  %v2437 = vrcp.pop %v2390
  %v2438 = vmul.f32 1.0, %v2437
  %v2439 = vrcp.pop %v2391
  %v2440 = vmul.f32 1.0, %v2439
  %v2441 = vrcp.pop %v2392
  %v2442 = vmul.f32 1.0, %v2441
  %v2443 = vrcp.pop %v2393
  %v2444 = vmul.f32 1.0, %v2443
  %v2445 = vrcp.pop %v2394
  %v2446 = vmul.f32 1.0, %v2445
  %v2447 = vrcp.pop %v2395
  %v2448 = vmul.f32 1.0, %v2447
  %v2449 = vrcp.pop %v2396
  %v2450 = vmul.f32 1.0, %v2449
  %v2451 = vrcp.pop %v2397
  %v2452 = vmul.f32 1.0, %v2451
  %v2453 = vrcp.pop %v2398
  %v2454 = vmul.f32 1.0, %v2453
  %v2455 = vrcp.pop %v2399
  %v2456 = vmul.f32 1.0, %v2455
  %v2457 = vrcp.pop %v2400
  %v2458 = vmul.f32 1.0, %v2457
  %v2459 = vrcp.pop %v2401
  %v2460 = vmul.f32 1.0, %v2459
  %v2461 = vrcp.pop %v2402
  %v2462 = vmul.f32 1.0, %v2461
  %v2463 = vrcp.pop %v2403
  %v2464 = vmul.f32 1.0, %v2463
  %v2465 = vrcp.pop %v2404
  %v2466 = vmul.f32 1.0, %v2465
  %v2467 = vrcp.pop %v2405
  %v2468 = vmul.f32 1.0, %v2467
  %v2469 = vrcp.pop %v2406
  %v2470 = vmul.f32 1.0, %v2469
  %v2471 = vmul.f32 %v38, %v2440
  %v2472 = vmul.f32 %v39, %v2442
  %v2473 = vmul.f32 %v40, %v2444
  %v2474 = vmul.f32 %v41, %v2446
  %v2475 = vmul.f32 %v42, %v2448
  %v2476 = vmul.f32 %v43, %v2450
  %v2477 = vmul.f32 %v44, %v2452
  %v2478 = vmul.f32 %v45, %v2454
  %v2479 = vmul.f32 %v46, %v2456
  %v2480 = vmul.f32 %v47, %v2458
  %v2481 = vmul.f32 %v48, %v2460
  %v2482 = vmul.f32 %v49, %v2462
  %v2483 = vmul.f32 %v50, %v2464
  %v2484 = vmul.f32 %v51, %v2466
  %v2485 = vmul.f32 %v52, %v2468
  %v2486 = vmul.f32 %v53, %v2470
  %2487 = vrot.lane.b32.xlu0 %v2471, 17
  %v2488 = vpop.permute.xlu0 %2487
  %2489 = vrot.lane.b32.xlu0 %v2475, 17
  %v2490 = vpop.permute.xlu0 %2489
  %2491 = vrot.lane.b32.xlu0 %v2479, 17
  %v2492 = vpop.permute.xlu0 %2491
  %2493 = vrot.lane.b32.xlu0 %v2483, 17
  %v2494 = vpop.permute.xlu0 %2493
  %2495 = vrot.lane.b32.xlu0 %v2472, 17
  %v2496 = vpop.permute.xlu0 %2495
  %2497 = vrot.lane.b32.xlu0 %v2476, 17
  %v2498 = vpop.permute.xlu0 %2497
  %2499 = vrot.lane.b32.xlu0 %v2480, 17
  %v2500 = vpop.permute.xlu0 %2499
  %2501 = vrot.lane.b32.xlu0 %v2484, 17
  %v2502 = vpop.permute.xlu0 %2501
  %2503 = vrot.lane.b32.xlu0 %v2473, 17
  %v2504 = vpop.permute.xlu0 %2503
  %2505 = vrot.lane.b32.xlu0 %v2477, 17
  %v2506 = vpop.permute.xlu0 %2505
  %2507 = vrot.lane.b32.xlu0 %v2481, 17
  %v2508 = vpop.permute.xlu0 %2507
  %2509 = vrot.lane.b32.xlu0 %v2485, 17
  %v2510 = vpop.permute.xlu0 %2509
  %2511 = vrot.lane.b32.xlu0 %v2474, 17
  %v2512 = vpop.permute.xlu0 %2511
  %2513 = vrot.lane.b32.xlu0 %v2478, 17
  %v2514 = vpop.permute.xlu0 %2513
  %2515 = vrot.lane.b32.xlu0 %v2482, 17
  %v2516 = vpop.permute.xlu0 %2515
  %2517 = vrot.lane.b32.xlu0 %v2486, 17
  %v2518 = vpop.permute.xlu0 %2517
  %v2519 = vsel %vm72, %v2504, %v2512
  %v2520 = vsel %vm72, %v2506, %v2514
  %v2521 = vsel %vm72, %v2508, %v2516
  %v2522 = vsel %vm72, %v2510, %v2518
  %v2523 = vsel %vm72, %v2496, %v2504
  %v2524 = vsel %vm72, %v2498, %v2506
  %v2525 = vsel %vm72, %v2500, %v2508
  %v2526 = vsel %vm72, %v2502, %v2510
  %v2527 = vsel %vm72, %v2488, %v2496
  %v2528 = vsel %vm72, %v2490, %v2498
  %v2529 = vsel %vm72, %v2492, %v2500
  %v2530 = vsel %vm72, %v2494, %v2502
  %v2531 = vsel %vm72, %v2512, %v2488
  %v2532 = vsel %vm72, %v2514, %v2490
  %v2533 = vsel %vm72, %v2516, %v2492
  %v2534 = vsel %vm72, %v2518, %v2494
  %v2535 = vld [vmem:[%s2] ss:$8 sm:$0xf]
  %v2537 = vlaneseq
  %v2538 = vshrl.u32 %v2537, 7
  %v2539 = vsub.s32 0, %v2538
  %v2540 = vrot.slane %v2535, %v2539
  %v2541 = vlaneseq
  %v2542 = vshrl.u32 %v2541, 7
  %v2543 = vsub.s32 1, %v2542
  %v2544 = vrot.slane %v2535, %v2543
  %v2545 = vlaneseq
  %v2546 = vshrl.u32 %v2545, 7
  %v2547 = vsub.s32 2, %v2546
  %v2548 = vrot.slane %v2535, %v2547
  %v2549 = vlaneseq
  %v2550 = vshrl.u32 %v2549, 7
  %v2551 = vsub.s32 3, %v2550
  %v2552 = vrot.slane %v2535, %v2551
  %v2557 = vmul.f32 %v2531, %v2540
  %v2558 = vmul.f32 %v2527, %v2544
  %v2559 = vmul.f32 %v2523, %v2548
  %v2560 = vmul.f32 %v2519, %v2552
  %v2561 = vmul.f32 %v2532, %v2540
  %v2562 = vmul.f32 %v2528, %v2544
  %v2563 = vmul.f32 %v2524, %v2548
  %v2564 = vmul.f32 %v2520, %v2552
  %v2565 = vmul.f32 %v2533, %v2540
  %v2566 = vmul.f32 %v2529, %v2544
  %v2567 = vmul.f32 %v2525, %v2548
  %v2568 = vmul.f32 %v2521, %v2552
  %v2569 = vmul.f32 %v2534, %v2540
  %v2570 = vmul.f32 %v2530, %v2544
  %v2571 = vmul.f32 %v2526, %v2548
  %v2572 = vmul.f32 %v2522, %v2552
  %v2573 = vpack.c.bf16 %v2561, %v2557
  %v2574 = vpack.c.bf16 %v2562, %v2558
  %v2575 = vpack.c.bf16 %v2563, %v2559
  %v2576 = vpack.c.bf16 %v2564, %v2560
  %v2577 = vpack.c.bf16 %v2569, %v2565
  %v2578 = vpack.c.bf16 %v2570, %v2566
  %v2579 = vpack.c.bf16 %v2571, %v2567
  %v2580 = vpack.c.bf16 %v2572, %v2568
  %2581 = vst [vmem:[#allocation3] sm:$0xff] %v2573
  %2582 = vst [vmem:[#allocation3 + $0x8] sm:$0xff] %v2574
  %2583 = vst [vmem:[#allocation3 + $0x10] sm:$0xff] %v2575
  %2584 = vst [vmem:[#allocation3 + $0x18] sm:$0xff] %v2576
  %2585 = vst [vmem:[#allocation3 + $0x20] sm:$0xff] %v2577
  %2586 = vst [vmem:[#allocation3 + $0x28] sm:$0xff] %v2578
  %2587 = vst [vmem:[#allocation3 + $0x30] sm:$0xff] %v2579
  %2588 = vst [vmem:[#allocation3 + $0x38] sm:$0xff] %v2580
  %2589 = vrot.lane.b32.xlu0 %v2471, 16
  %v2590 = vpop.permute.xlu0 %2589
  %2591 = vrot.lane.b32.xlu0 %v2475, 16
  %v2592 = vpop.permute.xlu0 %2591
  %2593 = vrot.lane.b32.xlu0 %v2479, 16
  %v2594 = vpop.permute.xlu0 %2593
  %2595 = vrot.lane.b32.xlu0 %v2483, 16
  %v2596 = vpop.permute.xlu0 %2595
  %2597 = vrot.lane.b32.xlu0 %v2472, 16
  %v2598 = vpop.permute.xlu0 %2597
  %2599 = vrot.lane.b32.xlu0 %v2476, 16
  %v2600 = vpop.permute.xlu0 %2599
  %2601 = vrot.lane.b32.xlu0 %v2480, 16
  %v2602 = vpop.permute.xlu0 %2601
  %2603 = vrot.lane.b32.xlu0 %v2484, 16
  %v2604 = vpop.permute.xlu0 %2603
  %2605 = vrot.lane.b32.xlu0 %v2473, 16
  %v2606 = vpop.permute.xlu0 %2605
  %2607 = vrot.lane.b32.xlu0 %v2477, 16
  %v2608 = vpop.permute.xlu0 %2607
  %2609 = vrot.lane.b32.xlu0 %v2481, 16
  %v2610 = vpop.permute.xlu0 %2609
  %2611 = vrot.lane.b32.xlu0 %v2485, 16
  %v2612 = vpop.permute.xlu0 %2611
  %2613 = vrot.lane.b32.xlu0 %v2474, 16
  %v2614 = vpop.permute.xlu0 %2613
  %2615 = vrot.lane.b32.xlu0 %v2478, 16
  %v2616 = vpop.permute.xlu0 %2615
  %2617 = vrot.lane.b32.xlu0 %v2482, 16
  %v2618 = vpop.permute.xlu0 %2617
  %2619 = vrot.lane.b32.xlu0 %v2486, 16
  %v2620 = vpop.permute.xlu0 %2619
  %v2621 = vsel %vm135, %v2606, %v2614
  %v2622 = vsel %vm135, %v2608, %v2616
  %v2623 = vsel %vm135, %v2610, %v2618
  %v2624 = vsel %vm135, %v2612, %v2620
  %v2625 = vsel %vm135, %v2598, %v2606
  %v2626 = vsel %vm135, %v2600, %v2608
  %v2627 = vsel %vm135, %v2602, %v2610
  %v2628 = vsel %vm135, %v2604, %v2612
  %v2629 = vsel %vm135, %v2590, %v2598
  %v2630 = vsel %vm135, %v2592, %v2600
  %v2631 = vsel %vm135, %v2594, %v2602
  %v2632 = vsel %vm135, %v2596, %v2604
  %v2633 = vsel %vm135, %v2614, %v2590
  %v2634 = vsel %vm135, %v2616, %v2592
  %v2635 = vsel %vm135, %v2618, %v2594
  %v2636 = vsel %vm135, %v2620, %v2596
  %v2637 = vld [vmem:[%s144] ss:$8 sm:$0xf]
  %v2639 = vlaneseq
  %v2640 = vshrl.u32 %v2639, 7
  %v2641 = vsub.s32 0, %v2640
  %v2642 = vrot.slane %v2637, %v2641
  %v2643 = vlaneseq
  %v2644 = vshrl.u32 %v2643, 7
  %v2645 = vsub.s32 1, %v2644
  %v2646 = vrot.slane %v2637, %v2645
  %v2647 = vlaneseq
  %v2648 = vshrl.u32 %v2647, 7
  %v2649 = vsub.s32 2, %v2648
  %v2650 = vrot.slane %v2637, %v2649
  %v2651 = vlaneseq
  %v2652 = vshrl.u32 %v2651, 7
  %v2653 = vsub.s32 3, %v2652
  %v2654 = vrot.slane %v2637, %v2653
  %v2659 = vmul.f32 %v2633, %v2642
  %v2660 = vmul.f32 %v2629, %v2646
  %v2661 = vmul.f32 %v2625, %v2650
  %v2662 = vmul.f32 %v2621, %v2654
  %v2663 = vmul.f32 %v2634, %v2642
  %v2664 = vmul.f32 %v2630, %v2646
  %v2665 = vmul.f32 %v2626, %v2650
  %v2666 = vmul.f32 %v2622, %v2654
  %v2667 = vmul.f32 %v2635, %v2642
  %v2668 = vmul.f32 %v2631, %v2646
  %v2669 = vmul.f32 %v2627, %v2650
  %v2670 = vmul.f32 %v2623, %v2654
  %v2671 = vmul.f32 %v2636, %v2642
  %v2672 = vmul.f32 %v2632, %v2646
  %v2673 = vmul.f32 %v2628, %v2650
  %v2674 = vmul.f32 %v2624, %v2654
  %v2675 = vpack.c.bf16 %v2663, %v2659
  %v2676 = vpack.c.bf16 %v2664, %v2660
  %v2677 = vpack.c.bf16 %v2665, %v2661
  %v2678 = vpack.c.bf16 %v2666, %v2662
  %v2679 = vpack.c.bf16 %v2671, %v2667
  %v2680 = vpack.c.bf16 %v2672, %v2668
  %v2681 = vpack.c.bf16 %v2673, %v2669
  %v2682 = vpack.c.bf16 %v2674, %v2670
  %2683 = vst [vmem:[#allocation3 + $0x40] sm:$0xff] %v2675
  %2684 = vst [vmem:[#allocation3 + $0x48] sm:$0xff] %v2676
  %2685 = vst [vmem:[#allocation3 + $0x50] sm:$0xff] %v2677
  %2686 = vst [vmem:[#allocation3 + $0x58] sm:$0xff] %v2678
  %2687 = vst [vmem:[#allocation3 + $0x60] sm:$0xff] %v2679
  %2688 = vst [vmem:[#allocation3 + $0x68] sm:$0xff] %v2680
  %2689 = vst [vmem:[#allocation3 + $0x70] sm:$0xff] %v2681
  %2690 = vst [vmem:[#allocation3 + $0x78] sm:$0xff] %v2682
  %2691 = vrot.lane.b32.xlu0 %v2471, 15
  %v2692 = vpop.permute.xlu0 %2691
  %2693 = vrot.lane.b32.xlu0 %v2475, 15
  %v2694 = vpop.permute.xlu0 %2693
  %2695 = vrot.lane.b32.xlu0 %v2479, 15
  %v2696 = vpop.permute.xlu0 %2695
  %2697 = vrot.lane.b32.xlu0 %v2483, 15
  %v2698 = vpop.permute.xlu0 %2697
  %2699 = vrot.lane.b32.xlu0 %v2472, 15
  %v2700 = vpop.permute.xlu0 %2699
  %2701 = vrot.lane.b32.xlu0 %v2476, 15
  %v2702 = vpop.permute.xlu0 %2701
  %2703 = vrot.lane.b32.xlu0 %v2480, 15
  %v2704 = vpop.permute.xlu0 %2703
  %2705 = vrot.lane.b32.xlu0 %v2484, 15
  %v2706 = vpop.permute.xlu0 %2705
  %2707 = vrot.lane.b32.xlu0 %v2473, 15
  %v2708 = vpop.permute.xlu0 %2707
  %2709 = vrot.lane.b32.xlu0 %v2477, 15
  %v2710 = vpop.permute.xlu0 %2709
  %2711 = vrot.lane.b32.xlu0 %v2481, 15
  %v2712 = vpop.permute.xlu0 %2711
  %2713 = vrot.lane.b32.xlu0 %v2485, 15
  %v2714 = vpop.permute.xlu0 %2713
  %2715 = vrot.lane.b32.xlu0 %v2474, 15
  %v2716 = vpop.permute.xlu0 %2715
  %2717 = vrot.lane.b32.xlu0 %v2478, 15
  %v2718 = vpop.permute.xlu0 %2717
  %2719 = vrot.lane.b32.xlu0 %v2482, 15
  %v2720 = vpop.permute.xlu0 %2719
  %2721 = vrot.lane.b32.xlu0 %v2486, 15
  %v2722 = vpop.permute.xlu0 %2721
  %v2723 = vsel %vm199, %v2708, %v2716
  %v2724 = vsel %vm199, %v2710, %v2718
  %v2725 = vsel %vm199, %v2712, %v2720
  %v2726 = vsel %vm199, %v2714, %v2722
  %v2727 = vsel %vm199, %v2700, %v2708
  %v2728 = vsel %vm199, %v2702, %v2710
  %v2729 = vsel %vm199, %v2704, %v2712
  %v2730 = vsel %vm199, %v2706, %v2714
  %v2731 = vsel %vm199, %v2692, %v2700
  %v2732 = vsel %vm199, %v2694, %v2702
  %v2733 = vsel %vm199, %v2696, %v2704
  %v2734 = vsel %vm199, %v2698, %v2706
  %v2735 = vsel %vm199, %v2716, %v2692
  %v2736 = vsel %vm199, %v2718, %v2694
  %v2737 = vsel %vm199, %v2720, %v2696
  %v2738 = vsel %vm199, %v2722, %v2698
  %v2739 = vld [vmem:[%s208] ss:$8 sm:$0xf]
  %v2741 = vlaneseq
  %v2742 = vshrl.u32 %v2741, 7
  %v2743 = vsub.s32 0, %v2742
  %v2744 = vrot.slane %v2739, %v2743
  %v2745 = vlaneseq
  %v2746 = vshrl.u32 %v2745, 7
  %v2747 = vsub.s32 1, %v2746
  %v2748 = vrot.slane %v2739, %v2747
  %v2749 = vlaneseq
  %v2750 = vshrl.u32 %v2749, 7
  %v2751 = vsub.s32 2, %v2750
  %v2752 = vrot.slane %v2739, %v2751
  %v2753 = vlaneseq
  %v2754 = vshrl.u32 %v2753, 7
  %v2755 = vsub.s32 3, %v2754
  %v2756 = vrot.slane %v2739, %v2755
  %v2761 = vmul.f32 %v2735, %v2744
  %v2762 = vmul.f32 %v2731, %v2748
  %v2763 = vmul.f32 %v2727, %v2752
  %v2764 = vmul.f32 %v2723, %v2756
  %v2765 = vmul.f32 %v2736, %v2744
  %v2766 = vmul.f32 %v2732, %v2748
  %v2767 = vmul.f32 %v2728, %v2752
  %v2768 = vmul.f32 %v2724, %v2756
  %v2769 = vmul.f32 %v2737, %v2744
  %v2770 = vmul.f32 %v2733, %v2748
  %v2771 = vmul.f32 %v2729, %v2752
  %v2772 = vmul.f32 %v2725, %v2756
  %v2773 = vmul.f32 %v2738, %v2744
  %v2774 = vmul.f32 %v2734, %v2748
  %v2775 = vmul.f32 %v2730, %v2752
  %v2776 = vmul.f32 %v2726, %v2756
  %v2777 = vpack.c.bf16 %v2765, %v2761
  %v2778 = vpack.c.bf16 %v2766, %v2762
  %v2779 = vpack.c.bf16 %v2767, %v2763
  %v2780 = vpack.c.bf16 %v2768, %v2764
  %v2781 = vpack.c.bf16 %v2773, %v2769
  %v2782 = vpack.c.bf16 %v2774, %v2770
  %v2783 = vpack.c.bf16 %v2775, %v2771
  %v2784 = vpack.c.bf16 %v2776, %v2772
  %2785 = vst [vmem:[#allocation3 + $0x80] sm:$0xff] %v2777
  %2786 = vst [vmem:[#allocation3 + $0x88] sm:$0xff] %v2778
  %2787 = vst [vmem:[#allocation3 + $0x90] sm:$0xff] %v2779
  %2788 = vst [vmem:[#allocation3 + $0x98] sm:$0xff] %v2780
  %2789 = vst [vmem:[#allocation3 + $0xa0] sm:$0xff] %v2781
  %2790 = vst [vmem:[#allocation3 + $0xa8] sm:$0xff] %v2782
  %2791 = vst [vmem:[#allocation3 + $0xb0] sm:$0xff] %v2783
  %2792 = vst [vmem:[#allocation3 + $0xb8] sm:$0xff] %v2784
  %2793 = vrot.lane.b32.xlu0 %v2471, 1
  %v2794 = vpop.permute.xlu0 %2793
  %2795 = vrot.lane.b32.xlu0 %v2475, 1
  %v2796 = vpop.permute.xlu0 %2795
  %2797 = vrot.lane.b32.xlu0 %v2479, 1
  %v2798 = vpop.permute.xlu0 %2797
  %2799 = vrot.lane.b32.xlu0 %v2483, 1
  %v2800 = vpop.permute.xlu0 %2799
  %2801 = vrot.lane.b32.xlu0 %v2472, 1
  %v2802 = vpop.permute.xlu0 %2801
  %2803 = vrot.lane.b32.xlu0 %v2476, 1
  %v2804 = vpop.permute.xlu0 %2803
  %2805 = vrot.lane.b32.xlu0 %v2480, 1
  %v2806 = vpop.permute.xlu0 %2805
  %2807 = vrot.lane.b32.xlu0 %v2484, 1
  %v2808 = vpop.permute.xlu0 %2807
  %2809 = vrot.lane.b32.xlu0 %v2473, 1
  %v2810 = vpop.permute.xlu0 %2809
  %2811 = vrot.lane.b32.xlu0 %v2477, 1
  %v2812 = vpop.permute.xlu0 %2811
  %2813 = vrot.lane.b32.xlu0 %v2481, 1
  %v2814 = vpop.permute.xlu0 %2813
  %2815 = vrot.lane.b32.xlu0 %v2485, 1
  %v2816 = vpop.permute.xlu0 %2815
  %2817 = vrot.lane.b32.xlu0 %v2474, 1
  %v2818 = vpop.permute.xlu0 %2817
  %2819 = vrot.lane.b32.xlu0 %v2478, 1
  %v2820 = vpop.permute.xlu0 %2819
  %2821 = vrot.lane.b32.xlu0 %v2482, 1
  %v2822 = vpop.permute.xlu0 %2821
  %2823 = vrot.lane.b32.xlu0 %v2486, 1
  %v2824 = vpop.permute.xlu0 %2823
  %v2825 = vsel %vm263, %v2810, %v2818
  %v2826 = vsel %vm263, %v2812, %v2820
  %v2827 = vsel %vm263, %v2814, %v2822
  %v2828 = vsel %vm263, %v2816, %v2824
  %v2829 = vsel %vm263, %v2802, %v2810
  %v2830 = vsel %vm263, %v2804, %v2812
  %v2831 = vsel %vm263, %v2806, %v2814
  %v2832 = vsel %vm263, %v2808, %v2816
  %v2833 = vsel %vm263, %v2794, %v2802
  %v2834 = vsel %vm263, %v2796, %v2804
  %v2835 = vsel %vm263, %v2798, %v2806
  %v2836 = vsel %vm263, %v2800, %v2808
  %v2837 = vsel %vm263, %v2818, %v2794
  %v2838 = vsel %vm263, %v2820, %v2796
  %v2839 = vsel %vm263, %v2822, %v2798
  %v2840 = vsel %vm263, %v2824, %v2800
  %v2841 = vld [vmem:[%s272] ss:$8 sm:$0xf]
  %v2843 = vlaneseq
  %v2844 = vshrl.u32 %v2843, 7
  %v2845 = vsub.s32 0, %v2844
  %v2846 = vrot.slane %v2841, %v2845
  %v2847 = vlaneseq
  %v2848 = vshrl.u32 %v2847, 7
  %v2849 = vsub.s32 1, %v2848
  %v2850 = vrot.slane %v2841, %v2849
  %v2851 = vlaneseq
  %v2852 = vshrl.u32 %v2851, 7
  %v2853 = vsub.s32 2, %v2852
  %v2854 = vrot.slane %v2841, %v2853
  %v2855 = vlaneseq
  %v2856 = vshrl.u32 %v2855, 7
  %v2857 = vsub.s32 3, %v2856
  %v2858 = vrot.slane %v2841, %v2857
  %v2863 = vmul.f32 %v2837, %v2846
  %v2864 = vmul.f32 %v2833, %v2850
  %v2865 = vmul.f32 %v2829, %v2854
  %v2866 = vmul.f32 %v2825, %v2858
  %v2867 = vmul.f32 %v2838, %v2846
  %v2868 = vmul.f32 %v2834, %v2850
  %v2869 = vmul.f32 %v2830, %v2854
  %v2870 = vmul.f32 %v2826, %v2858
  %v2871 = vmul.f32 %v2839, %v2846
  %v2872 = vmul.f32 %v2835, %v2850
  %v2873 = vmul.f32 %v2831, %v2854
  %v2874 = vmul.f32 %v2827, %v2858
  %v2875 = vmul.f32 %v2840, %v2846
  %v2876 = vmul.f32 %v2836, %v2850
  %v2877 = vmul.f32 %v2832, %v2854
  %v2878 = vmul.f32 %v2828, %v2858
  %v2879 = vpack.c.bf16 %v2867, %v2863
  %v2880 = vpack.c.bf16 %v2868, %v2864
  %v2881 = vpack.c.bf16 %v2869, %v2865
  %v2882 = vpack.c.bf16 %v2870, %v2866
  %v2883 = vpack.c.bf16 %v2875, %v2871
  %v2884 = vpack.c.bf16 %v2876, %v2872
  %v2885 = vpack.c.bf16 %v2877, %v2873
  %v2886 = vpack.c.bf16 %v2878, %v2874
  %2887 = vst [vmem:[#allocation3 + $0xc0] sm:$0xff] %v2879
  %2888 = vst [vmem:[#allocation3 + $0xc8] sm:$0xff] %v2880
  %2889 = vst [vmem:[#allocation3 + $0xd0] sm:$0xff] %v2881
  %2890 = vst [vmem:[#allocation3 + $0xd8] sm:$0xff] %v2882
  %2891 = vst [vmem:[#allocation3 + $0xe0] sm:$0xff] %v2883
  %2892 = vst [vmem:[#allocation3 + $0xe8] sm:$0xff] %v2884
  %2893 = vst [vmem:[#allocation3 + $0xf0] sm:$0xff] %v2885
  %2894 = vst [vmem:[#allocation3 + $0xf8] sm:$0xff] %v2886
  %v2895 = vpack.c.bf16 %v2475, %v2471
  %v2896 = vpack.c.bf16 %v2476, %v2472
  %v2897 = vpack.c.bf16 %v2477, %v2473
  %v2898 = vpack.c.bf16 %v2478, %v2474
  %v2899 = vpack.c.bf16 %v2483, %v2479
  %v2900 = vpack.c.bf16 %v2484, %v2480
  %v2901 = vpack.c.bf16 %v2485, %v2481
  %v2902 = vpack.c.bf16 %v2486, %v2482
  %2903 = vst [vmem:[#allocation3 + $0x100] sm:$0xff] %v2895
  %2904 = vst [vmem:[#allocation3 + $0x108] sm:$0xff] %v2896
  %2905 = vst [vmem:[#allocation3 + $0x110] sm:$0xff] %v2897
  %2906 = vst [vmem:[#allocation3 + $0x118] sm:$0xff] %v2898
  %2907 = vst [vmem:[#allocation3 + $0x120] sm:$0xff] %v2899
  %2908 = vst [vmem:[#allocation3 + $0x128] sm:$0xff] %v2900
  %2909 = vst [vmem:[#allocation3 + $0x130] sm:$0xff] %v2901
  %2910 = vst [vmem:[#allocation3 + $0x138] sm:$0xff] %v2902
  %2911 = vrot.lane.b32.xlu0 %v2471, 127
  %v2912 = vpop.permute.xlu0 %2911
  %2913 = vrot.lane.b32.xlu0 %v2475, 127
  %v2914 = vpop.permute.xlu0 %2913
  %2915 = vrot.lane.b32.xlu0 %v2479, 127
  %v2916 = vpop.permute.xlu0 %2915
  %2917 = vrot.lane.b32.xlu0 %v2483, 127
  %v2918 = vpop.permute.xlu0 %2917
  %2919 = vrot.lane.b32.xlu0 %v2472, 127
  %v2920 = vpop.permute.xlu0 %2919
  %2921 = vrot.lane.b32.xlu0 %v2476, 127
  %v2922 = vpop.permute.xlu0 %2921
  %2923 = vrot.lane.b32.xlu0 %v2480, 127
  %v2924 = vpop.permute.xlu0 %2923
  %2925 = vrot.lane.b32.xlu0 %v2484, 127
  %v2926 = vpop.permute.xlu0 %2925
  %2927 = vrot.lane.b32.xlu0 %v2473, 127
  %v2928 = vpop.permute.xlu0 %2927
  %2929 = vrot.lane.b32.xlu0 %v2477, 127
  %v2930 = vpop.permute.xlu0 %2929
  %2931 = vrot.lane.b32.xlu0 %v2481, 127
  %v2932 = vpop.permute.xlu0 %2931
  %2933 = vrot.lane.b32.xlu0 %v2485, 127
  %v2934 = vpop.permute.xlu0 %2933
  %2935 = vrot.lane.b32.xlu0 %v2474, 127
  %v2936 = vpop.permute.xlu0 %2935
  %2937 = vrot.lane.b32.xlu0 %v2478, 127
  %v2938 = vpop.permute.xlu0 %2937
  %2939 = vrot.lane.b32.xlu0 %v2482, 127
  %v2940 = vpop.permute.xlu0 %2939
  %2941 = vrot.lane.b32.xlu0 %v2486, 127
  %v2942 = vpop.permute.xlu0 %2941
  %v2943 = vsel %vm335, %v2928, %v2936
  %v2944 = vsel %vm335, %v2930, %v2938
  %v2945 = vsel %vm335, %v2932, %v2940
  %v2946 = vsel %vm335, %v2934, %v2942
  %v2947 = vsel %vm335, %v2920, %v2928
  %v2948 = vsel %vm335, %v2922, %v2930
  %v2949 = vsel %vm335, %v2924, %v2932
  %v2950 = vsel %vm335, %v2926, %v2934
  %v2951 = vsel %vm335, %v2912, %v2920
  %v2952 = vsel %vm335, %v2914, %v2922
  %v2953 = vsel %vm335, %v2916, %v2924
  %v2954 = vsel %vm335, %v2918, %v2926
  %v2955 = vsel %vm335, %v2936, %v2912
  %v2956 = vsel %vm335, %v2938, %v2914
  %v2957 = vsel %vm335, %v2940, %v2916
  %v2958 = vsel %vm335, %v2942, %v2918
  %v2959 = vld [vmem:[%s344] ss:$8 sm:$0xf]
  %v2961 = vlaneseq
  %v2962 = vshrl.u32 %v2961, 7
  %v2963 = vsub.s32 0, %v2962
  %v2964 = vrot.slane %v2959, %v2963
  %v2965 = vlaneseq
  %v2966 = vshrl.u32 %v2965, 7
  %v2967 = vsub.s32 1, %v2966
  %v2968 = vrot.slane %v2959, %v2967
  %v2969 = vlaneseq
  %v2970 = vshrl.u32 %v2969, 7
  %v2971 = vsub.s32 2, %v2970
  %v2972 = vrot.slane %v2959, %v2971
  %v2973 = vlaneseq
  %v2974 = vshrl.u32 %v2973, 7
  %v2975 = vsub.s32 3, %v2974
  %v2976 = vrot.slane %v2959, %v2975
  %v2981 = vmul.f32 %v2951, %v2964
  %v2982 = vmul.f32 %v2947, %v2968
  %v2983 = vmul.f32 %v2943, %v2972
  %v2984 = vmul.f32 %v2955, %v2976
  %v2985 = vmul.f32 %v2952, %v2964
  %v2986 = vmul.f32 %v2948, %v2968
  %v2987 = vmul.f32 %v2944, %v2972
  %v2988 = vmul.f32 %v2956, %v2976
  %v2989 = vmul.f32 %v2953, %v2964
  %v2990 = vmul.f32 %v2949, %v2968
  %v2991 = vmul.f32 %v2945, %v2972
  %v2992 = vmul.f32 %v2957, %v2976
  %v2993 = vmul.f32 %v2954, %v2964
  %v2994 = vmul.f32 %v2950, %v2968
  %v2995 = vmul.f32 %v2946, %v2972
  %v2996 = vmul.f32 %v2958, %v2976
  %v2997 = vpack.c.bf16 %v2985, %v2981
  %v2998 = vpack.c.bf16 %v2986, %v2982
  %v2999 = vpack.c.bf16 %v2987, %v2983
  %v3000 = vpack.c.bf16 %v2988, %v2984
  %v3001 = vpack.c.bf16 %v2993, %v2989
  %v3002 = vpack.c.bf16 %v2994, %v2990
  %v3003 = vpack.c.bf16 %v2995, %v2991
  %v3004 = vpack.c.bf16 %v2996, %v2992
  %3005 = vst [vmem:[#allocation3 + $0x140] sm:$0xff] %v2997
  %3006 = vst [vmem:[#allocation3 + $0x148] sm:$0xff] %v2998
  %3007 = vst [vmem:[#allocation3 + $0x150] sm:$0xff] %v2999
  %3008 = vst [vmem:[#allocation3 + $0x158] sm:$0xff] %v3000
  %3009 = vst [vmem:[#allocation3 + $0x160] sm:$0xff] %v3001
  %3010 = vst [vmem:[#allocation3 + $0x168] sm:$0xff] %v3002
  %3011 = vst [vmem:[#allocation3 + $0x170] sm:$0xff] %v3003
  %3012 = vst [vmem:[#allocation3 + $0x178] sm:$0xff] %v3004
  %3013 = vrot.lane.b32.xlu0 %v2471, 113
  %v3014 = vpop.permute.xlu0 %3013
  %3015 = vrot.lane.b32.xlu0 %v2475, 113
  %v3016 = vpop.permute.xlu0 %3015
  %3017 = vrot.lane.b32.xlu0 %v2479, 113
  %v3018 = vpop.permute.xlu0 %3017
  %3019 = vrot.lane.b32.xlu0 %v2483, 113
  %v3020 = vpop.permute.xlu0 %3019
  %3021 = vrot.lane.b32.xlu0 %v2472, 113
  %v3022 = vpop.permute.xlu0 %3021
  %3023 = vrot.lane.b32.xlu0 %v2476, 113
  %v3024 = vpop.permute.xlu0 %3023
  %3025 = vrot.lane.b32.xlu0 %v2480, 113
  %v3026 = vpop.permute.xlu0 %3025
  %3027 = vrot.lane.b32.xlu0 %v2484, 113
  %v3028 = vpop.permute.xlu0 %3027
  %3029 = vrot.lane.b32.xlu0 %v2473, 113
  %v3030 = vpop.permute.xlu0 %3029
  %3031 = vrot.lane.b32.xlu0 %v2477, 113
  %v3032 = vpop.permute.xlu0 %3031
  %3033 = vrot.lane.b32.xlu0 %v2481, 113
  %v3034 = vpop.permute.xlu0 %3033
  %3035 = vrot.lane.b32.xlu0 %v2485, 113
  %v3036 = vpop.permute.xlu0 %3035
  %3037 = vrot.lane.b32.xlu0 %v2474, 113
  %v3038 = vpop.permute.xlu0 %3037
  %3039 = vrot.lane.b32.xlu0 %v2478, 113
  %v3040 = vpop.permute.xlu0 %3039
  %3041 = vrot.lane.b32.xlu0 %v2482, 113
  %v3042 = vpop.permute.xlu0 %3041
  %3043 = vrot.lane.b32.xlu0 %v2486, 113
  %v3044 = vpop.permute.xlu0 %3043
  %v3045 = vsel %vm399, %v3030, %v3038
  %v3046 = vsel %vm399, %v3032, %v3040
  %v3047 = vsel %vm399, %v3034, %v3042
  %v3048 = vsel %vm399, %v3036, %v3044
  %v3049 = vsel %vm399, %v3022, %v3030
  %v3050 = vsel %vm399, %v3024, %v3032
  %v3051 = vsel %vm399, %v3026, %v3034
  %v3052 = vsel %vm399, %v3028, %v3036
  %v3053 = vsel %vm399, %v3014, %v3022
  %v3054 = vsel %vm399, %v3016, %v3024
  %v3055 = vsel %vm399, %v3018, %v3026
  %v3056 = vsel %vm399, %v3020, %v3028
  %v3057 = vsel %vm399, %v3038, %v3014
  %v3058 = vsel %vm399, %v3040, %v3016
  %v3059 = vsel %vm399, %v3042, %v3018
  %v3060 = vsel %vm399, %v3044, %v3020
  %v3061 = vld [vmem:[%s408] ss:$8 sm:$0xf]
  %v3063 = vlaneseq
  %v3064 = vshrl.u32 %v3063, 7
  %v3065 = vsub.s32 0, %v3064
  %v3066 = vrot.slane %v3061, %v3065
  %v3067 = vlaneseq
  %v3068 = vshrl.u32 %v3067, 7
  %v3069 = vsub.s32 1, %v3068
  %v3070 = vrot.slane %v3061, %v3069
  %v3071 = vlaneseq
  %v3072 = vshrl.u32 %v3071, 7
  %v3073 = vsub.s32 2, %v3072
  %v3074 = vrot.slane %v3061, %v3073
  %v3075 = vlaneseq
  %v3076 = vshrl.u32 %v3075, 7
  %v3077 = vsub.s32 3, %v3076
  %v3078 = vrot.slane %v3061, %v3077
  %v3083 = vmul.f32 %v3053, %v3066
  %v3084 = vmul.f32 %v3049, %v3070
  %v3085 = vmul.f32 %v3045, %v3074
  %v3086 = vmul.f32 %v3057, %v3078
  %v3087 = vmul.f32 %v3054, %v3066
  %v3088 = vmul.f32 %v3050, %v3070
  %v3089 = vmul.f32 %v3046, %v3074
  %v3090 = vmul.f32 %v3058, %v3078
  %v3091 = vmul.f32 %v3055, %v3066
  %v3092 = vmul.f32 %v3051, %v3070
  %v3093 = vmul.f32 %v3047, %v3074
  %v3094 = vmul.f32 %v3059, %v3078
  %v3095 = vmul.f32 %v3056, %v3066
  %v3096 = vmul.f32 %v3052, %v3070
  %v3097 = vmul.f32 %v3048, %v3074
  %v3098 = vmul.f32 %v3060, %v3078
  %v3099 = vpack.c.bf16 %v3087, %v3083
  %v3100 = vpack.c.bf16 %v3088, %v3084
  %v3101 = vpack.c.bf16 %v3089, %v3085
  %v3102 = vpack.c.bf16 %v3090, %v3086
  %v3103 = vpack.c.bf16 %v3095, %v3091
  %v3104 = vpack.c.bf16 %v3096, %v3092
  %v3105 = vpack.c.bf16 %v3097, %v3093
  %v3106 = vpack.c.bf16 %v3098, %v3094
  %3107 = vst [vmem:[#allocation3 + $0x180] sm:$0xff] %v3099
  %3108 = vst [vmem:[#allocation3 + $0x188] sm:$0xff] %v3100
  %3109 = vst [vmem:[#allocation3 + $0x190] sm:$0xff] %v3101
  %3110 = vst [vmem:[#allocation3 + $0x198] sm:$0xff] %v3102
  %3111 = vst [vmem:[#allocation3 + $0x1a0] sm:$0xff] %v3103
  %3112 = vst [vmem:[#allocation3 + $0x1a8] sm:$0xff] %v3104
  %3113 = vst [vmem:[#allocation3 + $0x1b0] sm:$0xff] %v3105
  %3114 = vst [vmem:[#allocation3 + $0x1b8] sm:$0xff] %v3106
  %3115 = vrot.lane.b32.xlu0 %v2471, 112
  %v3116 = vpop.permute.xlu0 %3115
  %3117 = vrot.lane.b32.xlu0 %v2475, 112
  %v3118 = vpop.permute.xlu0 %3117
  %3119 = vrot.lane.b32.xlu0 %v2479, 112
  %v3120 = vpop.permute.xlu0 %3119
  %3121 = vrot.lane.b32.xlu0 %v2483, 112
  %v3122 = vpop.permute.xlu0 %3121
  %3123 = vrot.lane.b32.xlu0 %v2472, 112
  %v3124 = vpop.permute.xlu0 %3123
  %3125 = vrot.lane.b32.xlu0 %v2476, 112
  %v3126 = vpop.permute.xlu0 %3125
  %3127 = vrot.lane.b32.xlu0 %v2480, 112
  %v3128 = vpop.permute.xlu0 %3127
  %3129 = vrot.lane.b32.xlu0 %v2484, 112
  %v3130 = vpop.permute.xlu0 %3129
  %3131 = vrot.lane.b32.xlu0 %v2473, 112
  %v3132 = vpop.permute.xlu0 %3131
  %3133 = vrot.lane.b32.xlu0 %v2477, 112
  %v3134 = vpop.permute.xlu0 %3133
  %3135 = vrot.lane.b32.xlu0 %v2481, 112
  %v3136 = vpop.permute.xlu0 %3135
  %3137 = vrot.lane.b32.xlu0 %v2485, 112
  %v3138 = vpop.permute.xlu0 %3137
  %3139 = vrot.lane.b32.xlu0 %v2474, 112
  %v3140 = vpop.permute.xlu0 %3139
  %3141 = vrot.lane.b32.xlu0 %v2478, 112
  %v3142 = vpop.permute.xlu0 %3141
  %3143 = vrot.lane.b32.xlu0 %v2482, 112
  %v3144 = vpop.permute.xlu0 %3143
  %3145 = vrot.lane.b32.xlu0 %v2486, 112
  %v3146 = vpop.permute.xlu0 %3145
  %v3147 = vsel %vm463, %v3132, %v3140
  %v3148 = vsel %vm463, %v3134, %v3142
  %v3149 = vsel %vm463, %v3136, %v3144
  %v3150 = vsel %vm463, %v3138, %v3146
  %v3151 = vsel %vm463, %v3124, %v3132
  %v3152 = vsel %vm463, %v3126, %v3134
  %v3153 = vsel %vm463, %v3128, %v3136
  %v3154 = vsel %vm463, %v3130, %v3138
  %v3155 = vsel %vm463, %v3116, %v3124
  %v3156 = vsel %vm463, %v3118, %v3126
  %v3157 = vsel %vm463, %v3120, %v3128
  %v3158 = vsel %vm463, %v3122, %v3130
  %v3159 = vsel %vm463, %v3140, %v3116
  %v3160 = vsel %vm463, %v3142, %v3118
  %v3161 = vsel %vm463, %v3144, %v3120
  %v3162 = vsel %vm463, %v3146, %v3122
  %v3163 = vld [vmem:[%s472] ss:$8 sm:$0xf]
  %v3165 = vlaneseq
  %v3166 = vshrl.u32 %v3165, 7
  %v3167 = vsub.s32 0, %v3166
  %v3168 = vrot.slane %v3163, %v3167
  %v3169 = vlaneseq
  %v3170 = vshrl.u32 %v3169, 7
  %v3171 = vsub.s32 1, %v3170
  %v3172 = vrot.slane %v3163, %v3171
  %v3173 = vlaneseq
  %v3174 = vshrl.u32 %v3173, 7
  %v3175 = vsub.s32 2, %v3174
  %v3176 = vrot.slane %v3163, %v3175
  %v3177 = vlaneseq
  %v3178 = vshrl.u32 %v3177, 7
  %v3179 = vsub.s32 3, %v3178
  %v3180 = vrot.slane %v3163, %v3179
  %v3185 = vmul.f32 %v3155, %v3168
  %v3186 = vmul.f32 %v3151, %v3172
  %v3187 = vmul.f32 %v3147, %v3176
  %v3188 = vmul.f32 %v3159, %v3180
  %v3189 = vmul.f32 %v3156, %v3168
  %v3190 = vmul.f32 %v3152, %v3172
  %v3191 = vmul.f32 %v3148, %v3176
  %v3192 = vmul.f32 %v3160, %v3180
  %v3193 = vmul.f32 %v3157, %v3168
  %v3194 = vmul.f32 %v3153, %v3172
  %v3195 = vmul.f32 %v3149, %v3176
  %v3196 = vmul.f32 %v3161, %v3180
  %v3197 = vmul.f32 %v3158, %v3168
  %v3198 = vmul.f32 %v3154, %v3172
  %v3199 = vmul.f32 %v3150, %v3176
  %v3200 = vmul.f32 %v3162, %v3180
  %v3201 = vpack.c.bf16 %v3189, %v3185
  %v3202 = vpack.c.bf16 %v3190, %v3186
  %v3203 = vpack.c.bf16 %v3191, %v3187
  %v3204 = vpack.c.bf16 %v3192, %v3188
  %v3205 = vpack.c.bf16 %v3197, %v3193
  %v3206 = vpack.c.bf16 %v3198, %v3194
  %v3207 = vpack.c.bf16 %v3199, %v3195
  %v3208 = vpack.c.bf16 %v3200, %v3196
  %3209 = vst [vmem:[#allocation3 + $0x1c0] sm:$0xff] %v3201
  %3210 = vst [vmem:[#allocation3 + $0x1c8] sm:$0xff] %v3202
  %3211 = vst [vmem:[#allocation3 + $0x1d0] sm:$0xff] %v3203
  %3212 = vst [vmem:[#allocation3 + $0x1d8] sm:$0xff] %v3204
  %3213 = vst [vmem:[#allocation3 + $0x1e0] sm:$0xff] %v3205
  %3214 = vst [vmem:[#allocation3 + $0x1e8] sm:$0xff] %v3206
  %3215 = vst [vmem:[#allocation3 + $0x1f0] sm:$0xff] %v3207
  %3216 = vst [vmem:[#allocation3 + $0x1f8] sm:$0xff] %v3208
  %3217 = vrot.lane.b32.xlu0 %v2471, 111
  %v3218 = vpop.permute.xlu0 %3217
  %3219 = vrot.lane.b32.xlu0 %v2475, 111
  %v3220 = vpop.permute.xlu0 %3219
  %3221 = vrot.lane.b32.xlu0 %v2479, 111
  %v3222 = vpop.permute.xlu0 %3221
  %3223 = vrot.lane.b32.xlu0 %v2483, 111
  %v3224 = vpop.permute.xlu0 %3223
  %3225 = vrot.lane.b32.xlu0 %v2472, 111
  %v3226 = vpop.permute.xlu0 %3225
  %3227 = vrot.lane.b32.xlu0 %v2476, 111
  %v3228 = vpop.permute.xlu0 %3227
  %3229 = vrot.lane.b32.xlu0 %v2480, 111
  %v3230 = vpop.permute.xlu0 %3229
  %3231 = vrot.lane.b32.xlu0 %v2484, 111
  %v3232 = vpop.permute.xlu0 %3231
  %3233 = vrot.lane.b32.xlu0 %v2473, 111
  %v3234 = vpop.permute.xlu0 %3233
  %3235 = vrot.lane.b32.xlu0 %v2477, 111
  %v3236 = vpop.permute.xlu0 %3235
  %3237 = vrot.lane.b32.xlu0 %v2481, 111
  %v3238 = vpop.permute.xlu0 %3237
  %3239 = vrot.lane.b32.xlu0 %v2485, 111
  %v3240 = vpop.permute.xlu0 %3239
  %3241 = vrot.lane.b32.xlu0 %v2474, 111
  %v3242 = vpop.permute.xlu0 %3241
  %3243 = vrot.lane.b32.xlu0 %v2478, 111
  %v3244 = vpop.permute.xlu0 %3243
  %3245 = vrot.lane.b32.xlu0 %v2482, 111
  %v3246 = vpop.permute.xlu0 %3245
  %3247 = vrot.lane.b32.xlu0 %v2486, 111
  %v3248 = vpop.permute.xlu0 %3247
  %v3249 = vsel %vm527, %v3234, %v3242
  %v3250 = vsel %vm527, %v3236, %v3244
  %v3251 = vsel %vm527, %v3238, %v3246
  %v3252 = vsel %vm527, %v3240, %v3248
  %v3253 = vsel %vm527, %v3226, %v3234
  %v3254 = vsel %vm527, %v3228, %v3236
  %v3255 = vsel %vm527, %v3230, %v3238
  %v3256 = vsel %vm527, %v3232, %v3240
  %v3257 = vsel %vm527, %v3218, %v3226
  %v3258 = vsel %vm527, %v3220, %v3228
  %v3259 = vsel %vm527, %v3222, %v3230
  %v3260 = vsel %vm527, %v3224, %v3232
  %v3261 = vsel %vm527, %v3242, %v3218
  %v3262 = vsel %vm527, %v3244, %v3220
  %v3263 = vsel %vm527, %v3246, %v3222
  %v3264 = vsel %vm527, %v3248, %v3224
  %v3265 = vld [vmem:[%s536] ss:$8 sm:$0xf]
  %v3267 = vlaneseq
  %v3268 = vshrl.u32 %v3267, 7
  %v3269 = vsub.s32 0, %v3268
  %v3270 = vrot.slane %v3265, %v3269
  %v3271 = vlaneseq
  %v3272 = vshrl.u32 %v3271, 7
  %v3273 = vsub.s32 1, %v3272
  %v3274 = vrot.slane %v3265, %v3273
  %v3275 = vlaneseq
  %v3276 = vshrl.u32 %v3275, 7
  %v3277 = vsub.s32 2, %v3276
  %v3278 = vrot.slane %v3265, %v3277
  %v3279 = vlaneseq
  %v3280 = vshrl.u32 %v3279, 7
  %v3281 = vsub.s32 3, %v3280
  %v3282 = vrot.slane %v3265, %v3281
  %v3287 = vmul.f32 %v3257, %v3270
  %v3288 = vmul.f32 %v3253, %v3274
  %v3289 = vmul.f32 %v3249, %v3278
  %v3290 = vmul.f32 %v3261, %v3282
  %v3291 = vmul.f32 %v3258, %v3270
  %v3292 = vmul.f32 %v3254, %v3274
  %v3293 = vmul.f32 %v3250, %v3278
  %v3294 = vmul.f32 %v3262, %v3282
  %v3295 = vmul.f32 %v3259, %v3270
  %v3296 = vmul.f32 %v3255, %v3274
  %v3297 = vmul.f32 %v3251, %v3278
  %v3298 = vmul.f32 %v3263, %v3282
  %v3299 = vmul.f32 %v3260, %v3270
  %v3300 = vmul.f32 %v3256, %v3274
  %v3301 = vmul.f32 %v3252, %v3278
  %v3302 = vmul.f32 %v3264, %v3282
  %v3303 = vpack.c.bf16 %v3291, %v3287
  %v3304 = vpack.c.bf16 %v3292, %v3288
  %v3305 = vpack.c.bf16 %v3293, %v3289
  %v3306 = vpack.c.bf16 %v3294, %v3290
  %v3307 = vpack.c.bf16 %v3299, %v3295
  %v3308 = vpack.c.bf16 %v3300, %v3296
  %v3309 = vpack.c.bf16 %v3301, %v3297
  %v3310 = vpack.c.bf16 %v3302, %v3298
  %3311 = vst [vmem:[#allocation3 + $0x200] sm:$0xff] %v3303
  %3312 = vst [vmem:[#allocation3 + $0x208] sm:$0xff] %v3304
  %3313 = vst [vmem:[#allocation3 + $0x210] sm:$0xff] %v3305
  %3314 = vst [vmem:[#allocation3 + $0x218] sm:$0xff] %v3306
  %3315 = vst [vmem:[#allocation3 + $0x220] sm:$0xff] %v3307
  %3316 = vst [vmem:[#allocation3 + $0x228] sm:$0xff] %v3308
  %3317 = vst [vmem:[#allocation3 + $0x230] sm:$0xff] %v3309
  %3318 = vst [vmem:[#allocation3 + $0x238] sm:$0xff] %v3310
  %v3319 = vld [vmem:[%s5] sm:$0xff]
  %v3320 = vld [vmem:[%s5 + $0x8] sm:$0xf]
  %v3321 = vld [vmem:[%s5 + $0xc] sm:$0xff]
  %v3322 = vld [vmem:[%s5 + $0x14] sm:$0xf]
  %v3323 = vld [vmem:[%s5 + $0x18] sm:$0xff]
  %v3324 = vld [vmem:[%s5 + $0x20] sm:$0xf]
  %v3325 = vld [vmem:[%s5 + $0x24] sm:$0xff]
  %v3326 = vld [vmem:[%s5 + $0x2c] sm:$0xf]
  %v3327 = vld [vmem:[#allocation3] sm:$0xff]
  %v3328 = vld [vmem:[#allocation3 + $0x8] sm:$0xff]
  %v3329 = vld [vmem:[#allocation3 + $0x10] sm:$0xff]
  %v3330 = vld [vmem:[#allocation3 + $0x18] sm:$0xff]
  %v3331 = vld [vmem:[#allocation3 + $0x20] sm:$0xff]
  %v3332 = vld [vmem:[#allocation3 + $0x28] sm:$0xff]
  %v3333 = vld [vmem:[#allocation3 + $0x30] sm:$0xff]
  %v3334 = vld [vmem:[#allocation3 + $0x38] sm:$0xff]
  %v3335 = vld [vmem:[#allocation3 + $0x40] sm:$0xff]
  %v3336 = vld [vmem:[#allocation3 + $0x48] sm:$0xff]
  %v3337 = vld [vmem:[#allocation3 + $0x50] sm:$0xff]
  %v3338 = vld [vmem:[#allocation3 + $0x58] sm:$0xff]
  %v3339 = vld [vmem:[#allocation3 + $0x60] sm:$0xff]
  %v3340 = vld [vmem:[#allocation3 + $0x68] sm:$0xff]
  %v3341 = vld [vmem:[#allocation3 + $0x70] sm:$0xff]
  %v3342 = vld [vmem:[#allocation3 + $0x78] sm:$0xff]
  %v3343 = vld [vmem:[#allocation3 + $0x80] sm:$0xff]
  %v3344 = vld [vmem:[#allocation3 + $0x88] sm:$0xff]
  %v3345 = vld [vmem:[#allocation3 + $0x90] sm:$0xff]
  %v3346 = vld [vmem:[#allocation3 + $0x98] sm:$0xff]
  %v3347 = vld [vmem:[#allocation3 + $0xa0] sm:$0xff]
  %v3348 = vld [vmem:[#allocation3 + $0xa8] sm:$0xff]
  %v3349 = vld [vmem:[#allocation3 + $0xb0] sm:$0xff]
  %v3350 = vld [vmem:[#allocation3 + $0xb8] sm:$0xff]
  %v3351 = vld [vmem:[#allocation3 + $0xc0] sm:$0xff]
  %v3352 = vld [vmem:[#allocation3 + $0xc8] sm:$0xff]
  %v3353 = vld [vmem:[#allocation3 + $0xd0] sm:$0xff]
  %v3354 = vld [vmem:[#allocation3 + $0xd8] sm:$0xff]
  %v3355 = vld [vmem:[#allocation3 + $0xe0] sm:$0xff]
  %v3356 = vld [vmem:[#allocation3 + $0xe8] sm:$0xff]
  %v3357 = vld [vmem:[#allocation3 + $0xf0] sm:$0xff]
  %v3358 = vld [vmem:[#allocation3 + $0xf8] sm:$0xff]
  %v3359 = vld [vmem:[#allocation3 + $0x100] sm:$0xff]
  %v3360 = vld [vmem:[#allocation3 + $0x108] sm:$0xff]
  %v3361 = vld [vmem:[#allocation3 + $0x110] sm:$0xff]
  %v3362 = vld [vmem:[#allocation3 + $0x118] sm:$0xff]
  %v3363 = vld [vmem:[#allocation3 + $0x120] sm:$0xff]
  %v3364 = vld [vmem:[#allocation3 + $0x128] sm:$0xff]
  %v3365 = vld [vmem:[#allocation3 + $0x130] sm:$0xff]
  %v3366 = vld [vmem:[#allocation3 + $0x138] sm:$0xff]
  %v3367 = vld [vmem:[#allocation3 + $0x140] sm:$0xff]
  %v3368 = vld [vmem:[#allocation3 + $0x148] sm:$0xff]
  %v3369 = vld [vmem:[#allocation3 + $0x150] sm:$0xff]
  %v3370 = vld [vmem:[#allocation3 + $0x158] sm:$0xff]
  %v3371 = vld [vmem:[#allocation3 + $0x160] sm:$0xff]
  %v3372 = vld [vmem:[#allocation3 + $0x168] sm:$0xff]
  %v3373 = vld [vmem:[#allocation3 + $0x170] sm:$0xff]
  %v3374 = vld [vmem:[#allocation3 + $0x178] sm:$0xff]
  %v3375 = vld [vmem:[#allocation3 + $0x180] sm:$0xff]
  %v3376 = vld [vmem:[#allocation3 + $0x188] sm:$0xff]
  %v3377 = vld [vmem:[#allocation3 + $0x190] sm:$0xff]
  %v3378 = vld [vmem:[#allocation3 + $0x198] sm:$0xff]
  %v3379 = vld [vmem:[#allocation3 + $0x1a0] sm:$0xff]
  %v3380 = vld [vmem:[#allocation3 + $0x1a8] sm:$0xff]
  %v3381 = vld [vmem:[#allocation3 + $0x1b0] sm:$0xff]
  %v3382 = vld [vmem:[#allocation3 + $0x1b8] sm:$0xff]
  %v3383 = vld [vmem:[#allocation3 + $0x1c0] sm:$0xff]
  %v3384 = vld [vmem:[#allocation3 + $0x1c8] sm:$0xff]
  %v3385 = vld [vmem:[#allocation3 + $0x1d0] sm:$0xff]
  %v3386 = vld [vmem:[#allocation3 + $0x1d8] sm:$0xff]
  %v3387 = vld [vmem:[#allocation3 + $0x1e0] sm:$0xff]
  %v3388 = vld [vmem:[#allocation3 + $0x1e8] sm:$0xff]
  %v3389 = vld [vmem:[#allocation3 + $0x1f0] sm:$0xff]
  %v3390 = vld [vmem:[#allocation3 + $0x1f8] sm:$0xff]
  %v3391 = vld [vmem:[#allocation3 + $0x200] sm:$0xff]
  %v3392 = vld [vmem:[#allocation3 + $0x208] sm:$0xff]
  %v3393 = vld [vmem:[#allocation3 + $0x210] sm:$0xff]
  %v3394 = vld [vmem:[#allocation3 + $0x218] sm:$0xff]
  %v3395 = vld [vmem:[#allocation3 + $0x220] sm:$0xff]
  %v3396 = vld [vmem:[#allocation3 + $0x228] sm:$0xff]
  %v3397 = vld [vmem:[#allocation3 + $0x230] sm:$0xff]
  %v3398 = vld [vmem:[#allocation3 + $0x238] sm:$0xff]
  %v3407 = vunpack.c.l.b16 %v3319
  %v3408 = vunpack.c.h.b16 %v3319
  %v3409 = vunpack.c.l.b16 %v3320
  %v3410 = vunpack.c.l.b16 %v3321
  %v3411 = vunpack.c.h.b16 %v3321
  %v3412 = vunpack.c.l.b16 %v3322
  %v3413 = vunpack.c.l.b16 %v3323
  %v3414 = vunpack.c.h.b16 %v3323
  %v3415 = vunpack.c.l.b16 %v3324
  %v3416 = vunpack.c.l.b16 %v3325
  %v3417 = vunpack.c.h.b16 %v3325
  %v3418 = vunpack.c.l.b16 %v3326
  %v3419 = vpack.c.b16 %v3410, %v3407
  %v3420 = vpack.c.b16 %v3411, %v3408
  %v3421 = vpack.c.b16 %v3412, %v3409
  %v3422 = vpack.c.b16 %v3416, %v3413
  %v3423 = vpack.c.b16 %v3417, %v3414
  %v3424 = vpack.c.b16 %v3418, %v3415
  %v3430 = vsel %vm1862, %v3421, 0
  %v3433 = vsel %vm1862, %v3424, 0
  %3435 = vmatprep.subr.bf16.mxu0 %v3328
  %3436 = vmatpush1.bf16.msra.mxu0 %v3327
  %3437 = vmatprep.subr.bf16.mxu0 %v3332
  %3438 = vmatpush1.bf16.msra.mxu0 %v3331
  %3439 = vmatprep.subr.bf16.mxu0 %v3336
  %3440 = vmatpush1.bf16.msra.mxu0 %v3335
  %3441 = vmatprep.subr.bf16.mxu0 %v3340
  %3442 = vmatpush1.bf16.msra.mxu0 %v3339
  %3443 = vmatprep.subr.bf16.mxu0 %v3344
  %3444 = vmatpush1.bf16.msra.mxu0 %v3343
  %3445 = vmatprep.subr.bf16.mxu0 %v3348
  %3446 = vmatpush1.bf16.msra.mxu0 %v3347
  %3447 = vmatprep.subr.bf16.mxu0 %v3352
  %3448 = vmatpush1.bf16.msra.mxu0 %v3351
  %3449 = vmatprep.subr.bf16.mxu0 %v3356
  %3450 = vmatpush1.bf16.msra.mxu0 %v3355
  %3451 = vmatprep.subr.bf16.mxu0 %v3360
  %3452 = vmatpush1.bf16.msra.mxu0 %v3359
  %3453 = vmatprep.subr.bf16.mxu0 %v3364
  %3454 = vmatpush1.bf16.msra.mxu0 %v3363
  %3455 = vmatprep.subr.bf16.mxu0 %v3368
  %3456 = vmatpush1.bf16.msra.mxu0 %v3367
  %3457 = vmatprep.subr.bf16.mxu0 %v3372
  %3458 = vmatpush1.bf16.msra.mxu0 %v3371
  %3459 = vmatprep.subr.bf16.mxu0 %v3376
  %3460 = vmatpush1.bf16.msra.mxu0 %v3375
  %3461 = vmatprep.subr.bf16.mxu0 %v3380
  %3462 = vmatpush1.bf16.msra.mxu0 %v3379
  %3463 = vmatprep.subr.bf16.mxu0 %v3384
  %3464 = vmatpush1.bf16.msra.mxu0 %v3383
  %3465 = vmatprep.subr.bf16.mxu0 %v3388
  %3466 = vmatpush1.bf16.msra.mxu0 %v3387
  %3467 = vmatprep.mubr.bf16.mxu0 %v3420
  %3468 = vmatmul.mubr.bf16.gmra.mrb[0].mxu0 %v3419
  %v3469 = vpop.f32.mrb[0].mxu0
  %v3470 = vadd.f32 0.0, %v3469
  %v3471 = vpop.f32.mrb[0].mxu0
  %v3472 = vadd.f32 0.0, %v3471
  %v3473 = vpop.f32.mrb[0].mxu0
  %v3474 = vadd.f32 0.0, %v3473
  %v3475 = vpop.f32.mrb[0].mxu0
  %v3476 = vadd.f32 0.0, %v3475
  %3477 = vmatprep.mubr.bf16.mxu0 %v3423
  %3478 = vmatmul.mubr.bf16.gmra.mrb[0].mxu0 %v3422
  %v3479 = vpop.f32.mrb[0].mxu0
  %v3480 = vadd.f32 0.0, %v3479
  %v3481 = vpop.f32.mrb[0].mxu0
  %v3482 = vadd.f32 0.0, %v3481
  %v3483 = vpop.f32.mrb[0].mxu0
  %v3484 = vadd.f32 0.0, %v3483
  %v3485 = vpop.f32.mrb[0].mxu0
  %v3486 = vadd.f32 0.0, %v3485
  %3487 = vdwg.mxu0
  %3488 = vmatprep.subr.bf16.mxu0 %v3392
  %3489 = vmatpush1.bf16.msra.mxu0 %v3391
  %3490 = vmatprep.subr.bf16.mxu0 %v3396
  %3491 = vmatpush1.bf16.msra.mxu0 %v3395
  %3492 = vmatprep.subr.bf16.mxu0 0
  %3493 = vmatpush1.bf16.msra.mxu0 0
  %3494 = vmatprep.subr.bf16.mxu0 0
  %3495 = vmatpush1.bf16.msra.mxu0 0
  %3496 = vmatprep.subr.bf16.mxu0 0
  %3497 = vmatpush1.bf16.msra.mxu0 0
  %3498 = vmatprep.subr.bf16.mxu0 0
  %3499 = vmatpush1.bf16.msra.mxu0 0
  %3500 = vmatprep.subr.bf16.mxu0 0
  %3501 = vmatpush1.bf16.msra.mxu0 0
  %3502 = vmatprep.subr.bf16.mxu0 0
  %3503 = vmatpush1.bf16.msra.mxu0 0
  %3504 = vmatprep.subr.bf16.mxu0 0
  %3505 = vmatpush1.bf16.msra.mxu0 0
  %3506 = vmatprep.subr.bf16.mxu0 0
  %3507 = vmatpush1.bf16.msra.mxu0 0
  %3508 = vmatprep.subr.bf16.mxu0 0
  %3509 = vmatpush1.bf16.msra.mxu0 0
  %3510 = vmatprep.subr.bf16.mxu0 0
  %3511 = vmatpush1.bf16.msra.mxu0 0
  %3512 = vmatprep.subr.bf16.mxu0 0
  %3513 = vmatpush1.bf16.msra.mxu0 0
  %3514 = vmatprep.subr.bf16.mxu0 0
  %3515 = vmatpush1.bf16.msra.mxu0 0
  %3516 = vmatprep.subr.bf16.mxu0 0
  %3517 = vmatpush1.bf16.msra.mxu0 0
  %3518 = vmatprep.subr.bf16.mxu0 0
  %3519 = vmatpush1.bf16.msra.mxu0 0
  %3520 = vmatprep.mubr.bf16.mxu0 0
  %3521 = vmatmul.mubr.bf16.gmra.mrb[0].mxu0 %v3430
  %v3522 = vpop.f32.mrb[0].mxu0
  %v3523 = vadd.f32 %v3470, %v3522
  %v3524 = vpop.f32.mrb[0].mxu0
  %v3525 = vadd.f32 %v3472, %v3524
  %v3526 = vpop.f32.mrb[0].mxu0
  %v3527 = vadd.f32 %v3474, %v3526
  %v3528 = vpop.f32.mrb[0].mxu0
  %v3529 = vadd.f32 %v3476, %v3528
  %3530 = vmatprep.mubr.bf16.mxu0 0
  %3531 = vmatmul.mubr.bf16.gmra.mrb[0].mxu0 %v3433
  %v3532 = vpop.f32.mrb[0].mxu0
  %v3533 = vadd.f32 %v3480, %v3532
  %v3534 = vpop.f32.mrb[0].mxu0
  %v3535 = vadd.f32 %v3482, %v3534
  %v3536 = vpop.f32.mrb[0].mxu0
  %v3537 = vadd.f32 %v3484, %v3536
  %v3538 = vpop.f32.mrb[0].mxu0
  %v3539 = vadd.f32 %v3486, %v3538
  %3540 = vdwg.mxu0
  %3541 = vmatprep.subr.bf16.mxu0 %v3330
  %3542 = vmatpush1.bf16.msra.mxu0 %v3329
  %3543 = vmatprep.subr.bf16.mxu0 %v3334
  %3544 = vmatpush1.bf16.msra.mxu0 %v3333
  %3545 = vmatprep.subr.bf16.mxu0 %v3338
  %3546 = vmatpush1.bf16.msra.mxu0 %v3337
  %3547 = vmatprep.subr.bf16.mxu0 %v3342
  %3548 = vmatpush1.bf16.msra.mxu0 %v3341
  %3549 = vmatprep.subr.bf16.mxu0 %v3346
  %3550 = vmatpush1.bf16.msra.mxu0 %v3345
  %3551 = vmatprep.subr.bf16.mxu0 %v3350
  %3552 = vmatpush1.bf16.msra.mxu0 %v3349
  %3553 = vmatprep.subr.bf16.mxu0 %v3354
  %3554 = vmatpush1.bf16.msra.mxu0 %v3353
  %3555 = vmatprep.subr.bf16.mxu0 %v3358
  %3556 = vmatpush1.bf16.msra.mxu0 %v3357
  %3557 = vmatprep.subr.bf16.mxu0 %v3362
  %3558 = vmatpush1.bf16.msra.mxu0 %v3361
  %3559 = vmatprep.subr.bf16.mxu0 %v3366
  %3560 = vmatpush1.bf16.msra.mxu0 %v3365
  %3561 = vmatprep.subr.bf16.mxu0 %v3370
  %3562 = vmatpush1.bf16.msra.mxu0 %v3369
  %3563 = vmatprep.subr.bf16.mxu0 %v3374
  %3564 = vmatpush1.bf16.msra.mxu0 %v3373
  %3565 = vmatprep.subr.bf16.mxu0 %v3378
  %3566 = vmatpush1.bf16.msra.mxu0 %v3377
  %3567 = vmatprep.subr.bf16.mxu0 %v3382
  %3568 = vmatpush1.bf16.msra.mxu0 %v3381
  %3569 = vmatprep.subr.bf16.mxu0 %v3386
  %3570 = vmatpush1.bf16.msra.mxu0 %v3385
  %3571 = vmatprep.subr.bf16.mxu0 %v3390
  %3572 = vmatpush1.bf16.msra.mxu0 %v3389
  %3573 = vmatprep.mubr.bf16.mxu0 %v3420
  %3574 = vmatmul.mubr.bf16.gmra.mrb[0].mxu0 %v3419
  %v3575 = vpop.f32.mrb[0].mxu0
  %v3576 = vadd.f32 0.0, %v3575
  %v3577 = vpop.f32.mrb[0].mxu0
  %v3578 = vadd.f32 0.0, %v3577
  %v3579 = vpop.f32.mrb[0].mxu0
  %v3580 = vadd.f32 0.0, %v3579
  %v3581 = vpop.f32.mrb[0].mxu0
  %v3582 = vadd.f32 0.0, %v3581
  %3583 = vmatprep.mubr.bf16.mxu0 %v3423
  %3584 = vmatmul.mubr.bf16.gmra.mrb[0].mxu0 %v3422
  %v3585 = vpop.f32.mrb[0].mxu0
  %v3586 = vadd.f32 0.0, %v3585
  %v3587 = vpop.f32.mrb[0].mxu0
  %v3588 = vadd.f32 0.0, %v3587
  %v3589 = vpop.f32.mrb[0].mxu0
  %v3590 = vadd.f32 0.0, %v3589
  %v3591 = vpop.f32.mrb[0].mxu0
  %v3592 = vadd.f32 0.0, %v3591
  %3593 = vdwg.mxu0
  %3594 = vmatprep.subr.bf16.mxu0 %v3394
  %3595 = vmatpush1.bf16.msra.mxu0 %v3393
  %3596 = vmatprep.subr.bf16.mxu0 %v3398
  %3597 = vmatpush1.bf16.msra.mxu0 %v3397
  %3598 = vmatprep.subr.bf16.mxu0 0
  %3599 = vmatpush1.bf16.msra.mxu0 0
  %3600 = vmatprep.subr.bf16.mxu0 0
  %3601 = vmatpush1.bf16.msra.mxu0 0
  %3602 = vmatprep.subr.bf16.mxu0 0
  %3603 = vmatpush1.bf16.msra.mxu0 0
  %3604 = vmatprep.subr.bf16.mxu0 0
  %3605 = vmatpush1.bf16.msra.mxu0 0
  %3606 = vmatprep.subr.bf16.mxu0 0
  %3607 = vmatpush1.bf16.msra.mxu0 0
  %3608 = vmatprep.subr.bf16.mxu0 0
  %3609 = vmatpush1.bf16.msra.mxu0 0
  %3610 = vmatprep.subr.bf16.mxu0 0
  %3611 = vmatpush1.bf16.msra.mxu0 0
  %3612 = vmatprep.subr.bf16.mxu0 0
  %3613 = vmatpush1.bf16.msra.mxu0 0
  %3614 = vmatprep.subr.bf16.mxu0 0
  %3615 = vmatpush1.bf16.msra.mxu0 0
  %3616 = vmatprep.subr.bf16.mxu0 0
  %3617 = vmatpush1.bf16.msra.mxu0 0
  %3618 = vmatprep.subr.bf16.mxu0 0
  %3619 = vmatpush1.bf16.msra.mxu0 0
  %3620 = vmatprep.subr.bf16.mxu0 0
  %3621 = vmatpush1.bf16.msra.mxu0 0
  %3622 = vmatprep.subr.bf16.mxu0 0
  %3623 = vmatpush1.bf16.msra.mxu0 0
  %3624 = vmatprep.subr.bf16.mxu0 0
  %3625 = vmatpush1.bf16.msra.mxu0 0
  %3626 = vmatprep.mubr.bf16.mxu0 0
  %3627 = vmatmul.mubr.bf16.gmra.mrb[0].mxu0 %v3430
  %v3628 = vpop.f32.mrb[0].mxu0
  %v3629 = vadd.f32 %v3576, %v3628
  %v3630 = vpop.f32.mrb[0].mxu0
  %v3631 = vadd.f32 %v3578, %v3630
  %v3632 = vpop.f32.mrb[0].mxu0
  %v3633 = vadd.f32 %v3580, %v3632
  %v3634 = vpop.f32.mrb[0].mxu0
  %v3635 = vadd.f32 %v3582, %v3634
  %3636 = vmatprep.mubr.bf16.mxu0 0
  %3637 = vmatmul.mubr.bf16.gmra.mrb[0].mxu0 %v3433
  %v3638 = vpop.f32.mrb[0].mxu0
  %v3639 = vadd.f32 %v3586, %v3638
  %v3640 = vpop.f32.mrb[0].mxu0
  %v3641 = vadd.f32 %v3588, %v3640
  %v3642 = vpop.f32.mrb[0].mxu0
  %v3643 = vadd.f32 %v3590, %v3642
  %v3644 = vpop.f32.mrb[0].mxu0
  %v3645 = vadd.f32 %v3592, %v3644
  %3646 = vdwg.mxu0
  %v3647 = vadd.f32 %v1603, %v3523
  %v3648 = vadd.f32 %v1605, %v3525
  %v3649 = vadd.f32 %v1696, %v3629
  %v3650 = vadd.f32 %v1698, %v3631
  %v3651 = vadd.f32 %v1607, %v3527
  %v3652 = vadd.f32 %v1609, %v3529
  %v3653 = vadd.f32 %v1700, %v3633
  %v3654 = vadd.f32 %v1702, %v3635
  %v3655 = vadd.f32 %v1613, %v3533
  %v3656 = vadd.f32 %v1615, %v3535
  %v3657 = vadd.f32 %v1706, %v3639
  %v3658 = vadd.f32 %v1708, %v3641
  %v3659 = vadd.f32 %v1617, %v3537
  %v3660 = vadd.f32 %v1619, %v3539
  %v3661 = vadd.f32 %v1710, %v3643
  %v3662 = vadd.f32 %v1712, %v3645
  %v3663 = vld [vmem:[%s7] sm:$0xff]
  %v3664 = vld [vmem:[%s7 + $0x8] sm:$0xff]
  %v3665 = vld [vmem:[%s7 + $0x10] sm:$0xff]
  %v3666 = vld [vmem:[%s7 + $0x18] sm:$0xff]
  %3668 = vset.pattern.permute.xlu0 0
  %3669 = vperm.xlu0 %3668, %v3663
  %v3670 = vpop.permute.xlu0 %3669
  %3673 = vset.pattern.permute.xlu0 0
  %3674 = vperm.xlu0 %3673, %v3664
  %v3675 = vpop.permute.xlu0 %3674
  %3678 = vset.pattern.permute.xlu0 0
  %3679 = vperm.xlu0 %3678, %v3665
  %v3680 = vpop.permute.xlu0 %3679
  %3683 = vset.pattern.permute.xlu0 0
  %3684 = vperm.xlu0 %3683, %v3666
  %v3685 = vpop.permute.xlu0 %3684
  %v3687 = vadd.f32 %v3647, %v3670
  %v3688 = vadd.f32 %v3648, %v3670
  %v3689 = vadd.f32 %v3649, %v3670
  %v3690 = vadd.f32 %v3650, %v3670
  %v3691 = vadd.f32 %v3651, %v3675
  %v3692 = vadd.f32 %v3652, %v3675
  %v3693 = vadd.f32 %v3653, %v3675
  %v3694 = vadd.f32 %v3654, %v3675
  %v3695 = vadd.f32 %v3655, %v3680
  %v3696 = vadd.f32 %v3656, %v3680
  %v3697 = vadd.f32 %v3657, %v3680
  %v3698 = vadd.f32 %v3658, %v3680
  %v3699 = vadd.f32 %v3659, %v3685
  %v3700 = vadd.f32 %v3660, %v3685
  %v3701 = vadd.f32 %v3661, %v3685
  %v3702 = vadd.f32 %v3662, %v3685
  %v3703 = vtanh.pop %v3687
  %v3704 = vtanh.pop %v3688
  %v3705 = vtanh.pop %v3689
  %v3706 = vtanh.pop %v3690
  %v3707 = vtanh.pop %v3691
  %v3708 = vtanh.pop %v3692
  %v3709 = vtanh.pop %v3693
  %v3710 = vtanh.pop %v3694
  %v3711 = vtanh.pop %v3695
  %v3712 = vtanh.pop %v3696
  %v3713 = vtanh.pop %v3697
  %v3714 = vtanh.pop %v3698
  %v3715 = vtanh.pop %v3699
  %v3716 = vtanh.pop %v3700
  %v3717 = vtanh.pop %v3701
  %v3718 = vtanh.pop %v3702
  %v3719 = vsub.f32 1.0, %v2408
  %v3720 = vsub.f32 1.0, %v2410
  %v3721 = vsub.f32 1.0, %v2412
  %v3722 = vsub.f32 1.0, %v2414
  %v3723 = vsub.f32 1.0, %v2416
  %v3724 = vsub.f32 1.0, %v2418
  %v3725 = vsub.f32 1.0, %v2420
  %v3726 = vsub.f32 1.0, %v2422
  %v3727 = vsub.f32 1.0, %v2424
  %v3728 = vsub.f32 1.0, %v2426
  %v3729 = vsub.f32 1.0, %v2428
  %v3730 = vsub.f32 1.0, %v2430
  %v3731 = vsub.f32 1.0, %v2432
  %v3732 = vsub.f32 1.0, %v2434
  %v3733 = vsub.f32 1.0, %v2436
  %v3734 = vsub.f32 1.0, %v2438
  %v3735 = vmul.f32 %v38, %v3719
  %v3736 = vmul.f32 %v39, %v3720
  %v3737 = vmul.f32 %v40, %v3721
  %v3738 = vmul.f32 %v41, %v3722
  %v3739 = vmul.f32 %v42, %v3723
  %v3740 = vmul.f32 %v43, %v3724
  %v3741 = vmul.f32 %v44, %v3725
  %v3742 = vmul.f32 %v45, %v3726
  %v3743 = vmul.f32 %v46, %v3727
  %v3744 = vmul.f32 %v47, %v3728
  %v3745 = vmul.f32 %v48, %v3729
  %v3746 = vmul.f32 %v49, %v3730
  %v3747 = vmul.f32 %v50, %v3731
  %v3748 = vmul.f32 %v51, %v3732
  %v3749 = vmul.f32 %v52, %v3733
  %v3750 = vmul.f32 %v53, %v3734
  %v3751 = vmul.f32 %v3703, %v2408
  %v3752 = vmul.f32 %v3704, %v2410
  %v3753 = vmul.f32 %v3705, %v2412
  %v3754 = vmul.f32 %v3706, %v2414
  %v3755 = vmul.f32 %v3707, %v2416
  %v3756 = vmul.f32 %v3708, %v2418
  %v3757 = vmul.f32 %v3709, %v2420
  %v3758 = vmul.f32 %v3710, %v2422
  %v3759 = vmul.f32 %v3711, %v2424
  %v3760 = vmul.f32 %v3712, %v2426
  %v3761 = vmul.f32 %v3713, %v2428
  %v3762 = vmul.f32 %v3714, %v2430
  %v3763 = vmul.f32 %v3715, %v2432
  %v3764 = vmul.f32 %v3716, %v2434
  %v3765 = vmul.f32 %v3717, %v2436
  %v3766 = vmul.f32 %v3718, %v2438
  %v3767 = vadd.f32 %v3735, %v3751
  %v3768 = vadd.f32 %v3736, %v3752
  %v3769 = vadd.f32 %v3737, %v3753
  %v3770 = vadd.f32 %v3738, %v3754
  %v3771 = vadd.f32 %v3739, %v3755
  %v3772 = vadd.f32 %v3740, %v3756
  %v3773 = vadd.f32 %v3741, %v3757
  %v3774 = vadd.f32 %v3742, %v3758
  %v3775 = vadd.f32 %v3743, %v3759
  %v3776 = vadd.f32 %v3744, %v3760
  %v3777 = vadd.f32 %v3745, %v3761
  %v3778 = vadd.f32 %v3746, %v3762
  %v3779 = vadd.f32 %v3747, %v3763
  %v3780 = vadd.f32 %v3748, %v3764
  %v3781 = vadd.f32 %v3749, %v3765
  %v3782 = vadd.f32 %v3750, %v3766
  %3783 = vst [vmem:[%s8] sm:$0xff] %v3767
  %3784 = vst [vmem:[%s8 + $0x8] sm:$0xff] %v3768
  %3785 = vst [vmem:[%s8 + $0x10] sm:$0xff] %v3769
  %3786 = vst [vmem:[%s8 + $0x18] sm:$0xff] %v3770
  %3787 = vst [vmem:[%s8 + $0x20] sm:$0xff] %v3771
  %3788 = vst [vmem:[%s8 + $0x28] sm:$0xff] %v3772
  %3789 = vst [vmem:[%s8 + $0x30] sm:$0xff] %v3773
  %3790 = vst [vmem:[%s8 + $0x38] sm:$0xff] %v3774
  %3791 = vst [vmem:[%s8 + $0x40] sm:$0xff] %v3775
  %3792 = vst [vmem:[%s8 + $0x48] sm:$0xff] %v3776
  %3793 = vst [vmem:[%s8 + $0x50] sm:$0xff] %v3777
  %3794 = vst [vmem:[%s8 + $0x58] sm:$0xff] %v3778
  %3795 = vst [vmem:[%s8 + $0x60] sm:$0xff] %v3779
  %3796 = vst [vmem:[%s8 + $0x68] sm:$0xff] %v3780
  %3797 = vst [vmem:[%s8 + $0x70] sm:$0xff] %v3781
  %3798 = vst [vmem:[%s8 + $0x78] sm:$0xff] %v3782
  // Predicated region
  $region34: #{_step.1} parent=0 // pred_check
    _
  $region35: #{_step.1} parent=0 // pred_check_branch
    %3800 = sbr.rel (0) target = $region37
  $region36: #{_step.1} parent=0 // pred_region
    _
  $region37: #{_step.1} parent=0 // pred_fallthru
    _
  // Predicated region
  $region38: #{_step.1} parent=0 // pred_check
    _
  $region39: #{_step.1} parent=0 // pred_check_branch
    %3802 = sbr.rel (0) target = $region41
  $region40: #{_step.1} parent=0 // pred_region
    _
  $region41: #{_step.1} parent=0 // pred_fallthru
    _

</llo_original>
